<compile_context>
chip_gen: v5e
topology: v5e:2x2
jax: 0.10.0
libtpu: 0.0.40
codegen_flags: <defaults>
</compile_context>

<pallas_src>
import functools

import jax
import jax.numpy as jnp
from jax.experimental import pallas as pl

# ------------------------- small synthetic config ---------------------------
BATCH = 2          # documents per batch
SEQ_NUM = 4        # sentences per document
SEQ_LEN = 8        # tokens per sentence
VOCAB = 64
BERT_SIZE = 128    # stands in for 768
NUM_HEADS = 2
HEAD_DIM = BERT_SIZE // NUM_HEADS
FFN_SIZE = 256
WORD_HIDDEN = 128  # word_hidden_size (lane-aligned)
SENT_HIDDEN = 128  # sent_hidden_size (lane-aligned)
NUM_CLASSES = 8
OUT_PAD = 128      # classifier output padded to a full lane width


# ------------------------------ fused kernel --------------------------------
def _fused_kernel(
    ids_ref, sid_col_ref, sid_row_ref, kmask_row_ref, sent_mask_ref,
    g_ref, gt_ref,
    word_emb_ref, pos_emb_ref, emb_ln_g_ref, emb_ln_b_ref,
    qkv_w_ref, qkv_b_ref, wo_ref, bo_ref, ln1_g_ref, ln1_b_ref,
    ffn_w1_ref, ffn_b1_ref, ffn_w2_ref, ffn_b2_ref, ln2_g_ref, ln2_b_ref,
    pool_w_ref, pool_b_ref, lin_w_ref, lin_b_ref,
    gru_wih_ref, gru_bih_ref, gru_whh_f_ref, gru_bhh_f_ref,
    gru_whh_b_ref, gru_bhh_b_ref,
    att_w_ref, att_b_ref, att_ctx_ref, fc_w_ref, fc_b_ref,
    out_ref, *, batch, seq_num, seq_len, vocab, hidden, num_heads,
    head_dim, sent_hidden):
  f32, bf16 = jnp.float32, jnp.bfloat16
  B, S, L, H, hs = batch, seq_num, seq_len, hidden, sent_hidden
  N = B * S                    # sentences, rows ordered s*B + b (time-major)
  T = N * L                    # tokens

  def mm(a, w_ref, b_ref=None):
    # bf16 MXU operands, f32 accumulation.
    y = jnp.dot(a.astype(bf16), w_ref[...], preferred_element_type=f32)
    if b_ref is not None:
      y = y + b_ref[...]
    return y

  def layernorm(x, g, b):
    mu = jnp.mean(x, axis=-1, keepdims=True)
    xc = x - mu
    var = jnp.mean(xc * xc, axis=-1, keepdims=True)
    return xc * jax.lax.rsqrt(var + 1e-12) * g[...] + b[...]

  # ---------------- synthetic BERT encoder (1 layer + pooler) ---------------
  # Embedding lookup as a one-hot MXU matmul (no gather needed).
  ids = ids_ref[...]                                           # (T, 1) i32
  onehot = jnp.where(
      ids == jax.lax.broadcasted_iota(jnp.int32, (T, vocab), 1), 1.0, 0.0)
  emb = jnp.dot(onehot.astype(bf16), word_emb_ref[...],
                preferred_element_type=f32) + pos_emb_ref[...]
  h = layernorm(emb, emb_ln_g_ref, emb_ln_b_ref)               # (T, H)

  # Fused QKV projection (single (T,H)x(H,3H) matmul, lane-aligned slices).
  qkv = mm(h, qkv_w_ref, qkv_b_ref)                            # (T, 3H)

  # Masked self-attention over ALL sentences in one step: block-diagonal bias
  # (built in-kernel from tiny per-token vectors) confines attention to the
  # own sentence and masks padded key tokens.
  bias = jnp.where(
      (sid_col_ref[...] == sid_row_ref[...]) & (kmask_row_ref[...] > 0.0),
      0.0, -1e9)                                               # (T, T)
  scale = 1.0 / (head_dim ** 0.5)
  heads = []
  for hd_i in range(num_heads):
    lo = hd_i * head_dim
    qh = qkv[:, lo:lo + head_dim].astype(bf16)
    kh = qkv[:, H + lo:H + lo + head_dim].astype(bf16)
    vh = qkv[:, 2 * H + lo:2 * H + lo + head_dim].astype(bf16)
    s = jax.lax.dot_general(qh, kh, (((1,), (1,)), ((), ())),
                            preferred_element_type=f32) * scale + bias
    s = s - jnp.max(s, axis=-1, keepdims=True)
    p = jnp.exp(s)
    p = p * pl.reciprocal(jnp.sum(p, axis=-1, keepdims=True), approx=True)
    heads.append(jnp.dot(p.astype(bf16), vh, preferred_element_type=f32))
  ctx = jnp.concatenate(heads, axis=-1)                        # (T, H)

  # Output projection + residual + LN, FFN + residual + LN (fused epilogues).
  h = layernorm(h + mm(ctx, wo_ref, bo_ref), ln1_g_ref, ln1_b_ref)
  ffn = mm(jax.nn.gelu(mm(h, ffn_w1_ref, ffn_b1_ref), approximate=True),
           ffn_w2_ref, ffn_b2_ref)
  h = layernorm(h + ffn, ln2_g_ref, ln2_b_ref)                 # (T, H)

  # [CLS] rows (token 0 of each sentence) via a selection matmul.
  sel = jnp.where(
      jax.lax.broadcasted_iota(jnp.int32, (N, T), 1)
      == jax.lax.broadcasted_iota(jnp.int32, (N, T), 0) * L, 1.0, 0.0)
  cls = jnp.dot(sel.astype(bf16), h.astype(bf16),
                preferred_element_type=f32)                    # (N, H)
  pooled = jnp.tanh(mm(cls, pool_w_ref, pool_b_ref))           # (N, H)

  # x = self.linear(pooled): sentence features, time-major rows (s*B + b).
  x_sent = mm(pooled, lin_w_ref, lin_b_ref)                    # (N, WH)

  # ---------------- SentAttNet: BiGRU + masked attention + fc ---------------
  # Hoisted input projection for BOTH GRU directions in one matmul.
  gi_all = mm(x_sent, gru_wih_ref, gru_bih_ref)                # (N, 6*hs)
  gi_f = gi_all[:, 0:3 * hs]
  gi_b = gi_all[:, 3 * hs:6 * hs]

  def gru_cell(gi, h_prev, whh_ref, bhh_ref):
    # PyTorch nn.GRU gate order (r, z, n); only h @ W_hh stays on the
    # sequential critical path.
    gh = jnp.dot(h_prev.astype(bf16), whh_ref[...],
                 preferred_element_type=f32) + bhh_ref[...]
    r = jax.nn.sigmoid(gi[:, 0:hs] + gh[:, 0:hs])
    z = jax.nn.sigmoid(gi[:, hs:2 * hs] + gh[:, hs:2 * hs])
    n = jnp.tanh(gi[:, 2 * hs:3 * hs] + r * gh[:, 2 * hs:3 * hs])
    return (1.0 - z) * n + z * h_prev

  h_f = jnp.zeros((B, hs), f32)
  h_b = jnp.zeros((B, hs), f32)
  f_out = [None] * S
  b_out = [None] * S
  for t in range(S):                 # time steps are contiguous sublane rows
    h_f = gru_cell(gi_f[t * B:(t + 1) * B, :], h_f,
                   gru_whh_f_ref, gru_bhh_f_ref)
    f_out[t] = h_f
    tb = S - 1 - t
    h_b = gru_cell(gi_b[tb * B:(tb + 1) * B, :], h_b,
                   gru_whh_b_ref, gru_bhh_b_ref)
    b_out[tb] = h_b
  h_cat = jnp.concatenate(
      [jnp.concatenate([f_out[t], b_out[t]], axis=-1) for t in range(S)],
      axis=0)                                                  # (N, 2*hs)

  # Masked context attention over sentences, in matrix form.
  u = jnp.tanh(mm(h_cat, att_w_ref, att_b_ref))                # (N, 2*hs)
  scores = jnp.dot(u.astype(bf16), att_ctx_ref[...],
                   preferred_element_type=f32)                 # (N, 1)
  smask = sent_mask_ref[...]                                   # (N, 1)
  scores = jnp.where(smask > 0.0, scores, -1e9)
  e = jnp.where(smask > 0.0,
                jnp.exp(scores - jnp.max(scores, axis=0, keepdims=True)),
                0.0)                                           # (N, 1)
  # Per-document normalization and pooling via tiny grouping matmuls
  # (G[b, r] = 1 iff row r = t*B + b belongs to document b).
  denom = jnp.dot(g_ref[...], e, preferred_element_type=f32)   # (B, 1)
  alpha = e / jnp.dot(gt_ref[...], denom, preferred_element_type=f32)
  sent = jnp.dot(g_ref[...], alpha * h_cat,
                 preferred_element_type=f32)                   # (B, 2*hs)

  # Classifier, padded to 128 lanes for a lane-dense store.
  out_ref[...] = jnp.dot(sent.astype(bf16), fc_w_ref[...],
                         preferred_element_type=f32) + fc_b_ref[...]


# ------------------------------- parameters ---------------------------------
def init_params(key):
  keys = iter(jax.random.split(key, 32))
  f32, bf16 = jnp.float32, jnp.bfloat16
  H, F, WH, hs = BERT_SIZE, FFN_SIZE, WORD_HIDDEN, SENT_HIDDEN

  def nrm(shape, scale=0.02, dtype=f32):
    return (scale * jax.random.normal(next(keys), shape, f32)).astype(dtype)

  p = {}
  # TODO(synk): pretrained 12-layer BertModel weights cannot be loaded; this
  # deterministic 1-layer synthetic encoder keeps the pooled-output interface.
  p["word_emb"] = nrm((VOCAB, H), dtype=bf16)
  p["pos_emb"] = nrm((SEQ_LEN, H))
  p["emb_ln_g"] = jnp.ones((1, H), f32)
  p["emb_ln_b"] = jnp.zeros((1, H), f32)
  p["qkv_w"] = nrm((H, 3 * H), dtype=bf16)            # [Wq | Wk | Wv]
  p["qkv_b"] = jnp.zeros((1, 3 * H), f32)
  p["wo"] = nrm((H, H), dtype=bf16)
  p["bo"] = jnp.zeros((1, H), f32)
  p["ln1_g"] = jnp.ones((1, H), f32)
  p["ln1_b"] = jnp.zeros((1, H), f32)
  p["ffn_w1"] = nrm((H, F), dtype=bf16)
  p["ffn_b1"] = jnp.zeros((1, F), f32)
  p["ffn_w2"] = nrm((F, H), dtype=bf16)
  p["ffn_b2"] = jnp.zeros((1, H), f32)
  p["ln2_g"] = jnp.ones((1, H), f32)
  p["ln2_b"] = jnp.zeros((1, H), f32)
  p["pool_w"] = nrm((H, H), dtype=bf16)
  p["pool_b"] = jnp.zeros((1, H), f32)
  # self.linear = nn.Linear(bert_size, word_hidden_size)
  p["lin_w"] = nrm((H, WH), dtype=bf16)
  p["lin_b"] = jnp.zeros((1, WH), f32)
  # SentAttNet: BiGRU (fwd|bwd input weights concatenated), attention, fc.
  p["gru_wih"] = nrm((WH, 6 * hs), dtype=bf16)        # [Wih_f | Wih_b]
  p["gru_bih"] = jnp.zeros((1, 6 * hs), f32)
  p["gru_whh_f"] = nrm((hs, 3 * hs), dtype=bf16)
  p["gru_bhh_f"] = jnp.zeros((1, 3 * hs), f32)
  p["gru_whh_b"] = nrm((hs, 3 * hs), dtype=bf16)
  p["gru_bhh_b"] = jnp.zeros((1, 3 * hs), f32)
  p["att_w"] = nrm((2 * hs, 2 * hs), dtype=bf16)
  p["att_b"] = jnp.zeros((1, 2 * hs), f32)
  p["att_ctx"] = nrm((2 * hs, 1), dtype=bf16)
  fc = nrm((2 * hs, NUM_CLASSES))
  p["fc_w"] = (jnp.zeros((2 * hs, OUT_PAD), f32)
               .at[:, :NUM_CLASSES].set(fc).astype(bf16))
  p["fc_b"] = jnp.zeros((1, OUT_PAD), f32)
  return p


# --------------------------------- forward ----------------------------------
def bert_hier_att_net(params, x_ids, mask):
  B, S, L = x_ids.shape
  N = B * S
  T = N * L

  # Time-major sentence order (flat row = s*B + b) so GRU time steps are
  # contiguous sublane slices inside the fused kernel.
  ids_tm = jnp.transpose(x_ids, (1, 0, 2)).reshape(T, 1).astype(jnp.int32)
  kmask_row = jnp.transpose(mask, (1, 0, 2)).reshape(1, T).astype(jnp.float32)
  sent_mask = jnp.transpose(mask[:, :, 0]).reshape(N, 1).astype(jnp.float32)
  pos_tiled = jnp.tile(params["pos_emb"], (N, 1))              # (T, H)

  # Sentence-id vectors for the in-kernel block-diagonal attention bias.
  sid = jnp.repeat(jnp.arange(N, dtype=jnp.int32), L)
  sid_col = sid.reshape(T, 1)
  sid_row = sid.reshape(1, T)

  # Grouping matrices for per-document softmax / pooling done as matmuls.
  b_of_row = jnp.arange(N, dtype=jnp.int32) % B                # row = t*B + b
  G = (b_of_row[None, :]
       == jnp.arange(B, dtype=jnp.int32)[:, None]).astype(jnp.float32)
  Gt = G.T

  kernel = functools.partial(
      _fused_kernel, batch=B, seq_num=S, seq_len=L, vocab=VOCAB,
      hidden=BERT_SIZE, num_heads=NUM_HEADS, head_dim=HEAD_DIM,
      sent_hidden=SENT_HIDDEN)

  out = pl.pallas_call(
      kernel,
      out_shape=jax.ShapeDtypeStruct((B, OUT_PAD), jnp.float32),
  )(ids_tm, sid_col, sid_row, kmask_row, sent_mask, G, Gt,
    params["word_emb"], pos_tiled, params["emb_ln_g"], params["emb_ln_b"],
    params["qkv_w"], params["qkv_b"], params["wo"], params["bo"],
    params["ln1_g"], params["ln1_b"],
    params["ffn_w1"], params["ffn_b1"], params["ffn_w2"], params["ffn_b2"],
    params["ln2_g"], params["ln2_b"],
    params["pool_w"], params["pool_b"], params["lin_w"], params["lin_b"],
    params["gru_wih"], params["gru_bih"],
    params["gru_whh_f"], params["gru_bhh_f"],
    params["gru_whh_b"], params["gru_bhh_b"],
    params["att_w"], params["att_b"], params["att_ctx"],
    params["fc_w"], params["fc_b"])
  return out[:, :NUM_CLASSES]


# ----------------------------------- main ------------------------------------
if __name__ == "__main__":
  key = jax.random.PRNGKey(0)
  pkey, tkey = jax.random.split(key)
  params = init_params(pkey)

  x_ids = jax.random.randint(tkey, (BATCH, SEQ_NUM, SEQ_LEN), 0, VOCAB,
                             dtype=jnp.int32)
  lengths = jnp.array([[8, 5, 0, 3], [2, 8, 8, 1]], dtype=jnp.int32)
  mask = (jnp.arange(SEQ_LEN)[None, None, :]
          < lengths[:, :, None]).astype(jnp.int32)

  out = jax.jit(bert_hier_att_net)(params, x_ids, mask)
  out = jax.block_until_ready(out)
  assert out.shape == (BATCH, NUM_CLASSES), out.shape
  assert bool(jnp.all(jnp.isfinite(out)))
  print("KERNEL_OK")
</pallas_src>

<mosaic_0001>
module attributes {stable_mosaic.version = 11 : i64} {
  func.func @_fused_kernel(%arg0: memref<64x1xi32, #tpu.memory_space<vmem>>, %arg1: memref<64x1xi32, #tpu.memory_space<vmem>>, %arg2: memref<1x64xi32, #tpu.memory_space<vmem>>, %arg3: memref<1x64xf32, #tpu.memory_space<vmem>>, %arg4: memref<8x1xf32, #tpu.memory_space<vmem>>, %arg5: memref<2x8xf32, #tpu.memory_space<vmem>>, %arg6: memref<8x2xf32, #tpu.memory_space<vmem>>, %arg7: memref<64x128xbf16, #tpu.memory_space<vmem>>, %arg8: memref<64x128xf32, #tpu.memory_space<vmem>>, %arg9: memref<1x128xf32, #tpu.memory_space<vmem>>, %arg10: memref<1x128xf32, #tpu.memory_space<vmem>>, %arg11: memref<128x384xbf16, #tpu.memory_space<vmem>>, %arg12: memref<1x384xf32, #tpu.memory_space<vmem>>, %arg13: memref<128x128xbf16, #tpu.memory_space<vmem>>, %arg14: memref<1x128xf32, #tpu.memory_space<vmem>>, %arg15: memref<1x128xf32, #tpu.memory_space<vmem>>, %arg16: memref<1x128xf32, #tpu.memory_space<vmem>>, %arg17: memref<128x256xbf16, #tpu.memory_space<vmem>>, %arg18: memref<1x256xf32, #tpu.memory_space<vmem>>, %arg19: memref<256x128xbf16, #tpu.memory_space<vmem>>, %arg20: memref<1x128xf32, #tpu.memory_space<vmem>>, %arg21: memref<1x128xf32, #tpu.memory_space<vmem>>, %arg22: memref<1x128xf32, #tpu.memory_space<vmem>>, %arg23: memref<128x128xbf16, #tpu.memory_space<vmem>>, %arg24: memref<1x128xf32, #tpu.memory_space<vmem>>, %arg25: memref<128x128xbf16, #tpu.memory_space<vmem>>, %arg26: memref<1x128xf32, #tpu.memory_space<vmem>>, %arg27: memref<128x768xbf16, #tpu.memory_space<vmem>>, %arg28: memref<1x768xf32, #tpu.memory_space<vmem>>, %arg29: memref<128x384xbf16, #tpu.memory_space<vmem>>, %arg30: memref<1x384xf32, #tpu.memory_space<vmem>>, %arg31: memref<128x384xbf16, #tpu.memory_space<vmem>>, %arg32: memref<1x384xf32, #tpu.memory_space<vmem>>, %arg33: memref<256x256xbf16, #tpu.memory_space<vmem>>, %arg34: memref<1x256xf32, #tpu.memory_space<vmem>>, %arg35: memref<256x1xbf16, #tpu.memory_space<vmem>>, %arg36: memref<256x128xbf16, #tpu.memory_space<vmem>>, %arg37: memref<1x128xf32, #tpu.memory_space<vmem>>, %arg38: memref<2x128xf32, #tpu.memory_space<vmem>>) attributes {dimension_semantics = [], scalar_prefetch = 0 : i64, scratch_operands = 0 : i64, tpu.core_type = #tpu.core_type<tc>} {
    %c0 = arith.constant 0 : index
    %c0_0 = arith.constant 0 : index
    %0 = vector.load %arg0[%c0, %c0_0] : memref<64x1xi32, #tpu.memory_space<vmem>>, vector<64x1xi32>
    %1 = tpu.iota {dimensions = array<i32: 1>} : vector<64x64xi32>
    %2 = vector.broadcast %0 : vector<64x1xi32> to vector<64x64xi32>
    %3 = arith.cmpi eq, %2, %1 : vector<64x64xi32>
    %cst = arith.constant 1.000000e+00 : f32
    %cst_1 = arith.constant 0.000000e+00 : f32
    %4 = vector.broadcast %cst : f32 to vector<64x64xf32>
    %5 = vector.broadcast %cst_1 : f32 to vector<64x64xf32>
    %6 = arith.select %3, %4, %5 : vector<64x64xi1>, vector<64x64xf32>
    %7 = arith.truncf %6 : vector<64x64xf32> to vector<64x64xbf16>
    %c0_2 = arith.constant 0 : index
    %c0_3 = arith.constant 0 : index
    %8 = vector.load %arg7[%c0_2, %c0_3] : memref<64x128xbf16, #tpu.memory_space<vmem>>, vector<64x128xbf16>
    %cst_4 = arith.constant dense<0.000000e+00> : vector<64x128xf32>
    %9 = tpu.matmul %7, %8, %cst_4 {dimension_numbers = #tpu.dot_dimension_numbers<[1], [0], [0], [1], [0, 0, 1, 1], [], []>} : vector<64x64xbf16>, vector<64x128xbf16>, vector<64x128xf32> -> vector<64x128xf32>
    %c0_5 = arith.constant 0 : index
    %c0_6 = arith.constant 0 : index
    %10 = vector.load %arg8[%c0_5, %c0_6] : memref<64x128xf32, #tpu.memory_space<vmem>>, vector<64x128xf32>
    %11 = arith.addf %9, %10 : vector<64x128xf32>
    %cst_7 = arith.constant dense<0.000000e+00> : vector<64xf32>
    %12 = vector.multi_reduction <add>, %11, %cst_7 [1] : vector<64x128xf32> to vector<64xf32>
    %13 = vector.shape_cast %12 : vector<64xf32> to vector<64x1xf32>
    %cst_8 = arith.constant 1.280000e+02 : f32
    %14 = vector.broadcast %cst_8 : f32 to vector<64x1xf32>
    %15 = arith.divf %13, %14 : vector<64x1xf32>
    %16 = vector.broadcast %15 : vector<64x1xf32> to vector<64x128xf32>
    %17 = arith.subf %11, %16 : vector<64x128xf32>
    %18 = arith.mulf %17, %17 : vector<64x128xf32>
    %cst_9 = arith.constant dense<0.000000e+00> : vector<64xf32>
    %19 = vector.multi_reduction <add>, %18, %cst_9 [1] : vector<64x128xf32> to vector<64xf32>
    %20 = vector.shape_cast %19 : vector<64xf32> to vector<64x1xf32>
    %cst_10 = arith.constant 1.280000e+02 : f32
    %21 = vector.broadcast %cst_10 : f32 to vector<64x1xf32>
    %22 = arith.divf %20, %21 : vector<64x1xf32>
    %cst_11 = arith.constant 9.99999996E-13 : f32
    %23 = vector.broadcast %cst_11 : f32 to vector<64x1xf32>
    %24 = arith.addf %22, %23 : vector<64x1xf32>
    %25 = math.rsqrt %24 : vector<64x1xf32>
    %26 = vector.broadcast %25 : vector<64x1xf32> to vector<64x128xf32>
    %27 = arith.mulf %17, %26 : vector<64x128xf32>
    %c0_12 = arith.constant 0 : index
    %c0_13 = arith.constant 0 : index
    %28 = vector.load %arg9[%c0_12, %c0_13] : memref<1x128xf32, #tpu.memory_space<vmem>>, vector<1x128xf32>
    %29 = vector.broadcast %28 : vector<1x128xf32> to vector<64x128xf32>
    %30 = arith.mulf %27, %29 : vector<64x128xf32>
    %c0_14 = arith.constant 0 : index
    %c0_15 = arith.constant 0 : index
    %31 = vector.load %arg10[%c0_14, %c0_15] : memref<1x128xf32, #tpu.memory_space<vmem>>, vector<1x128xf32>
    %32 = vector.broadcast %31 : vector<1x128xf32> to vector<64x128xf32>
    %33 = arith.addf %30, %32 : vector<64x128xf32>
    %34 = arith.truncf %33 : vector<64x128xf32> to vector<64x128xbf16>
    %c0_16 = arith.constant 0 : index
    %c0_17 = arith.constant 0 : index
    %35 = vector.load %arg11[%c0_16, %c0_17] : memref<128x384xbf16, #tpu.memory_space<vmem>>, vector<128x384xbf16>
    %cst_18 = arith.constant dense<0.000000e+00> : vector<64x384xf32>
    %36 = tpu.matmul %34, %35, %cst_18 {dimension_numbers = #tpu.dot_dimension_numbers<[1], [0], [0], [1], [0, 0, 1, 1], [], []>} : vector<64x128xbf16>, vector<128x384xbf16>, vector<64x384xf32> -> vector<64x384xf32>
    %c0_19 = arith.constant 0 : index
    %c0_20 = arith.constant 0 : index
    %37 = vector.load %arg12[%c0_19, %c0_20] : memref<1x384xf32, #tpu.memory_space<vmem>>, vector<1x384xf32>
    %38 = vector.broadcast %37 : vector<1x384xf32> to vector<64x384xf32>
    %39 = arith.addf %36, %38 : vector<64x384xf32>
    %c0_21 = arith.constant 0 : index
    %c0_22 = arith.constant 0 : index
    %40 = vector.load %arg1[%c0_21, %c0_22] : memref<64x1xi32, #tpu.memory_space<vmem>>, vector<64x1xi32>
    %c0_23 = arith.constant 0 : index
    %c0_24 = arith.constant 0 : index
    %41 = vector.load %arg2[%c0_23, %c0_24] : memref<1x64xi32, #tpu.memory_space<vmem>>, vector<1x64xi32>
    %42 = vector.broadcast %40 : vector<64x1xi32> to vector<64x64xi32>
    %43 = vector.broadcast %41 : vector<1x64xi32> to vector<64x64xi32>
    %44 = arith.cmpi eq, %42, %43 : vector<64x64xi32>
    %c0_25 = arith.constant 0 : index
    %c0_26 = arith.constant 0 : index
    %45 = vector.load %arg3[%c0_25, %c0_26] : memref<1x64xf32, #tpu.memory_space<vmem>>, vector<1x64xf32>
    %cst_27 = arith.constant 0.000000e+00 : f32
    %46 = vector.broadcast %cst_27 : f32 to vector<1x64xf32>
    %47 = arith.cmpf ogt, %45, %46 : vector<1x64xf32>
    %48 = vector.broadcast %47 : vector<1x64xi1> to vector<64x64xi1>
    %49 = arith.andi %44, %48 : vector<64x64xi1>
    %cst_28 = arith.constant 0.000000e+00 : f32
    %cst_29 = arith.constant -1.000000e+09 : f32
    %50 = vector.broadcast %cst_28 : f32 to vector<64x64xf32>
    %51 = vector.broadcast %cst_29 : f32 to vector<64x64xf32>
    %52 = arith.select %49, %50, %51 : vector<64x64xi1>, vector<64x64xf32>
    %53 = vector.extract_strided_slice %39 {offsets = [0, 0], sizes = [64, 64], strides = [1, 1]} : vector<64x384xf32> to vector<64x64xf32>
    %54 = arith.truncf %53 : vector<64x64xf32> to vector<64x64xbf16>
    %55 = vector.extract_strided_slice %39 {offsets = [0, 128], sizes = [64, 64], strides = [1, 1]} : vector<64x384xf32> to vector<64x64xf32>
    %56 = arith.truncf %55 : vector<64x64xf32> to vector<64x64xbf16>
    %57 = vector.extract_strided_slice %39 {offsets = [0, 256], sizes = [64, 64], strides = [1, 1]} : vector<64x384xf32> to vector<64x64xf32>
    %58 = arith.truncf %57 : vector<64x64xf32> to vector<64x64xbf16>
    %cst_30 = arith.constant dense<0.000000e+00> : vector<64x64xf32>
    %59 = tpu.matmul %54, %56, %cst_30 {dimension_numbers = #tpu.dot_dimension_numbers<[1], [1], [0], [0], [0, 0, 1, 0], [], []>} : vector<64x64xbf16>, vector<64x64xbf16>, vector<64x64xf32> -> vector<64x64xf32>
    %cst_31 = arith.constant 1.250000e-01 : f32
    %60 = vector.broadcast %cst_31 : f32 to vector<64x64xf32>
    %61 = arith.mulf %59, %60 : vector<64x64xf32>
    %62 = arith.addf %61, %52 : vector<64x64xf32>
    %cst_32 = arith.constant dense<0xFF800000> : vector<64xf32>
    %63 = vector.multi_reduction <maximumf>, %62, %cst_32 [1] : vector<64x64xf32> to vector<64xf32>
    %64 = vector.shape_cast %63 : vector<64xf32> to vector<64x1xf32>
    %65 = vector.broadcast %64 : vector<64x1xf32> to vector<64x64xf32>
    %66 = arith.subf %62, %65 : vector<64x64xf32>
    %67 = math.exp %66 : vector<64x64xf32>
    %cst_33 = arith.constant dense<0.000000e+00> : vector<64xf32>
    %68 = vector.multi_reduction <add>, %67, %cst_33 [1] : vector<64x64xf32> to vector<64xf32>
    %69 = vector.shape_cast %68 : vector<64xf32> to vector<64x1xf32>
    %70 = tpu.reciprocal %69 {approx = true} : vector<64x1xf32> -> vector<64x1xf32>
    %71 = vector.broadcast %70 : vector<64x1xf32> to vector<64x64xf32>
    %72 = arith.mulf %67, %71 : vector<64x64xf32>
    %73 = arith.truncf %72 : vector<64x64xf32> to vector<64x64xbf16>
    %cst_34 = arith.constant dense<0.000000e+00> : vector<64x64xf32>
    %74 = tpu.matmul %73, %58, %cst_34 {dimension_numbers = #tpu.dot_dimension_numbers<[1], [0], [0], [1], [0, 0, 1, 1], [], []>} : vector<64x64xbf16>, vector<64x64xbf16>, vector<64x64xf32> -> vector<64x64xf32>
    %75 = vector.extract_strided_slice %39 {offsets = [0, 64], sizes = [64, 64], strides = [1, 1]} : vector<64x384xf32> to vector<64x64xf32>
    %76 = arith.truncf %75 : vector<64x64xf32> to vector<64x64xbf16>
    %77 = vector.extract_strided_slice %39 {offsets = [0, 192], sizes = [64, 64], strides = [1, 1]} : vector<64x384xf32> to vector<64x64xf32>
    %78 = arith.truncf %77 : vector<64x64xf32> to vector<64x64xbf16>
    %79 = vector.extract_strided_slice %39 {offsets = [0, 320], sizes = [64, 64], strides = [1, 1]} : vector<64x384xf32> to vector<64x64xf32>
    %80 = arith.truncf %79 : vector<64x64xf32> to vector<64x64xbf16>
    %cst_35 = arith.constant dense<0.000000e+00> : vector<64x64xf32>
    %81 = tpu.matmul %76, %78, %cst_35 {dimension_numbers = #tpu.dot_dimension_numbers<[1], [1], [0], [0], [0, 0, 1, 0], [], []>} : vector<64x64xbf16>, vector<64x64xbf16>, vector<64x64xf32> -> vector<64x64xf32>
    %cst_36 = arith.constant 1.250000e-01 : f32
    %82 = vector.broadcast %cst_36 : f32 to vector<64x64xf32>
    %83 = arith.mulf %81, %82 : vector<64x64xf32>
    %84 = arith.addf %83, %52 : vector<64x64xf32>
    %cst_37 = arith.constant dense<0xFF800000> : vector<64xf32>
    %85 = vector.multi_reduction <maximumf>, %84, %cst_37 [1] : vector<64x64xf32> to vector<64xf32>
    %86 = vector.shape_cast %85 : vector<64xf32> to vector<64x1xf32>
    %87 = vector.broadcast %86 : vector<64x1xf32> to vector<64x64xf32>
    %88 = arith.subf %84, %87 : vector<64x64xf32>
    %89 = math.exp %88 : vector<64x64xf32>
    %cst_38 = arith.constant dense<0.000000e+00> : vector<64xf32>
    %90 = vector.multi_reduction <add>, %89, %cst_38 [1] : vector<64x64xf32> to vector<64xf32>
    %91 = vector.shape_cast %90 : vector<64xf32> to vector<64x1xf32>
    %92 = tpu.reciprocal %91 {approx = true} : vector<64x1xf32> -> vector<64x1xf32>
    %93 = vector.broadcast %92 : vector<64x1xf32> to vector<64x64xf32>
    %94 = arith.mulf %89, %93 : vector<64x64xf32>
    %95 = arith.truncf %94 : vector<64x64xf32> to vector<64x64xbf16>
    %cst_39 = arith.constant dense<0.000000e+00> : vector<64x64xf32>
    %96 = tpu.matmul %95, %80, %cst_39 {dimension_numbers = #tpu.dot_dimension_numbers<[1], [0], [0], [1], [0, 0, 1, 1], [], []>} : vector<64x64xbf16>, vector<64x64xbf16>, vector<64x64xf32> -> vector<64x64xf32>
    %97 = tpu.concatenate %74, %96 in 1 : vector<64x64xf32>, vector<64x64xf32> -> vector<64x128xf32>
    %98 = arith.truncf %97 : vector<64x128xf32> to vector<64x128xbf16>
    %c0_40 = arith.constant 0 : index
    %c0_41 = arith.constant 0 : index
    %99 = vector.load %arg13[%c0_40, %c0_41] : memref<128x128xbf16, #tpu.memory_space<vmem>>, vector<128x128xbf16>
    %cst_42 = arith.constant dense<0.000000e+00> : vector<64x128xf32>
    %100 = tpu.matmul %98, %99, %cst_42 {dimension_numbers = #tpu.dot_dimension_numbers<[1], [0], [0], [1], [0, 0, 1, 1], [], []>} : vector<64x128xbf16>, vector<128x128xbf16>, vector<64x128xf32> -> vector<64x128xf32>
    %c0_43 = arith.constant 0 : index
    %c0_44 = arith.constant 0 : index
    %101 = vector.load %arg14[%c0_43, %c0_44] : memref<1x128xf32, #tpu.memory_space<vmem>>, vector<1x128xf32>
    %102 = vector.broadcast %101 : vector<1x128xf32> to vector<64x128xf32>
    %103 = arith.addf %100, %102 : vector<64x128xf32>
    %104 = arith.addf %33, %103 : vector<64x128xf32>
    %cst_45 = arith.constant dense<0.000000e+00> : vector<64xf32>
    %105 = vector.multi_reduction <add>, %104, %cst_45 [1] : vector<64x128xf32> to vector<64xf32>
    %106 = vector.shape_cast %105 : vector<64xf32> to vector<64x1xf32>
    %cst_46 = arith.constant 1.280000e+02 : f32
    %107 = vector.broadcast %cst_46 : f32 to vector<64x1xf32>
    %108 = arith.divf %106, %107 : vector<64x1xf32>
    %109 = vector.broadcast %108 : vector<64x1xf32> to vector<64x128xf32>
    %110 = arith.subf %104, %109 : vector<64x128xf32>
    %111 = arith.mulf %110, %110 : vector<64x128xf32>
    %cst_47 = arith.constant dense<0.000000e+00> : vector<64xf32>
    %112 = vector.multi_reduction <add>, %111, %cst_47 [1] : vector<64x128xf32> to vector<64xf32>
    %113 = vector.shape_cast %112 : vector<64xf32> to vector<64x1xf32>
    %cst_48 = arith.constant 1.280000e+02 : f32
    %114 = vector.broadcast %cst_48 : f32 to vector<64x1xf32>
    %115 = arith.divf %113, %114 : vector<64x1xf32>
    %cst_49 = arith.constant 9.99999996E-13 : f32
    %116 = vector.broadcast %cst_49 : f32 to vector<64x1xf32>
    %117 = arith.addf %115, %116 : vector<64x1xf32>
    %118 = math.rsqrt %117 : vector<64x1xf32>
    %119 = vector.broadcast %118 : vector<64x1xf32> to vector<64x128xf32>
    %120 = arith.mulf %110, %119 : vector<64x128xf32>
    %c0_50 = arith.constant 0 : index
    %c0_51 = arith.constant 0 : index
    %121 = vector.load %arg15[%c0_50, %c0_51] : memref<1x128xf32, #tpu.memory_space<vmem>>, vector<1x128xf32>
    %122 = vector.broadcast %121 : vector<1x128xf32> to vector<64x128xf32>
    %123 = arith.mulf %120, %122 : vector<64x128xf32>
    %c0_52 = arith.constant 0 : index
    %c0_53 = arith.constant 0 : index
    %124 = vector.load %arg16[%c0_52, %c0_53] : memref<1x128xf32, #tpu.memory_space<vmem>>, vector<1x128xf32>
    %125 = vector.broadcast %124 : vector<1x128xf32> to vector<64x128xf32>
    %126 = arith.addf %123, %125 : vector<64x128xf32>
    %127 = arith.truncf %126 : vector<64x128xf32> to vector<64x128xbf16>
    %c0_54 = arith.constant 0 : index
    %c0_55 = arith.constant 0 : index
    %128 = vector.load %arg17[%c0_54, %c0_55] : memref<128x256xbf16, #tpu.memory_space<vmem>>, vector<128x256xbf16>
    %cst_56 = arith.constant dense<0.000000e+00> : vector<64x256xf32>
    %129 = tpu.matmul %127, %128, %cst_56 {dimension_numbers = #tpu.dot_dimension_numbers<[1], [0], [0], [1], [0, 0, 1, 1], [], []>} : vector<64x128xbf16>, vector<128x256xbf16>, vector<64x256xf32> -> vector<64x256xf32>
    %c0_57 = arith.constant 0 : index
    %c0_58 = arith.constant 0 : index
    %130 = vector.load %arg18[%c0_57, %c0_58] : memref<1x256xf32, #tpu.memory_space<vmem>>, vector<1x256xf32>
    %131 = vector.broadcast %130 : vector<1x256xf32> to vector<64x256xf32>
    %132 = arith.addf %129, %131 : vector<64x256xf32>
    %133 = arith.mulf %132, %132 : vector<64x256xf32>
    %134 = arith.mulf %132, %133 : vector<64x256xf32>
    %cst_59 = arith.constant 4.471500e-02 : f32
    %135 = vector.broadcast %cst_59 : f32 to vector<64x256xf32>
    %136 = arith.mulf %135, %134 : vector<64x256xf32>
    %137 = arith.addf %132, %136 : vector<64x256xf32>
    %cst_60 = arith.constant 0.797884583 : f32
    %138 = vector.broadcast %cst_60 : f32 to vector<64x256xf32>
    %139 = arith.mulf %138, %137 : vector<64x256xf32>
    %140 = math.tanh %139 : vector<64x256xf32>
    %cst_61 = arith.constant 1.000000e+00 : f32
    %141 = vector.broadcast %cst_61 : f32 to vector<64x256xf32>
    %142 = arith.addf %141, %140 : vector<64x256xf32>
    %cst_62 = arith.constant 5.000000e-01 : f32
    %143 = vector.broadcast %cst_62 : f32 to vector<64x256xf32>
    %144 = arith.mulf %143, %142 : vector<64x256xf32>
    %145 = arith.mulf %132, %144 : vector<64x256xf32>
    %146 = arith.truncf %145 : vector<64x256xf32> to vector<64x256xbf16>
    %c0_63 = arith.constant 0 : index
    %c0_64 = arith.constant 0 : index
    %147 = vector.load %arg19[%c0_63, %c0_64] : memref<256x128xbf16, #tpu.memory_space<vmem>>, vector<256x128xbf16>
    %cst_65 = arith.constant dense<0.000000e+00> : vector<64x128xf32>
    %148 = tpu.matmul %146, %147, %cst_65 {dimension_numbers = #tpu.dot_dimension_numbers<[1], [0], [0], [1], [0, 0, 1, 1], [], []>} : vector<64x256xbf16>, vector<256x128xbf16>, vector<64x128xf32> -> vector<64x128xf32>
    %c0_66 = arith.constant 0 : index
    %c0_67 = arith.constant 0 : index
    %149 = vector.load %arg20[%c0_66, %c0_67] : memref<1x128xf32, #tpu.memory_space<vmem>>, vector<1x128xf32>
    %150 = vector.broadcast %149 : vector<1x128xf32> to vector<64x128xf32>
    %151 = arith.addf %148, %150 : vector<64x128xf32>
    %152 = arith.addf %126, %151 : vector<64x128xf32>
    %cst_68 = arith.constant dense<0.000000e+00> : vector<64xf32>
    %153 = vector.multi_reduction <add>, %152, %cst_68 [1] : vector<64x128xf32> to vector<64xf32>
    %154 = vector.shape_cast %153 : vector<64xf32> to vector<64x1xf32>
    %cst_69 = arith.constant 1.280000e+02 : f32
    %155 = vector.broadcast %cst_69 : f32 to vector<64x1xf32>
    %156 = arith.divf %154, %155 : vector<64x1xf32>
    %157 = vector.broadcast %156 : vector<64x1xf32> to vector<64x128xf32>
    %158 = arith.subf %152, %157 : vector<64x128xf32>
    %159 = arith.mulf %158, %158 : vector<64x128xf32>
    %cst_70 = arith.constant dense<0.000000e+00> : vector<64xf32>
    %160 = vector.multi_reduction <add>, %159, %cst_70 [1] : vector<64x128xf32> to vector<64xf32>
    %161 = vector.shape_cast %160 : vector<64xf32> to vector<64x1xf32>
    %cst_71 = arith.constant 1.280000e+02 : f32
    %162 = vector.broadcast %cst_71 : f32 to vector<64x1xf32>
    %163 = arith.divf %161, %162 : vector<64x1xf32>
    %cst_72 = arith.constant 9.99999996E-13 : f32
    %164 = vector.broadcast %cst_72 : f32 to vector<64x1xf32>
    %165 = arith.addf %163, %164 : vector<64x1xf32>
    %166 = math.rsqrt %165 : vector<64x1xf32>
    %167 = vector.broadcast %166 : vector<64x1xf32> to vector<64x128xf32>
    %168 = arith.mulf %158, %167 : vector<64x128xf32>
    %c0_73 = arith.constant 0 : index
    %c0_74 = arith.constant 0 : index
    %169 = vector.load %arg21[%c0_73, %c0_74] : memref<1x128xf32, #tpu.memory_space<vmem>>, vector<1x128xf32>
    %170 = vector.broadcast %169 : vector<1x128xf32> to vector<64x128xf32>
    %171 = arith.mulf %168, %170 : vector<64x128xf32>
    %c0_75 = arith.constant 0 : index
    %c0_76 = arith.constant 0 : index
    %172 = vector.load %arg22[%c0_75, %c0_76] : memref<1x128xf32, #tpu.memory_space<vmem>>, vector<1x128xf32>
    %173 = vector.broadcast %172 : vector<1x128xf32> to vector<64x128xf32>
    %174 = arith.addf %171, %173 : vector<64x128xf32>
    %175 = tpu.iota {dimensions = array<i32: 1>} : vector<8x64xi32>
    %176 = tpu.iota {dimensions = array<i32: 0>} : vector<8x64xi32>
    %c8_i32 = arith.constant 8 : i32
    %177 = vector.broadcast %c8_i32 : i32 to vector<8x64xi32>
    %178 = arith.muli %176, %177 : vector<8x64xi32>
    %179 = arith.cmpi eq, %175, %178 : vector<8x64xi32>
    %cst_77 = arith.constant 1.000000e+00 : f32
    %cst_78 = arith.constant 0.000000e+00 : f32
    %180 = vector.broadcast %cst_77 : f32 to vector<8x64xf32>
    %181 = vector.broadcast %cst_78 : f32 to vector<8x64xf32>
    %182 = arith.select %179, %180, %181 : vector<8x64xi1>, vector<8x64xf32>
    %183 = arith.truncf %182 : vector<8x64xf32> to vector<8x64xbf16>
    %184 = arith.truncf %174 : vector<64x128xf32> to vector<64x128xbf16>
    %cst_79 = arith.constant dense<0.000000e+00> : vector<8x128xf32>
    %185 = tpu.matmul %183, %184, %cst_79 {dimension_numbers = #tpu.dot_dimension_numbers<[1], [0], [0], [1], [0, 0, 1, 1], [], []>} : vector<8x64xbf16>, vector<64x128xbf16>, vector<8x128xf32> -> vector<8x128xf32>
    %186 = arith.truncf %185 : vector<8x128xf32> to vector<8x128xbf16>
    %c0_80 = arith.constant 0 : index
    %c0_81 = arith.constant 0 : index
    %187 = vector.load %arg23[%c0_80, %c0_81] : memref<128x128xbf16, #tpu.memory_space<vmem>>, vector<128x128xbf16>
    %cst_82 = arith.constant dense<0.000000e+00> : vector<8x128xf32>
    %188 = tpu.matmul %186, %187, %cst_82 {dimension_numbers = #tpu.dot_dimension_numbers<[1], [0], [0], [1], [0, 0, 1, 1], [], []>} : vector<8x128xbf16>, vector<128x128xbf16>, vector<8x128xf32> -> vector<8x128xf32>
    %c0_83 = arith.constant 0 : index
    %c0_84 = arith.constant 0 : index
    %189 = vector.load %arg24[%c0_83, %c0_84] : memref<1x128xf32, #tpu.memory_space<vmem>>, vector<1x128xf32>
    %190 = vector.broadcast %189 : vector<1x128xf32> to vector<8x128xf32>
    %191 = arith.addf %188, %190 : vector<8x128xf32>
    %192 = math.tanh %191 : vector<8x128xf32>
    %193 = arith.truncf %192 : vector<8x128xf32> to vector<8x128xbf16>
    %c0_85 = arith.constant 0 : index
    %c0_86 = arith.constant 0 : index
    %194 = vector.load %arg25[%c0_85, %c0_86] : memref<128x128xbf16, #tpu.memory_space<vmem>>, vector<128x128xbf16>
    %cst_87 = arith.constant dense<0.000000e+00> : vector<8x128xf32>
    %195 = tpu.matmul %193, %194, %cst_87 {dimension_numbers = #tpu.dot_dimension_numbers<[1], [0], [0], [1], [0, 0, 1, 1], [], []>} : vector<8x128xbf16>, vector<128x128xbf16>, vector<8x128xf32> -> vector<8x128xf32>
    %c0_88 = arith.constant 0 : index
    %c0_89 = arith.constant 0 : index
    %196 = vector.load %arg26[%c0_88, %c0_89] : memref<1x128xf32, #tpu.memory_space<vmem>>, vector<1x128xf32>
    %197 = vector.broadcast %196 : vector<1x128xf32> to vector<8x128xf32>
    %198 = arith.addf %195, %197 : vector<8x128xf32>
    %199 = arith.truncf %198 : vector<8x128xf32> to vector<8x128xbf16>
    %c0_90 = arith.constant 0 : index
    %c0_91 = arith.constant 0 : index
    %200 = vector.load %arg27[%c0_90, %c0_91] : memref<128x768xbf16, #tpu.memory_space<vmem>>, vector<128x768xbf16>
    %cst_92 = arith.constant dense<0.000000e+00> : vector<8x768xf32>
    %201 = tpu.matmul %199, %200, %cst_92 {dimension_numbers = #tpu.dot_dimension_numbers<[1], [0], [0], [1], [0, 0, 1, 1], [], []>} : vector<8x128xbf16>, vector<128x768xbf16>, vector<8x768xf32> -> vector<8x768xf32>
    %c0_93 = arith.constant 0 : index
    %c0_94 = arith.constant 0 : index
    %202 = vector.load %arg28[%c0_93, %c0_94] : memref<1x768xf32, #tpu.memory_space<vmem>>, vector<1x768xf32>
    %203 = vector.broadcast %202 : vector<1x768xf32> to vector<8x768xf32>
    %204 = arith.addf %201, %203 : vector<8x768xf32>
    %205 = vector.extract_strided_slice %204 {offsets = [0, 0], sizes = [8, 384], strides = [1, 1]} : vector<8x768xf32> to vector<8x384xf32>
    %206 = vector.extract_strided_slice %204 {offsets = [0, 384], sizes = [8, 384], strides = [1, 1]} : vector<8x768xf32> to vector<8x384xf32>
    %cst_95 = arith.constant 0.000000e+00 : f32
    %207 = vector.broadcast %cst_95 : f32 to vector<2x128xf32>
    %cst_96 = arith.constant 0.000000e+00 : f32
    %208 = vector.broadcast %cst_96 : f32 to vector<2x128xf32>
    %209 = vector.extract_strided_slice %205 {offsets = [0, 0], sizes = [2, 384], strides = [1, 1]} : vector<8x384xf32> to vector<2x384xf32>
    %210 = arith.truncf %207 : vector<2x128xf32> to vector<2x128xbf16>
    %c0_97 = arith.constant 0 : index
    %c0_98 = arith.constant 0 : index
    %211 = vector.load %arg29[%c0_97, %c0_98] : memref<128x384xbf16, #tpu.memory_space<vmem>>, vector<128x384xbf16>
    %cst_99 = arith.constant dense<0.000000e+00> : vector<2x384xf32>
    %212 = tpu.matmul %210, %211, %cst_99 {dimension_numbers = #tpu.dot_dimension_numbers<[1], [0], [0], [1], [0, 0, 1, 1], [], []>} : vector<2x128xbf16>, vector<128x384xbf16>, vector<2x384xf32> -> vector<2x384xf32>
    %c0_100 = arith.constant 0 : index
    %c0_101 = arith.constant 0 : index
    %213 = vector.load %arg30[%c0_100, %c0_101] : memref<1x384xf32, #tpu.memory_space<vmem>>, vector<1x384xf32>
    %214 = vector.broadcast %213 : vector<1x384xf32> to vector<2x384xf32>
    %215 = arith.addf %212, %214 : vector<2x384xf32>
    %216 = vector.extract_strided_slice %209 {offsets = [0, 0], sizes = [2, 128], strides = [1, 1]} : vector<2x384xf32> to vector<2x128xf32>
    %217 = vector.extract_strided_slice %215 {offsets = [0, 0], sizes = [2, 128], strides = [1, 1]} : vector<2x384xf32> to vector<2x128xf32>
    %218 = arith.addf %216, %217 : vector<2x128xf32>
    %219 = arith.negf %218 : vector<2x128xf32>
    %220 = math.exp %219 : vector<2x128xf32>
    %cst_102 = arith.constant 1.000000e+00 : f32
    %221 = vector.broadcast %cst_102 : f32 to vector<2x128xf32>
    %222 = arith.addf %221, %220 : vector<2x128xf32>
    %223 = arith.divf %221, %222 : vector<2x128xf32>
    %224 = vector.extract_strided_slice %209 {offsets = [0, 128], sizes = [2, 128], strides = [1, 1]} : vector<2x384xf32> to vector<2x128xf32>
    %225 = vector.extract_strided_slice %215 {offsets = [0, 128], sizes = [2, 128], strides = [1, 1]} : vector<2x384xf32> to vector<2x128xf32>
    %226 = arith.addf %224, %225 : vector<2x128xf32>
    %227 = arith.negf %226 : vector<2x128xf32>
    %228 = math.exp %227 : vector<2x128xf32>
    %cst_103 = arith.constant 1.000000e+00 : f32
    %229 = vector.broadcast %cst_103 : f32 to vector<2x128xf32>
    %230 = arith.addf %229, %228 : vector<2x128xf32>
    %231 = arith.divf %229, %230 : vector<2x128xf32>
    %232 = vector.extract_strided_slice %209 {offsets = [0, 256], sizes = [2, 128], strides = [1, 1]} : vector<2x384xf32> to vector<2x128xf32>
    %233 = vector.extract_strided_slice %215 {offsets = [0, 256], sizes = [2, 128], strides = [1, 1]} : vector<2x384xf32> to vector<2x128xf32>
    %234 = arith.mulf %223, %233 : vector<2x128xf32>
    %235 = arith.addf %232, %234 : vector<2x128xf32>
    %236 = math.tanh %235 : vector<2x128xf32>
    %cst_104 = arith.constant 1.000000e+00 : f32
    %237 = vector.broadcast %cst_104 : f32 to vector<2x128xf32>
    %238 = arith.subf %237, %231 : vector<2x128xf32>
    %239 = arith.mulf %238, %236 : vector<2x128xf32>
    %240 = arith.mulf %231, %207 : vector<2x128xf32>
    %241 = arith.addf %239, %240 : vector<2x128xf32>
    %242 = vector.extract_strided_slice %206 {offsets = [6, 0], sizes = [2, 384], strides = [1, 1]} : vector<8x384xf32> to vector<2x384xf32>
    %243 = arith.truncf %208 : vector<2x128xf32> to vector<2x128xbf16>
    %c0_105 = arith.constant 0 : index
    %c0_106 = arith.constant 0 : index
    %244 = vector.load %arg31[%c0_105, %c0_106] : memref<128x384xbf16, #tpu.memory_space<vmem>>, vector<128x384xbf16>
    %cst_107 = arith.constant dense<0.000000e+00> : vector<2x384xf32>
    %245 = tpu.matmul %243, %244, %cst_107 {dimension_numbers = #tpu.dot_dimension_numbers<[1], [0], [0], [1], [0, 0, 1, 1], [], []>} : vector<2x128xbf16>, vector<128x384xbf16>, vector<2x384xf32> -> vector<2x384xf32>
    %c0_108 = arith.constant 0 : index
    %c0_109 = arith.constant 0 : index
    %246 = vector.load %arg32[%c0_108, %c0_109] : memref<1x384xf32, #tpu.memory_space<vmem>>, vector<1x384xf32>
    %247 = vector.broadcast %246 : vector<1x384xf32> to vector<2x384xf32>
    %248 = arith.addf %245, %247 : vector<2x384xf32>
    %249 = vector.extract_strided_slice %242 {offsets = [0, 0], sizes = [2, 128], strides = [1, 1]} : vector<2x384xf32> to vector<2x128xf32>
    %250 = vector.extract_strided_slice %248 {offsets = [0, 0], sizes = [2, 128], strides = [1, 1]} : vector<2x384xf32> to vector<2x128xf32>
    %251 = arith.addf %249, %250 : vector<2x128xf32>
    %252 = arith.negf %251 : vector<2x128xf32>
    %253 = math.exp %252 : vector<2x128xf32>
    %cst_110 = arith.constant 1.000000e+00 : f32
    %254 = vector.broadcast %cst_110 : f32 to vector<2x128xf32>
    %255 = arith.addf %254, %253 : vector<2x128xf32>
    %256 = arith.divf %254, %255 : vector<2x128xf32>
    %257 = vector.extract_strided_slice %242 {offsets = [0, 128], sizes = [2, 128], strides = [1, 1]} : vector<2x384xf32> to vector<2x128xf32>
    %258 = vector.extract_strided_slice %248 {offsets = [0, 128], sizes = [2, 128], strides = [1, 1]} : vector<2x384xf32> to vector<2x128xf32>
    %259 = arith.addf %257, %258 : vector<2x128xf32>
    %260 = arith.negf %259 : vector<2x128xf32>
    %261 = math.exp %260 : vector<2x128xf32>
    %cst_111 = arith.constant 1.000000e+00 : f32
    %262 = vector.broadcast %cst_111 : f32 to vector<2x128xf32>
    %263 = arith.addf %262, %261 : vector<2x128xf32>
    %264 = arith.divf %262, %263 : vector<2x128xf32>
    %265 = vector.extract_strided_slice %242 {offsets = [0, 256], sizes = [2, 128], strides = [1, 1]} : vector<2x384xf32> to vector<2x128xf32>
    %266 = vector.extract_strided_slice %248 {offsets = [0, 256], sizes = [2, 128], strides = [1, 1]} : vector<2x384xf32> to vector<2x128xf32>
    %267 = arith.mulf %256, %266 : vector<2x128xf32>
    %268 = arith.addf %265, %267 : vector<2x128xf32>
    %269 = math.tanh %268 : vector<2x128xf32>
    %cst_112 = arith.constant 1.000000e+00 : f32
    %270 = vector.broadcast %cst_112 : f32 to vector<2x128xf32>
    %271 = arith.subf %270, %264 : vector<2x128xf32>
    %272 = arith.mulf %271, %269 : vector<2x128xf32>
    %273 = arith.mulf %264, %208 : vector<2x128xf32>
    %274 = arith.addf %272, %273 : vector<2x128xf32>
    %275 = vector.extract_strided_slice %205 {offsets = [2, 0], sizes = [2, 384], strides = [1, 1]} : vector<8x384xf32> to vector<2x384xf32>
    %276 = arith.truncf %241 : vector<2x128xf32> to vector<2x128xbf16>
    %c0_113 = arith.constant 0 : index
    %c0_114 = arith.constant 0 : index
    %277 = vector.load %arg29[%c0_113, %c0_114] : memref<128x384xbf16, #tpu.memory_space<vmem>>, vector<128x384xbf16>
    %cst_115 = arith.constant dense<0.000000e+00> : vector<2x384xf32>
    %278 = tpu.matmul %276, %277, %cst_115 {dimension_numbers = #tpu.dot_dimension_numbers<[1], [0], [0], [1], [0, 0, 1, 1], [], []>} : vector<2x128xbf16>, vector<128x384xbf16>, vector<2x384xf32> -> vector<2x384xf32>
    %c0_116 = arith.constant 0 : index
    %c0_117 = arith.constant 0 : index
    %279 = vector.load %arg30[%c0_116, %c0_117] : memref<1x384xf32, #tpu.memory_space<vmem>>, vector<1x384xf32>
    %280 = vector.broadcast %279 : vector<1x384xf32> to vector<2x384xf32>
    %281 = arith.addf %278, %280 : vector<2x384xf32>
    %282 = vector.extract_strided_slice %275 {offsets = [0, 0], sizes = [2, 128], strides = [1, 1]} : vector<2x384xf32> to vector<2x128xf32>
    %283 = vector.extract_strided_slice %281 {offsets = [0, 0], sizes = [2, 128], strides = [1, 1]} : vector<2x384xf32> to vector<2x128xf32>
    %284 = arith.addf %282, %283 : vector<2x128xf32>
    %285 = arith.negf %284 : vector<2x128xf32>
    %286 = math.exp %285 : vector<2x128xf32>
    %cst_118 = arith.constant 1.000000e+00 : f32
    %287 = vector.broadcast %cst_118 : f32 to vector<2x128xf32>
    %288 = arith.addf %287, %286 : vector<2x128xf32>
    %289 = arith.divf %287, %288 : vector<2x128xf32>
    %290 = vector.extract_strided_slice %275 {offsets = [0, 128], sizes = [2, 128], strides = [1, 1]} : vector<2x384xf32> to vector<2x128xf32>
    %291 = vector.extract_strided_slice %281 {offsets = [0, 128], sizes = [2, 128], strides = [1, 1]} : vector<2x384xf32> to vector<2x128xf32>
    %292 = arith.addf %290, %291 : vector<2x128xf32>
    %293 = arith.negf %292 : vector<2x128xf32>
    %294 = math.exp %293 : vector<2x128xf32>
    %cst_119 = arith.constant 1.000000e+00 : f32
    %295 = vector.broadcast %cst_119 : f32 to vector<2x128xf32>
    %296 = arith.addf %295, %294 : vector<2x128xf32>
    %297 = arith.divf %295, %296 : vector<2x128xf32>
    %298 = vector.extract_strided_slice %275 {offsets = [0, 256], sizes = [2, 128], strides = [1, 1]} : vector<2x384xf32> to vector<2x128xf32>
    %299 = vector.extract_strided_slice %281 {offsets = [0, 256], sizes = [2, 128], strides = [1, 1]} : vector<2x384xf32> to vector<2x128xf32>
    %300 = arith.mulf %289, %299 : vector<2x128xf32>
    %301 = arith.addf %298, %300 : vector<2x128xf32>
    %302 = math.tanh %301 : vector<2x128xf32>
    %cst_120 = arith.constant 1.000000e+00 : f32
    %303 = vector.broadcast %cst_120 : f32 to vector<2x128xf32>
    %304 = arith.subf %303, %297 : vector<2x128xf32>
    %305 = arith.mulf %304, %302 : vector<2x128xf32>
    %306 = arith.mulf %297, %241 : vector<2x128xf32>
    %307 = arith.addf %305, %306 : vector<2x128xf32>
    %308 = vector.extract_strided_slice %206 {offsets = [4, 0], sizes = [2, 384], strides = [1, 1]} : vector<8x384xf32> to vector<2x384xf32>
    %309 = arith.truncf %274 : vector<2x128xf32> to vector<2x128xbf16>
    %c0_121 = arith.constant 0 : index
    %c0_122 = arith.constant 0 : index
    %310 = vector.load %arg31[%c0_121, %c0_122] : memref<128x384xbf16, #tpu.memory_space<vmem>>, vector<128x384xbf16>
    %cst_123 = arith.constant dense<0.000000e+00> : vector<2x384xf32>
    %311 = tpu.matmul %309, %310, %cst_123 {dimension_numbers = #tpu.dot_dimension_numbers<[1], [0], [0], [1], [0, 0, 1, 1], [], []>} : vector<2x128xbf16>, vector<128x384xbf16>, vector<2x384xf32> -> vector<2x384xf32>
    %c0_124 = arith.constant 0 : index
    %c0_125 = arith.constant 0 : index
    %312 = vector.load %arg32[%c0_124, %c0_125] : memref<1x384xf32, #tpu.memory_space<vmem>>, vector<1x384xf32>
    %313 = vector.broadcast %312 : vector<1x384xf32> to vector<2x384xf32>
    %314 = arith.addf %311, %313 : vector<2x384xf32>
    %315 = vector.extract_strided_slice %308 {offsets = [0, 0], sizes = [2, 128], strides = [1, 1]} : vector<2x384xf32> to vector<2x128xf32>
    %316 = vector.extract_strided_slice %314 {offsets = [0, 0], sizes = [2, 128], strides = [1, 1]} : vector<2x384xf32> to vector<2x128xf32>
    %317 = arith.addf %315, %316 : vector<2x128xf32>
    %318 = arith.negf %317 : vector<2x128xf32>
    %319 = math.exp %318 : vector<2x128xf32>
    %cst_126 = arith.constant 1.000000e+00 : f32
    %320 = vector.broadcast %cst_126 : f32 to vector<2x128xf32>
    %321 = arith.addf %320, %319 : vector<2x128xf32>
    %322 = arith.divf %320, %321 : vector<2x128xf32>
    %323 = vector.extract_strided_slice %308 {offsets = [0, 128], sizes = [2, 128], strides = [1, 1]} : vector<2x384xf32> to vector<2x128xf32>
    %324 = vector.extract_strided_slice %314 {offsets = [0, 128], sizes = [2, 128], strides = [1, 1]} : vector<2x384xf32> to vector<2x128xf32>
    %325 = arith.addf %323, %324 : vector<2x128xf32>
    %326 = arith.negf %325 : vector<2x128xf32>
    %327 = math.exp %326 : vector<2x128xf32>
    %cst_127 = arith.constant 1.000000e+00 : f32
    %328 = vector.broadcast %cst_127 : f32 to vector<2x128xf32>
    %329 = arith.addf %328, %327 : vector<2x128xf32>
    %330 = arith.divf %328, %329 : vector<2x128xf32>
    %331 = vector.extract_strided_slice %308 {offsets = [0, 256], sizes = [2, 128], strides = [1, 1]} : vector<2x384xf32> to vector<2x128xf32>
    %332 = vector.extract_strided_slice %314 {offsets = [0, 256], sizes = [2, 128], strides = [1, 1]} : vector<2x384xf32> to vector<2x128xf32>
    %333 = arith.mulf %322, %332 : vector<2x128xf32>
    %334 = arith.addf %331, %333 : vector<2x128xf32>
    %335 = math.tanh %334 : vector<2x128xf32>
    %cst_128 = arith.constant 1.000000e+00 : f32
    %336 = vector.broadcast %cst_128 : f32 to vector<2x128xf32>
    %337 = arith.subf %336, %330 : vector<2x128xf32>
    %338 = arith.mulf %337, %335 : vector<2x128xf32>
    %339 = arith.mulf %330, %274 : vector<2x128xf32>
    %340 = arith.addf %338, %339 : vector<2x128xf32>
    %341 = vector.extract_strided_slice %205 {offsets = [4, 0], sizes = [2, 384], strides = [1, 1]} : vector<8x384xf32> to vector<2x384xf32>
    %342 = arith.truncf %307 : vector<2x128xf32> to vector<2x128xbf16>
    %c0_129 = arith.constant 0 : index
    %c0_130 = arith.constant 0 : index
    %343 = vector.load %arg29[%c0_129, %c0_130] : memref<128x384xbf16, #tpu.memory_space<vmem>>, vector<128x384xbf16>
    %cst_131 = arith.constant dense<0.000000e+00> : vector<2x384xf32>
    %344 = tpu.matmul %342, %343, %cst_131 {dimension_numbers = #tpu.dot_dimension_numbers<[1], [0], [0], [1], [0, 0, 1, 1], [], []>} : vector<2x128xbf16>, vector<128x384xbf16>, vector<2x384xf32> -> vector<2x384xf32>
    %c0_132 = arith.constant 0 : index
    %c0_133 = arith.constant 0 : index
    %345 = vector.load %arg30[%c0_132, %c0_133] : memref<1x384xf32, #tpu.memory_space<vmem>>, vector<1x384xf32>
    %346 = vector.broadcast %345 : vector<1x384xf32> to vector<2x384xf32>
    %347 = arith.addf %344, %346 : vector<2x384xf32>
    %348 = vector.extract_strided_slice %341 {offsets = [0, 0], sizes = [2, 128], strides = [1, 1]} : vector<2x384xf32> to vector<2x128xf32>
    %349 = vector.extract_strided_slice %347 {offsets = [0, 0], sizes = [2, 128], strides = [1, 1]} : vector<2x384xf32> to vector<2x128xf32>
    %350 = arith.addf %348, %349 : vector<2x128xf32>
    %351 = arith.negf %350 : vector<2x128xf32>
    %352 = math.exp %351 : vector<2x128xf32>
    %cst_134 = arith.constant 1.000000e+00 : f32
    %353 = vector.broadcast %cst_134 : f32 to vector<2x128xf32>
    %354 = arith.addf %353, %352 : vector<2x128xf32>
    %355 = arith.divf %353, %354 : vector<2x128xf32>
    %356 = vector.extract_strided_slice %341 {offsets = [0, 128], sizes = [2, 128], strides = [1, 1]} : vector<2x384xf32> to vector<2x128xf32>
    %357 = vector.extract_strided_slice %347 {offsets = [0, 128], sizes = [2, 128], strides = [1, 1]} : vector<2x384xf32> to vector<2x128xf32>
    %358 = arith.addf %356, %357 : vector<2x128xf32>
    %359 = arith.negf %358 : vector<2x128xf32>
    %360 = math.exp %359 : vector<2x128xf32>
    %cst_135 = arith.constant 1.000000e+00 : f32
    %361 = vector.broadcast %cst_135 : f32 to vector<2x128xf32>
    %362 = arith.addf %361, %360 : vector<2x128xf32>
    %363 = arith.divf %361, %362 : vector<2x128xf32>
    %364 = vector.extract_strided_slice %341 {offsets = [0, 256], sizes = [2, 128], strides = [1, 1]} : vector<2x384xf32> to vector<2x128xf32>
    %365 = vector.extract_strided_slice %347 {offsets = [0, 256], sizes = [2, 128], strides = [1, 1]} : vector<2x384xf32> to vector<2x128xf32>
    %366 = arith.mulf %355, %365 : vector<2x128xf32>
    %367 = arith.addf %364, %366 : vector<2x128xf32>
    %368 = math.tanh %367 : vector<2x128xf32>
    %cst_136 = arith.constant 1.000000e+00 : f32
    %369 = vector.broadcast %cst_136 : f32 to vector<2x128xf32>
    %370 = arith.subf %369, %363 : vector<2x128xf32>
    %371 = arith.mulf %370, %368 : vector<2x128xf32>
    %372 = arith.mulf %363, %307 : vector<2x128xf32>
    %373 = arith.addf %371, %372 : vector<2x128xf32>
    %374 = vector.extract_strided_slice %206 {offsets = [2, 0], sizes = [2, 384], strides = [1, 1]} : vector<8x384xf32> to vector<2x384xf32>
    %375 = arith.truncf %340 : vector<2x128xf32> to vector<2x128xbf16>
    %c0_137 = arith.constant 0 : index
    %c0_138 = arith.constant 0 : index
    %376 = vector.load %arg31[%c0_137, %c0_138] : memref<128x384xbf16, #tpu.memory_space<vmem>>, vector<128x384xbf16>
    %cst_139 = arith.constant dense<0.000000e+00> : vector<2x384xf32>
    %377 = tpu.matmul %375, %376, %cst_139 {dimension_numbers = #tpu.dot_dimension_numbers<[1], [0], [0], [1], [0, 0, 1, 1], [], []>} : vector<2x128xbf16>, vector<128x384xbf16>, vector<2x384xf32> -> vector<2x384xf32>
    %c0_140 = arith.constant 0 : index
    %c0_141 = arith.constant 0 : index
    %378 = vector.load %arg32[%c0_140, %c0_141] : memref<1x384xf32, #tpu.memory_space<vmem>>, vector<1x384xf32>
    %379 = vector.broadcast %378 : vector<1x384xf32> to vector<2x384xf32>
    %380 = arith.addf %377, %379 : vector<2x384xf32>
    %381 = vector.extract_strided_slice %374 {offsets = [0, 0], sizes = [2, 128], strides = [1, 1]} : vector<2x384xf32> to vector<2x128xf32>
    %382 = vector.extract_strided_slice %380 {offsets = [0, 0], sizes = [2, 128], strides = [1, 1]} : vector<2x384xf32> to vector<2x128xf32>
    %383 = arith.addf %381, %382 : vector<2x128xf32>
    %384 = arith.negf %383 : vector<2x128xf32>
    %385 = math.exp %384 : vector<2x128xf32>
    %cst_142 = arith.constant 1.000000e+00 : f32
    %386 = vector.broadcast %cst_142 : f32 to vector<2x128xf32>
    %387 = arith.addf %386, %385 : vector<2x128xf32>
    %388 = arith.divf %386, %387 : vector<2x128xf32>
    %389 = vector.extract_strided_slice %374 {offsets = [0, 128], sizes = [2, 128], strides = [1, 1]} : vector<2x384xf32> to vector<2x128xf32>
    %390 = vector.extract_strided_slice %380 {offsets = [0, 128], sizes = [2, 128], strides = [1, 1]} : vector<2x384xf32> to vector<2x128xf32>
    %391 = arith.addf %389, %390 : vector<2x128xf32>
    %392 = arith.negf %391 : vector<2x128xf32>
    %393 = math.exp %392 : vector<2x128xf32>
    %cst_143 = arith.constant 1.000000e+00 : f32
    %394 = vector.broadcast %cst_143 : f32 to vector<2x128xf32>
    %395 = arith.addf %394, %393 : vector<2x128xf32>
    %396 = arith.divf %394, %395 : vector<2x128xf32>
    %397 = vector.extract_strided_slice %374 {offsets = [0, 256], sizes = [2, 128], strides = [1, 1]} : vector<2x384xf32> to vector<2x128xf32>
    %398 = vector.extract_strided_slice %380 {offsets = [0, 256], sizes = [2, 128], strides = [1, 1]} : vector<2x384xf32> to vector<2x128xf32>
    %399 = arith.mulf %388, %398 : vector<2x128xf32>
    %400 = arith.addf %397, %399 : vector<2x128xf32>
    %401 = math.tanh %400 : vector<2x128xf32>
    %cst_144 = arith.constant 1.000000e+00 : f32
    %402 = vector.broadcast %cst_144 : f32 to vector<2x128xf32>
    %403 = arith.subf %402, %396 : vector<2x128xf32>
    %404 = arith.mulf %403, %401 : vector<2x128xf32>
    %405 = arith.mulf %396, %340 : vector<2x128xf32>
    %406 = arith.addf %404, %405 : vector<2x128xf32>
    %407 = vector.extract_strided_slice %205 {offsets = [6, 0], sizes = [2, 384], strides = [1, 1]} : vector<8x384xf32> to vector<2x384xf32>
    %408 = arith.truncf %373 : vector<2x128xf32> to vector<2x128xbf16>
    %c0_145 = arith.constant 0 : index
    %c0_146 = arith.constant 0 : index
    %409 = vector.load %arg29[%c0_145, %c0_146] : memref<128x384xbf16, #tpu.memory_space<vmem>>, vector<128x384xbf16>
    %cst_147 = arith.constant dense<0.000000e+00> : vector<2x384xf32>
    %410 = tpu.matmul %408, %409, %cst_147 {dimension_numbers = #tpu.dot_dimension_numbers<[1], [0], [0], [1], [0, 0, 1, 1], [], []>} : vector<2x128xbf16>, vector<128x384xbf16>, vector<2x384xf32> -> vector<2x384xf32>
    %c0_148 = arith.constant 0 : index
    %c0_149 = arith.constant 0 : index
    %411 = vector.load %arg30[%c0_148, %c0_149] : memref<1x384xf32, #tpu.memory_space<vmem>>, vector<1x384xf32>
    %412 = vector.broadcast %411 : vector<1x384xf32> to vector<2x384xf32>
    %413 = arith.addf %410, %412 : vector<2x384xf32>
    %414 = vector.extract_strided_slice %407 {offsets = [0, 0], sizes = [2, 128], strides = [1, 1]} : vector<2x384xf32> to vector<2x128xf32>
    %415 = vector.extract_strided_slice %413 {offsets = [0, 0], sizes = [2, 128], strides = [1, 1]} : vector<2x384xf32> to vector<2x128xf32>
    %416 = arith.addf %414, %415 : vector<2x128xf32>
    %417 = arith.negf %416 : vector<2x128xf32>
    %418 = math.exp %417 : vector<2x128xf32>
    %cst_150 = arith.constant 1.000000e+00 : f32
    %419 = vector.broadcast %cst_150 : f32 to vector<2x128xf32>
    %420 = arith.addf %419, %418 : vector<2x128xf32>
    %421 = arith.divf %419, %420 : vector<2x128xf32>
    %422 = vector.extract_strided_slice %407 {offsets = [0, 128], sizes = [2, 128], strides = [1, 1]} : vector<2x384xf32> to vector<2x128xf32>
    %423 = vector.extract_strided_slice %413 {offsets = [0, 128], sizes = [2, 128], strides = [1, 1]} : vector<2x384xf32> to vector<2x128xf32>
    %424 = arith.addf %422, %423 : vector<2x128xf32>
    %425 = arith.negf %424 : vector<2x128xf32>
    %426 = math.exp %425 : vector<2x128xf32>
    %cst_151 = arith.constant 1.000000e+00 : f32
    %427 = vector.broadcast %cst_151 : f32 to vector<2x128xf32>
    %428 = arith.addf %427, %426 : vector<2x128xf32>
    %429 = arith.divf %427, %428 : vector<2x128xf32>
    %430 = vector.extract_strided_slice %407 {offsets = [0, 256], sizes = [2, 128], strides = [1, 1]} : vector<2x384xf32> to vector<2x128xf32>
    %431 = vector.extract_strided_slice %413 {offsets = [0, 256], sizes = [2, 128], strides = [1, 1]} : vector<2x384xf32> to vector<2x128xf32>
    %432 = arith.mulf %421, %431 : vector<2x128xf32>
    %433 = arith.addf %430, %432 : vector<2x128xf32>
    %434 = math.tanh %433 : vector<2x128xf32>
    %cst_152 = arith.constant 1.000000e+00 : f32
    %435 = vector.broadcast %cst_152 : f32 to vector<2x128xf32>
    %436 = arith.subf %435, %429 : vector<2x128xf32>
    %437 = arith.mulf %436, %434 : vector<2x128xf32>
    %438 = arith.mulf %429, %373 : vector<2x128xf32>
    %439 = arith.addf %437, %438 : vector<2x128xf32>
    %440 = vector.extract_strided_slice %206 {offsets = [0, 0], sizes = [2, 384], strides = [1, 1]} : vector<8x384xf32> to vector<2x384xf32>
    %441 = arith.truncf %406 : vector<2x128xf32> to vector<2x128xbf16>
    %c0_153 = arith.constant 0 : index
    %c0_154 = arith.constant 0 : index
    %442 = vector.load %arg31[%c0_153, %c0_154] : memref<128x384xbf16, #tpu.memory_space<vmem>>, vector<128x384xbf16>
    %cst_155 = arith.constant dense<0.000000e+00> : vector<2x384xf32>
    %443 = tpu.matmul %441, %442, %cst_155 {dimension_numbers = #tpu.dot_dimension_numbers<[1], [0], [0], [1], [0, 0, 1, 1], [], []>} : vector<2x128xbf16>, vector<128x384xbf16>, vector<2x384xf32> -> vector<2x384xf32>
    %c0_156 = arith.constant 0 : index
    %c0_157 = arith.constant 0 : index
    %444 = vector.load %arg32[%c0_156, %c0_157] : memref<1x384xf32, #tpu.memory_space<vmem>>, vector<1x384xf32>
    %445 = vector.broadcast %444 : vector<1x384xf32> to vector<2x384xf32>
    %446 = arith.addf %443, %445 : vector<2x384xf32>
    %447 = vector.extract_strided_slice %440 {offsets = [0, 0], sizes = [2, 128], strides = [1, 1]} : vector<2x384xf32> to vector<2x128xf32>
    %448 = vector.extract_strided_slice %446 {offsets = [0, 0], sizes = [2, 128], strides = [1, 1]} : vector<2x384xf32> to vector<2x128xf32>
    %449 = arith.addf %447, %448 : vector<2x128xf32>
    %450 = arith.negf %449 : vector<2x128xf32>
    %451 = math.exp %450 : vector<2x128xf32>
    %cst_158 = arith.constant 1.000000e+00 : f32
    %452 = vector.broadcast %cst_158 : f32 to vector<2x128xf32>
    %453 = arith.addf %452, %451 : vector<2x128xf32>
    %454 = arith.divf %452, %453 : vector<2x128xf32>
    %455 = vector.extract_strided_slice %440 {offsets = [0, 128], sizes = [2, 128], strides = [1, 1]} : vector<2x384xf32> to vector<2x128xf32>
    %456 = vector.extract_strided_slice %446 {offsets = [0, 128], sizes = [2, 128], strides = [1, 1]} : vector<2x384xf32> to vector<2x128xf32>
    %457 = arith.addf %455, %456 : vector<2x128xf32>
    %458 = arith.negf %457 : vector<2x128xf32>
    %459 = math.exp %458 : vector<2x128xf32>
    %cst_159 = arith.constant 1.000000e+00 : f32
    %460 = vector.broadcast %cst_159 : f32 to vector<2x128xf32>
    %461 = arith.addf %460, %459 : vector<2x128xf32>
    %462 = arith.divf %460, %461 : vector<2x128xf32>
    %463 = vector.extract_strided_slice %440 {offsets = [0, 256], sizes = [2, 128], strides = [1, 1]} : vector<2x384xf32> to vector<2x128xf32>
    %464 = vector.extract_strided_slice %446 {offsets = [0, 256], sizes = [2, 128], strides = [1, 1]} : vector<2x384xf32> to vector<2x128xf32>
    %465 = arith.mulf %454, %464 : vector<2x128xf32>
    %466 = arith.addf %463, %465 : vector<2x128xf32>
    %467 = math.tanh %466 : vector<2x128xf32>
    %cst_160 = arith.constant 1.000000e+00 : f32
    %468 = vector.broadcast %cst_160 : f32 to vector<2x128xf32>
    %469 = arith.subf %468, %462 : vector<2x128xf32>
    %470 = arith.mulf %469, %467 : vector<2x128xf32>
    %471 = arith.mulf %462, %406 : vector<2x128xf32>
    %472 = arith.addf %470, %471 : vector<2x128xf32>
    %473 = tpu.concatenate %241, %472 in 1 : vector<2x128xf32>, vector<2x128xf32> -> vector<2x256xf32>
    %474 = tpu.concatenate %307, %406 in 1 : vector<2x128xf32>, vector<2x128xf32> -> vector<2x256xf32>
    %475 = tpu.concatenate %373, %340 in 1 : vector<2x128xf32>, vector<2x128xf32> -> vector<2x256xf32>
    %476 = tpu.concatenate %439, %274 in 1 : vector<2x128xf32>, vector<2x128xf32> -> vector<2x256xf32>
    %477 = tpu.concatenate %473, %474, %475, %476 in 0 : vector<2x256xf32>, vector<2x256xf32>, vector<2x256xf32>, vector<2x256xf32> -> vector<8x256xf32>
    %478 = arith.truncf %477 : vector<8x256xf32> to vector<8x256xbf16>
    %c0_161 = arith.constant 0 : index
    %c0_162 = arith.constant 0 : index
    %479 = vector.load %arg33[%c0_161, %c0_162] : memref<256x256xbf16, #tpu.memory_space<vmem>>, vector<256x256xbf16>
    %cst_163 = arith.constant dense<0.000000e+00> : vector<8x256xf32>
    %480 = tpu.matmul %478, %479, %cst_163 {dimension_numbers = #tpu.dot_dimension_numbers<[1], [0], [0], [1], [0, 0, 1, 1], [], []>} : vector<8x256xbf16>, vector<256x256xbf16>, vector<8x256xf32> -> vector<8x256xf32>
    %c0_164 = arith.constant 0 : index
    %c0_165 = arith.constant 0 : index
    %481 = vector.load %arg34[%c0_164, %c0_165] : memref<1x256xf32, #tpu.memory_space<vmem>>, vector<1x256xf32>
    %482 = vector.broadcast %481 : vector<1x256xf32> to vector<8x256xf32>
    %483 = arith.addf %480, %482 : vector<8x256xf32>
    %484 = math.tanh %483 : vector<8x256xf32>
    %485 = arith.truncf %484 : vector<8x256xf32> to vector<8x256xbf16>
    %c0_166 = arith.constant 0 : index
    %c0_167 = arith.constant 0 : index
    %486 = vector.load %arg35[%c0_166, %c0_167] : memref<256x1xbf16, #tpu.memory_space<vmem>>, vector<256x1xbf16>
    %cst_168 = arith.constant dense<0.000000e+00> : vector<8x1xf32>
    %487 = tpu.matmul %485, %486, %cst_168 {dimension_numbers = #tpu.dot_dimension_numbers<[1], [0], [0], [1], [0, 0, 1, 1], [], []>} : vector<8x256xbf16>, vector<256x1xbf16>, vector<8x1xf32> -> vector<8x1xf32>
    %c0_169 = arith.constant 0 : index
    %c0_170 = arith.constant 0 : index
    %488 = vector.load %arg4[%c0_169, %c0_170] : memref<8x1xf32, #tpu.memory_space<vmem>>, vector<8x1xf32>
    %cst_171 = arith.constant 0.000000e+00 : f32
    %489 = vector.broadcast %cst_171 : f32 to vector<8x1xf32>
    %490 = arith.cmpf ogt, %488, %489 : vector<8x1xf32>
    %cst_172 = arith.constant -1.000000e+09 : f32
    %491 = vector.broadcast %cst_172 : f32 to vector<8x1xf32>
    %492 = arith.select %490, %487, %491 : vector<8x1xi1>, vector<8x1xf32>
    %cst_173 = arith.constant 0.000000e+00 : f32
    %493 = vector.broadcast %cst_173 : f32 to vector<8x1xf32>
    %494 = arith.cmpf ogt, %488, %493 : vector<8x1xf32>
    %cst_174 = arith.constant dense<0xFF800000> : vector<1xf32>
    %495 = vector.multi_reduction <maximumf>, %492, %cst_174 [0] : vector<8x1xf32> to vector<1xf32>
    %496 = vector.shape_cast %495 : vector<1xf32> to vector<1x1xf32>
    %497 = vector.broadcast %496 : vector<1x1xf32> to vector<8x1xf32>
    %498 = arith.subf %492, %497 : vector<8x1xf32>
    %499 = math.exp %498 : vector<8x1xf32>
    %cst_175 = arith.constant 0.000000e+00 : f32
    %500 = vector.broadcast %cst_175 : f32 to vector<8x1xf32>
    %501 = arith.select %494, %499, %500 : vector<8x1xi1>, vector<8x1xf32>
    %c0_176 = arith.constant 0 : index
    %c0_177 = arith.constant 0 : index
    %502 = vector.load %arg5[%c0_176, %c0_177] : memref<2x8xf32, #tpu.memory_space<vmem>>, vector<2x8xf32>
    %cst_178 = arith.constant dense<0.000000e+00> : vector<2x1xf32>
    %503 = tpu.matmul %502, %501, %cst_178 {dimension_numbers = #tpu.dot_dimension_numbers<[1], [0], [0], [1], [0, 0, 1, 1], [], []>} : vector<2x8xf32>, vector<8x1xf32>, vector<2x1xf32> -> vector<2x1xf32>
    %c0_179 = arith.constant 0 : index
    %c0_180 = arith.constant 0 : index
    %504 = vector.load %arg6[%c0_179, %c0_180] : memref<8x2xf32, #tpu.memory_space<vmem>>, vector<8x2xf32>
    %cst_181 = arith.constant dense<0.000000e+00> : vector<8x1xf32>
    %505 = tpu.matmul %504, %503, %cst_181 {dimension_numbers = #tpu.dot_dimension_numbers<[1], [0], [0], [1], [0, 0, 1, 1], [], []>} : vector<8x2xf32>, vector<2x1xf32>, vector<8x1xf32> -> vector<8x1xf32>
    %506 = arith.divf %501, %505 : vector<8x1xf32>
    %c0_182 = arith.constant 0 : index
    %c0_183 = arith.constant 0 : index
    %507 = vector.load %arg5[%c0_182, %c0_183] : memref<2x8xf32, #tpu.memory_space<vmem>>, vector<2x8xf32>
    %508 = vector.broadcast %506 : vector<8x1xf32> to vector<8x256xf32>
    %509 = arith.mulf %508, %477 : vector<8x256xf32>
    %cst_184 = arith.constant dense<0.000000e+00> : vector<2x256xf32>
    %510 = tpu.matmul %507, %509, %cst_184 {dimension_numbers = #tpu.dot_dimension_numbers<[1], [0], [0], [1], [0, 0, 1, 1], [], []>} : vector<2x8xf32>, vector<8x256xf32>, vector<2x256xf32> -> vector<2x256xf32>
    %511 = arith.truncf %510 : vector<2x256xf32> to vector<2x256xbf16>
    %c0_185 = arith.constant 0 : index
    %c0_186 = arith.constant 0 : index
    %512 = vector.load %arg36[%c0_185, %c0_186] : memref<256x128xbf16, #tpu.memory_space<vmem>>, vector<256x128xbf16>
    %cst_187 = arith.constant dense<0.000000e+00> : vector<2x128xf32>
    %513 = tpu.matmul %511, %512, %cst_187 {dimension_numbers = #tpu.dot_dimension_numbers<[1], [0], [0], [1], [0, 0, 1, 1], [], []>} : vector<2x256xbf16>, vector<256x128xbf16>, vector<2x128xf32> -> vector<2x128xf32>
    %c0_188 = arith.constant 0 : index
    %c0_189 = arith.constant 0 : index
    %514 = vector.load %arg37[%c0_188, %c0_189] : memref<1x128xf32, #tpu.memory_space<vmem>>, vector<1x128xf32>
    %515 = vector.broadcast %514 : vector<1x128xf32> to vector<2x128xf32>
    %516 = arith.addf %513, %515 : vector<2x128xf32>
    %c0_190 = arith.constant 0 : index
    %c0_191 = arith.constant 0 : index
    %517 = vector.load %arg38[%c0_190, %c0_191] : memref<2x128xf32, #tpu.memory_space<vmem>>, vector<2x128xf32>
    tpu.vector_store %arg38[%c0_190, %c0_191], %516 {strides = array<i32>} : memref<2x128xf32, #tpu.memory_space<vmem>>, vector<2x128xf32>,
    return
  }
}

</mosaic_0001>

<llo_original>
// kernel: bert_hier_att_net.1
$region0: #{bert_hier_att_net.1}
  #allocation0 [shape = 'u32[]', space=smem, size = 0x4, offset = 0x4, fixed_abs, tag = 'smem constant byte address 0x4 - core index']
  #allocation1 [shape = 'u32[72,128]{1,0:T(1,128)}', space=vmem, size = 0x9000, scoped, tag = 'internal scratch']
  %s0 = inlined_call_operand.smem [shape: u32[39], index: -1, kind: input, shape index: {}]
  %s1 = sld [smem:[%s0]]
  %s2 = scalar_lea.smem %s0, 1
  %s3 = sld [smem:[%s2]]
  %s4 = scalar_lea.smem %s0, 2
  %s5 = sld [smem:[%s4]]
  %s6 = scalar_lea.smem %s0, 3
  %s7 = sld [smem:[%s6]]
  %s8 = scalar_lea.smem %s0, 4
  %s9 = sld [smem:[%s8]]
  %s10 = scalar_lea.smem %s0, 5
  %s11 = sld [smem:[%s10]]
  %s12 = scalar_lea.smem %s0, 6
  %s13 = sld [smem:[%s12]]
  %s14 = scalar_lea.smem %s0, 7
  %s15 = sld [smem:[%s14]]
  %s16 = scalar_lea.smem %s0, 8
  %s17 = sld [smem:[%s16]]
  %s18 = scalar_lea.smem %s0, 9
  %s19 = sld [smem:[%s18]]
  %s20 = scalar_lea.smem %s0, 10
  %s21 = sld [smem:[%s20]]
  %s22 = scalar_lea.smem %s0, 11
  %s23 = sld [smem:[%s22]]
  %s24 = scalar_lea.smem %s0, 12
  %s25 = sld [smem:[%s24]]
  %s26 = scalar_lea.smem %s0, 13
  %s27 = sld [smem:[%s26]]
  %s28 = scalar_lea.smem %s0, 14
  %s29 = sld [smem:[%s28]]
  %s30 = scalar_lea.smem %s0, 15
  %s31 = sld [smem:[%s30]]
  %s32 = scalar_lea.smem %s0, 16
  %s33 = sld [smem:[%s32]]
  %s34 = scalar_lea.smem %s0, 17
  %s35 = sld [smem:[%s34]]
  %s36 = scalar_lea.smem %s0, 18
  %s37 = sld [smem:[%s36]]
  %s38 = scalar_lea.smem %s0, 19
  %s39 = sld [smem:[%s38]]
  %s40 = scalar_lea.smem %s0, 20
  %s41 = sld [smem:[%s40]]
  %s42 = scalar_lea.smem %s0, 21
  %s43 = sld [smem:[%s42]]
  %s44 = scalar_lea.smem %s0, 22
  %s45 = sld [smem:[%s44]]
  %s46 = scalar_lea.smem %s0, 23
  %s47 = sld [smem:[%s46]]
  %s48 = scalar_lea.smem %s0, 24
  %s49 = sld [smem:[%s48]]
  %s50 = scalar_lea.smem %s0, 25
  %s51 = sld [smem:[%s50]]
  %s52 = scalar_lea.smem %s0, 26
  %s53 = sld [smem:[%s52]]
  %s54 = scalar_lea.smem %s0, 27
  %s55 = sld [smem:[%s54]]
  %s56 = scalar_lea.smem %s0, 28
  %s57 = sld [smem:[%s56]]
  %s58 = scalar_lea.smem %s0, 29
  %s59 = sld [smem:[%s58]]
  %s60 = scalar_lea.smem %s0, 30
  %s61 = sld [smem:[%s60]]
  %s62 = scalar_lea.smem %s0, 31
  %s63 = sld [smem:[%s62]]
  %s64 = scalar_lea.smem %s0, 32
  %s65 = sld [smem:[%s64]]
  %s66 = scalar_lea.smem %s0, 33
  %s67 = sld [smem:[%s66]]
  %s68 = scalar_lea.smem %s0, 34
  %s69 = sld [smem:[%s68]]
  %s70 = scalar_lea.smem %s0, 35
  %s71 = sld [smem:[%s70]]
  %s72 = scalar_lea.smem %s0, 36
  %s73 = sld [smem:[%s72]]
  %s74 = scalar_lea.smem %s0, 37
  %s75 = sld [smem:[%s74]]
  %s76 = scalar_lea.smem %s0, 38
  %s77 = sld [smem:[%s76]]
  %s78 = sld [smem:[#allocation0]]
  $region198: #{bert_hier_att_net.1} parent=0
    _
  %s80 = ssub.s32 1, %s78
  %s81 = scalar_select 0, %s80, %s78
  $region1: #{bert_hier_att_net.1} parent=0
    #allocation2 [shape = 'u8[98304]{0}', space=vmem, size = 0x18000, scoped, tag = 'input window, operand 11, single buffered']
    #allocation3 [shape = 's32[1]{0}', space=sflag, size = 0x4, scoped, tag = 'scoped memory for bert_hier_att_net.1']
    #allocation4 [shape = 's32[1]{0}', space=sflag, size = 0x4, scoped, tag = 'scoped memory for bert_hier_att_net.1']
    #allocation5 [shape = 'u8[32768]{0}', space=vmem, size = 0x8000, scoped, tag = 'input window, operand 13, single buffered']
    #allocation6 [shape = 's32[1]{0}', space=sflag, size = 0x4, scoped, tag = 'scoped memory for bert_hier_att_net.1']
    #allocation7 [shape = 'u8[65536]{0}', space=vmem, size = 0x10000, scoped, tag = 'input window, operand 19, single buffered']
    #allocation8 [shape = 'u8[32768]{0}', space=vmem, size = 0x8000, scoped, tag = 'input window, operand 23, single buffered']
    #allocation9 [shape = 's32[1]{0}', space=sflag, size = 0x4, scoped, tag = 'scoped memory for bert_hier_att_net.1']
    #allocation10 [shape = 'u8[32768]{0}', space=vmem, size = 0x8000, scoped, tag = 'input window, operand 25, single buffered']
    #allocation11 [shape = 'u8[196608]{0}', space=vmem, size = 0x30000, scoped, tag = 'input window, operand 27, single buffered']
    #allocation12 [shape = 's32[1]{0}', space=sflag, size = 0x4, scoped, tag = 'scoped memory for bert_hier_att_net.1']
    #allocation13 [shape = 'u8[98304]{0}', space=vmem, size = 0x18000, scoped, tag = 'input window, operand 29, single buffered']
    #allocation14 [shape = 'u8[98304]{0}', space=vmem, size = 0x18000, scoped, tag = 'input window, operand 31, single buffered']
    #allocation15 [shape = 's32[1]{0}', space=sflag, size = 0x4, scoped, tag = 'scoped memory for bert_hier_att_net.1']
    #allocation16 [shape = 'u8[65536]{0}', space=vmem, size = 0x10000, scoped, tag = 'input window, operand 36, single buffered']
    #allocation17 [shape = 'u8[1024]{0}', space=vmem, size = 0x400, scoped, tag = 'output window, operand 0, single buffered']
    %82 = vsyncpa [#allocation3], 0
    %83 = vsyncpa [#allocation6], 0
    %84 = vsyncpa [#allocation9], 0
    %85 = vsyncpa [#allocation12], 0
    %86 = vsyncpa [#allocation15], 0
    %87 = vsyncpa [#allocation4], 0
    // Predicated region
    $region2: #{bert_hier_att_net.1} parent=1 // pred_check
      _
    $region3: #{bert_hier_att_net.1} parent=1 // pred_check_branch
      %89 = sbr.rel (0) target = $region5
    $region4: #{bert_hier_att_net.1} parent=1 // pred_region
      _
    $region5: #{bert_hier_att_net.1} parent=1 // pred_fallthru
      _
    // Predicated region
    $region6: #{bert_hier_att_net.1} parent=1 // pred_check
      _
    $region7: #{bert_hier_att_net.1} parent=1 // pred_check_branch
      %91 = sbr.rel (0) target = $region9
    $region8: #{bert_hier_att_net.1} parent=1 // pred_region
      _
    $region9: #{bert_hier_att_net.1} parent=1 // pred_fallthru
      _
    // Predicated region
    $region10: #{bert_hier_att_net.1} parent=1 // pred_check
      _
    $region11: #{bert_hier_att_net.1} parent=1 // pred_check_branch
      %93 = sbr.rel (0) target = $region13
    $region12: #{bert_hier_att_net.1} parent=1 // pred_region
      _
    $region13: #{bert_hier_att_net.1} parent=1 // pred_fallthru
      _
    // Predicated region
    $region14: #{bert_hier_att_net.1} parent=1 // pred_check
      _
    $region15: #{bert_hier_att_net.1} parent=1 // pred_check_branch
      %95 = sbr.rel (0) target = $region17
    $region16: #{bert_hier_att_net.1} parent=1 // pred_region
      _
    $region17: #{bert_hier_att_net.1} parent=1 // pred_fallthru
      _
    // Predicated region
    $region18: #{bert_hier_att_net.1} parent=1 // pred_check
      _
    $region19: #{bert_hier_att_net.1} parent=1 // pred_check_branch
      %97 = sbr.rel (0) target = $region21
    $region20: #{bert_hier_att_net.1} parent=1 // pred_region
      _
    $region21: #{bert_hier_att_net.1} parent=1 // pred_fallthru
      _
    // Predicated region
    $region22: #{bert_hier_att_net.1} parent=1 // pred_check
      _
    $region23: #{bert_hier_att_net.1} parent=1 // pred_check_branch
      %99 = sbr.rel (0) target = $region25
    $region24: #{bert_hier_att_net.1} parent=1 // pred_region
      _
    $region25: #{bert_hier_att_net.1} parent=1 // pred_fallthru
      _
    // Predicated region
    $region26: #{bert_hier_att_net.1} parent=1 // pred_check
      _
    $region27: #{bert_hier_att_net.1} parent=1 // pred_check_branch
      %101 = sbr.rel (0) target = $region29
    $region28: #{bert_hier_att_net.1} parent=1 // pred_region
      _
    $region29: #{bert_hier_att_net.1} parent=1 // pred_fallthru
      _
    // Predicated region
    $region30: #{bert_hier_att_net.1} parent=1 // pred_check
      _
    $region31: #{bert_hier_att_net.1} parent=1 // pred_check_branch
      %103 = sbr.rel (0) target = $region33
    $region32: #{bert_hier_att_net.1} parent=1 // pred_region
      _
    $region33: #{bert_hier_att_net.1} parent=1 // pred_fallthru
      _
    // Predicated region
    $region34: #{bert_hier_att_net.1} parent=1 // pred_check
      _
    $region35: #{bert_hier_att_net.1} parent=1 // pred_check_branch
      %105 = sbr.rel (0) target = $region37
    $region36: #{bert_hier_att_net.1} parent=1 // pred_region
      _
    $region37: #{bert_hier_att_net.1} parent=1 // pred_fallthru
      _
    // Predicated region
    $region38: #{bert_hier_att_net.1} parent=1 // pred_check
      _
    $region39: #{bert_hier_att_net.1} parent=1 // pred_check_branch
      %107 = sbr.rel (0) target = $region41
    $region40: #{bert_hier_att_net.1} parent=1 // pred_region
      _
    $region41: #{bert_hier_att_net.1} parent=1 // pred_fallthru
      _
    // Predicated region
    $region42: #{bert_hier_att_net.1} parent=1 // pred_check
      _
    $region43: #{bert_hier_att_net.1} parent=1 // pred_check_branch
      %109 = sbr.rel (0) target = $region45
    $region44: #{bert_hier_att_net.1} parent=1 // pred_region
      _
    $region45: #{bert_hier_att_net.1} parent=1 // pred_fallthru
      _
    // Predicated region
    $region46: #{bert_hier_att_net.1} parent=1 // pred_check
      _
    $region47: #{bert_hier_att_net.1} parent=1 // pred_check_branch
      %111 = sbr.rel (0) target = $region49
    $region48: #{bert_hier_att_net.1} parent=1 // pred_region
      %113 = vsyncadd [#allocation3], 0
      %s114 = sshll.u32 %s23, 4
      %s115 = int_to_ptr.hbm [resolvable:$true] %s114
      %s116 = sshll.u32 [#allocation2], 4
      %s117 = int_to_ptr.vmem [resolvable:$true] %s116
      %122 = dma.hbm_to_vmem [thread:$0]  %s115, 3072, %s117, [#allocation3], 192, 192, 12
    $region49: #{bert_hier_att_net.1} parent=1 // pred_fallthru
      _
    // Predicated region
    $region50: #{bert_hier_att_net.1} parent=1 // pred_check
      _
    $region51: #{bert_hier_att_net.1} parent=1 // pred_check_branch
      %124 = sbr.rel (0) target = $region53
    $region52: #{bert_hier_att_net.1} parent=1 // pred_region
      _
    $region53: #{bert_hier_att_net.1} parent=1 // pred_fallthru
      _
    // Predicated region
    $region54: #{bert_hier_att_net.1} parent=1 // pred_check
      _
    $region55: #{bert_hier_att_net.1} parent=1 // pred_check_branch
      %126 = sbr.rel (0) target = $region57
    $region56: #{bert_hier_att_net.1} parent=1 // pred_region
      %128 = vsyncadd [#allocation6], 0
      %s129 = sshll.u32 %s27, 4
      %s130 = int_to_ptr.hbm [resolvable:$true] %s129
      %s131 = sshll.u32 [#allocation5], 4
      %s132 = int_to_ptr.vmem [resolvable:$true] %s131
      %137 = dma.hbm_to_vmem [thread:$0]  %s130, 1024, %s132, [#allocation6], 64, 64, 4
    $region57: #{bert_hier_att_net.1} parent=1 // pred_fallthru
      _
    // Predicated region
    $region58: #{bert_hier_att_net.1} parent=1 // pred_check
      _
    $region59: #{bert_hier_att_net.1} parent=1 // pred_check_branch
      %139 = sbr.rel (0) target = $region61
    $region60: #{bert_hier_att_net.1} parent=1 // pred_region
      _
    $region61: #{bert_hier_att_net.1} parent=1 // pred_fallthru
      _
    // Predicated region
    $region62: #{bert_hier_att_net.1} parent=1 // pred_check
      _
    $region63: #{bert_hier_att_net.1} parent=1 // pred_check_branch
      %141 = sbr.rel (0) target = $region65
    $region64: #{bert_hier_att_net.1} parent=1 // pred_region
      _
    $region65: #{bert_hier_att_net.1} parent=1 // pred_fallthru
      _
    // Predicated region
    $region66: #{bert_hier_att_net.1} parent=1 // pred_check
      _
    $region67: #{bert_hier_att_net.1} parent=1 // pred_check_branch
      %143 = sbr.rel (0) target = $region69
    $region68: #{bert_hier_att_net.1} parent=1 // pred_region
      _
    $region69: #{bert_hier_att_net.1} parent=1 // pred_fallthru
      _
    // Predicated region
    $region70: #{bert_hier_att_net.1} parent=1 // pred_check
      _
    $region71: #{bert_hier_att_net.1} parent=1 // pred_check_branch
      %145 = sbr.rel (0) target = $region73
    $region72: #{bert_hier_att_net.1} parent=1 // pred_region
      _
    $region73: #{bert_hier_att_net.1} parent=1 // pred_fallthru
      _
    // Predicated region
    $region74: #{bert_hier_att_net.1} parent=1 // pred_check
      _
    $region75: #{bert_hier_att_net.1} parent=1 // pred_check_branch
      %147 = sbr.rel (0) target = $region77
    $region76: #{bert_hier_att_net.1} parent=1 // pred_region
      _
    $region77: #{bert_hier_att_net.1} parent=1 // pred_fallthru
      _
    // Predicated region
    $region78: #{bert_hier_att_net.1} parent=1 // pred_check
      _
    $region79: #{bert_hier_att_net.1} parent=1 // pred_check_branch
      %149 = sbr.rel (0) target = $region81
    $region80: #{bert_hier_att_net.1} parent=1 // pred_region
      %151 = vsyncadd [#allocation6], 0
      %s152 = sshll.u32 %s39, 4
      %s153 = int_to_ptr.hbm [resolvable:$true] %s152
      %s154 = sshll.u32 [#allocation7], 4
      %s155 = int_to_ptr.vmem [resolvable:$true] %s154
      %160 = dma.hbm_to_vmem [thread:$0]  %s153, 2048, %s155, [#allocation6], 64, 64, 4
    $region81: #{bert_hier_att_net.1} parent=1 // pred_fallthru
      _
    // Predicated region
    $region82: #{bert_hier_att_net.1} parent=1 // pred_check
      _
    $region83: #{bert_hier_att_net.1} parent=1 // pred_check_branch
      %162 = sbr.rel (0) target = $region85
    $region84: #{bert_hier_att_net.1} parent=1 // pred_region
      _
    $region85: #{bert_hier_att_net.1} parent=1 // pred_fallthru
      _
    // Predicated region
    $region86: #{bert_hier_att_net.1} parent=1 // pred_check
      _
    $region87: #{bert_hier_att_net.1} parent=1 // pred_check_branch
      %164 = sbr.rel (0) target = $region89
    $region88: #{bert_hier_att_net.1} parent=1 // pred_region
      _
    $region89: #{bert_hier_att_net.1} parent=1 // pred_fallthru
      _
    // Predicated region
    $region90: #{bert_hier_att_net.1} parent=1 // pred_check
      _
    $region91: #{bert_hier_att_net.1} parent=1 // pred_check_branch
      %166 = sbr.rel (0) target = $region93
    $region92: #{bert_hier_att_net.1} parent=1 // pred_region
      _
    $region93: #{bert_hier_att_net.1} parent=1 // pred_fallthru
      _
    // Predicated region
    $region94: #{bert_hier_att_net.1} parent=1 // pred_check
      _
    $region95: #{bert_hier_att_net.1} parent=1 // pred_check_branch
      %168 = sbr.rel (0) target = $region97
    $region96: #{bert_hier_att_net.1} parent=1 // pred_region
      %170 = vsyncadd [#allocation9], 0
      %s171 = sshll.u32 %s47, 4
      %s172 = int_to_ptr.hbm [resolvable:$true] %s171
      %s173 = sshll.u32 [#allocation8], 4
      %s174 = int_to_ptr.vmem [resolvable:$true] %s173
      %179 = dma.hbm_to_vmem [thread:$0]  %s172, 1024, %s174, [#allocation9], 64, 64, 4
    $region97: #{bert_hier_att_net.1} parent=1 // pred_fallthru
      _
    // Predicated region
    $region98: #{bert_hier_att_net.1} parent=1 // pred_check
      _
    $region99: #{bert_hier_att_net.1} parent=1 // pred_check_branch
      %181 = sbr.rel (0) target = $region101
    $region100: #{bert_hier_att_net.1} parent=1 // pred_region
      _
    $region101: #{bert_hier_att_net.1} parent=1 // pred_fallthru
      _
    // Predicated region
    $region102: #{bert_hier_att_net.1} parent=1 // pred_check
      _
    $region103: #{bert_hier_att_net.1} parent=1 // pred_check_branch
      %183 = sbr.rel (0) target = $region105
    $region104: #{bert_hier_att_net.1} parent=1 // pred_region
      %185 = vsyncadd [#allocation9], 0
      %s186 = sshll.u32 %s51, 4
      %s187 = int_to_ptr.hbm [resolvable:$true] %s186
      %s188 = sshll.u32 [#allocation10], 4
      %s189 = int_to_ptr.vmem [resolvable:$true] %s188
      %194 = dma.hbm_to_vmem [thread:$0]  %s187, 1024, %s189, [#allocation9], 64, 64, 4
    $region105: #{bert_hier_att_net.1} parent=1 // pred_fallthru
      _
    // Predicated region
    $region106: #{bert_hier_att_net.1} parent=1 // pred_check
      _
    $region107: #{bert_hier_att_net.1} parent=1 // pred_check_branch
      %196 = sbr.rel (0) target = $region109
    $region108: #{bert_hier_att_net.1} parent=1 // pred_region
      _
    $region109: #{bert_hier_att_net.1} parent=1 // pred_fallthru
      _
    // Predicated region
    $region110: #{bert_hier_att_net.1} parent=1 // pred_check
      _
    $region111: #{bert_hier_att_net.1} parent=1 // pred_check_branch
      %198 = sbr.rel (0) target = $region113
    $region112: #{bert_hier_att_net.1} parent=1 // pred_region
      %200 = vsyncadd [#allocation12], 0
      %s201 = sshll.u32 %s55, 4
      %s202 = int_to_ptr.hbm [resolvable:$true] %s201
      %s203 = sshll.u32 [#allocation11], 4
      %s204 = int_to_ptr.vmem [resolvable:$true] %s203
      %209 = dma.hbm_to_vmem [thread:$0]  %s202, 6144, %s204, [#allocation12], 384, 384, 24
    $region113: #{bert_hier_att_net.1} parent=1 // pred_fallthru
      _
    // Predicated region
    $region114: #{bert_hier_att_net.1} parent=1 // pred_check
      _
    $region115: #{bert_hier_att_net.1} parent=1 // pred_check_branch
      %211 = sbr.rel (0) target = $region117
    $region116: #{bert_hier_att_net.1} parent=1 // pred_region
      _
    $region117: #{bert_hier_att_net.1} parent=1 // pred_fallthru
      _
    // Predicated region
    $region118: #{bert_hier_att_net.1} parent=1 // pred_check
      _
    $region119: #{bert_hier_att_net.1} parent=1 // pred_check_branch
      %213 = sbr.rel (0) target = $region121
    $region120: #{bert_hier_att_net.1} parent=1 // pred_region
      %215 = vsyncadd [#allocation12], 0
      %s216 = sshll.u32 %s59, 4
      %s217 = int_to_ptr.hbm [resolvable:$true] %s216
      %s218 = sshll.u32 [#allocation13], 4
      %s219 = int_to_ptr.vmem [resolvable:$true] %s218
      %224 = dma.hbm_to_vmem [thread:$0]  %s217, 3072, %s219, [#allocation12], 192, 192, 12
    $region121: #{bert_hier_att_net.1} parent=1 // pred_fallthru
      _
    // Predicated region
    $region122: #{bert_hier_att_net.1} parent=1 // pred_check
      _
    $region123: #{bert_hier_att_net.1} parent=1 // pred_check_branch
      %226 = sbr.rel (0) target = $region125
    $region124: #{bert_hier_att_net.1} parent=1 // pred_region
      _
    $region125: #{bert_hier_att_net.1} parent=1 // pred_fallthru
      _
    // Predicated region
    $region126: #{bert_hier_att_net.1} parent=1 // pred_check
      _
    $region127: #{bert_hier_att_net.1} parent=1 // pred_check_branch
      %228 = sbr.rel (0) target = $region129
    $region128: #{bert_hier_att_net.1} parent=1 // pred_region
      %230 = vsyncadd [#allocation15], 0
      %s231 = sshll.u32 %s63, 4
      %s232 = int_to_ptr.hbm [resolvable:$true] %s231
      %s233 = sshll.u32 [#allocation14], 4
      %s234 = int_to_ptr.vmem [resolvable:$true] %s233
      %239 = dma.hbm_to_vmem [thread:$0]  %s232, 3072, %s234, [#allocation15], 192, 192, 12
    $region129: #{bert_hier_att_net.1} parent=1 // pred_fallthru
      _
    // Predicated region
    $region130: #{bert_hier_att_net.1} parent=1 // pred_check
      _
    $region131: #{bert_hier_att_net.1} parent=1 // pred_check_branch
      %241 = sbr.rel (0) target = $region133
    $region132: #{bert_hier_att_net.1} parent=1 // pred_region
      _
    $region133: #{bert_hier_att_net.1} parent=1 // pred_fallthru
      _
    // Predicated region
    $region134: #{bert_hier_att_net.1} parent=1 // pred_check
      _
    $region135: #{bert_hier_att_net.1} parent=1 // pred_check_branch
      %243 = sbr.rel (0) target = $region137
    $region136: #{bert_hier_att_net.1} parent=1 // pred_region
      _
    $region137: #{bert_hier_att_net.1} parent=1 // pred_fallthru
      _
    // Predicated region
    $region138: #{bert_hier_att_net.1} parent=1 // pred_check
      _
    $region139: #{bert_hier_att_net.1} parent=1 // pred_check_branch
      %245 = sbr.rel (0) target = $region141
    $region140: #{bert_hier_att_net.1} parent=1 // pred_region
      _
    $region141: #{bert_hier_att_net.1} parent=1 // pred_fallthru
      _
    // Predicated region
    $region142: #{bert_hier_att_net.1} parent=1 // pred_check
      _
    $region143: #{bert_hier_att_net.1} parent=1 // pred_check_branch
      %247 = sbr.rel (0) target = $region145
    $region144: #{bert_hier_att_net.1} parent=1 // pred_region
      _
    $region145: #{bert_hier_att_net.1} parent=1 // pred_fallthru
      _
    // Predicated region
    $region146: #{bert_hier_att_net.1} parent=1 // pred_check
      _
    $region147: #{bert_hier_att_net.1} parent=1 // pred_check_branch
      %249 = sbr.rel (0) target = $region149
    $region148: #{bert_hier_att_net.1} parent=1 // pred_region
      %251 = vsyncadd [#allocation15], 0
      %s252 = sshll.u32 %s73, 4
      %s253 = int_to_ptr.hbm [resolvable:$true] %s252
      %s254 = sshll.u32 [#allocation16], 4
      %s255 = int_to_ptr.vmem [resolvable:$true] %s254
      %260 = dma.hbm_to_vmem [thread:$0]  %s253, 2048, %s255, [#allocation15], 64, 64, 4
    $region149: #{bert_hier_att_net.1} parent=1 // pred_fallthru
      _
    // Predicated region
    $region150: #{bert_hier_att_net.1} parent=1 // pred_check
      _
    $region151: #{bert_hier_att_net.1} parent=1 // pred_check_branch
      %262 = sbr.rel (0) target = $region153
    $region152: #{bert_hier_att_net.1} parent=1 // pred_region
      _
    $region153: #{bert_hier_att_net.1} parent=1 // pred_fallthru
      _
    // Predicated region
    $region154: #{bert_hier_att_net.1} parent=1 // pred_check
      _
    $region155: #{bert_hier_att_net.1} parent=1 // pred_check_branch
      %264 = sbr.rel (0) target = $region157
    $region156: #{bert_hier_att_net.1} parent=1 // pred_region
      %266 = dma.done [#allocation3], 3072
    $region157: #{bert_hier_att_net.1} parent=1 // pred_fallthru
      _
    // Predicated region
    $region158: #{bert_hier_att_net.1} parent=1 // pred_check
      _
    $region159: #{bert_hier_att_net.1} parent=1 // pred_check_branch
      %268 = sbr.rel (0) target = $region161
    $region160: #{bert_hier_att_net.1} parent=1 // pred_region
      %270 = dma.done [#allocation6], 1024
    $region161: #{bert_hier_att_net.1} parent=1 // pred_fallthru
      _
    // Predicated region
    $region162: #{bert_hier_att_net.1} parent=1 // pred_check
      _
    $region163: #{bert_hier_att_net.1} parent=1 // pred_check_branch
      %272 = sbr.rel (0) target = $region165
    $region164: #{bert_hier_att_net.1} parent=1 // pred_region
      %274 = dma.done [#allocation6], 2048
    $region165: #{bert_hier_att_net.1} parent=1 // pred_fallthru
      _
    // Predicated region
    $region166: #{bert_hier_att_net.1} parent=1 // pred_check
      _
    $region167: #{bert_hier_att_net.1} parent=1 // pred_check_branch
      %276 = sbr.rel (0) target = $region169
    $region168: #{bert_hier_att_net.1} parent=1 // pred_region
      %278 = dma.done [#allocation9], 1024
    $region169: #{bert_hier_att_net.1} parent=1 // pred_fallthru
      _
    // Predicated region
    $region170: #{bert_hier_att_net.1} parent=1 // pred_check
      _
    $region171: #{bert_hier_att_net.1} parent=1 // pred_check_branch
      %280 = sbr.rel (0) target = $region173
    $region172: #{bert_hier_att_net.1} parent=1 // pred_region
      %282 = dma.done [#allocation9], 1024
    $region173: #{bert_hier_att_net.1} parent=1 // pred_fallthru
      _
    // Predicated region
    $region174: #{bert_hier_att_net.1} parent=1 // pred_check
      _
    $region175: #{bert_hier_att_net.1} parent=1 // pred_check_branch
      %284 = sbr.rel (0) target = $region177
    $region176: #{bert_hier_att_net.1} parent=1 // pred_region
      %286 = dma.done [#allocation12], 6144
    $region177: #{bert_hier_att_net.1} parent=1 // pred_fallthru
      _
    // Predicated region
    $region178: #{bert_hier_att_net.1} parent=1 // pred_check
      _
    $region179: #{bert_hier_att_net.1} parent=1 // pred_check_branch
      %288 = sbr.rel (0) target = $region181
    $region180: #{bert_hier_att_net.1} parent=1 // pred_region
      %290 = dma.done [#allocation12], 3072
    $region181: #{bert_hier_att_net.1} parent=1 // pred_fallthru
      _
    // Predicated region
    $region182: #{bert_hier_att_net.1} parent=1 // pred_check
      _
    $region183: #{bert_hier_att_net.1} parent=1 // pred_check_branch
      %292 = sbr.rel (0) target = $region185
    $region184: #{bert_hier_att_net.1} parent=1 // pred_region
      %294 = dma.done [#allocation15], 3072
    $region185: #{bert_hier_att_net.1} parent=1 // pred_fallthru
      _
    // Predicated region
    $region186: #{bert_hier_att_net.1} parent=1 // pred_check
      _
    $region187: #{bert_hier_att_net.1} parent=1 // pred_check_branch
      %296 = sbr.rel (0) target = $region189
    $region188: #{bert_hier_att_net.1} parent=1 // pred_region
      %298 = dma.done [#allocation15], 2048
    $region189: #{bert_hier_att_net.1} parent=1 // pred_fallthru
      _
    %v300 = vld [vmem:[%s1] sm:$0xff]
    %v301 = vld [vmem:[%s1 + $0x8] sm:$0xff]
    %v302 = vld [vmem:[%s1 + $0x10] sm:$0xff]
    %v303 = vld [vmem:[%s1 + $0x18] sm:$0xff]
    %v304 = vld [vmem:[%s1 + $0x20] sm:$0xff]
    %v305 = vld [vmem:[%s1 + $0x28] sm:$0xff]
    %v306 = vld [vmem:[%s1 + $0x30] sm:$0xff]
    %v307 = vld [vmem:[%s1 + $0x38] sm:$0xff]
    %v308 = vlaneseq
    %v309 = vand.u32 %v308, 127
    %310 = vset.pattern.permute.xlu0 0
    %311 = vperm.xlu0 %310, %v300
    %v312 = vpop.permute.xlu0 %311
    %313 = vset.pattern.permute.xlu0 0
    %314 = vperm.xlu0 %313, %v301
    %v315 = vpop.permute.xlu0 %314
    %316 = vset.pattern.permute.xlu0 0
    %317 = vperm.xlu0 %316, %v302
    %v318 = vpop.permute.xlu0 %317
    %319 = vset.pattern.permute.xlu0 0
    %320 = vperm.xlu0 %319, %v303
    %v321 = vpop.permute.xlu0 %320
    %322 = vset.pattern.permute.xlu0 0
    %323 = vperm.xlu0 %322, %v304
    %v324 = vpop.permute.xlu0 %323
    %325 = vset.pattern.permute.xlu0 0
    %326 = vperm.xlu0 %325, %v305
    %v327 = vpop.permute.xlu0 %326
    %328 = vset.pattern.permute.xlu0 0
    %329 = vperm.xlu0 %328, %v306
    %v330 = vpop.permute.xlu0 %329
    %331 = vset.pattern.permute.xlu0 0
    %332 = vperm.xlu0 %331, %v307
    %v333 = vpop.permute.xlu0 %332
    %vm334 = vcmp.eq.s32.totalorder %v312, %v309
    %vm335 = vcmp.eq.s32.totalorder %v315, %v309
    %vm336 = vcmp.eq.s32.totalorder %v318, %v309
    %vm337 = vcmp.eq.s32.totalorder %v321, %v309
    %vm338 = vcmp.eq.s32.totalorder %v324, %v309
    %vm339 = vcmp.eq.s32.totalorder %v327, %v309
    %vm340 = vcmp.eq.s32.totalorder %v330, %v309
    %vm341 = vcmp.eq.s32.totalorder %v333, %v309
    %v342 = vsel %vm334, 1.0, 0.0
    %v343 = vsel %vm335, 1.0, 0.0
    %v344 = vsel %vm336, 1.0, 0.0
    %v345 = vsel %vm337, 1.0, 0.0
    %v346 = vsel %vm338, 1.0, 0.0
    %v347 = vsel %vm339, 1.0, 0.0
    %v348 = vsel %vm340, 1.0, 0.0
    %v349 = vsel %vm341, 1.0, 0.0
    %v350 = vpack.c.bf16 %v343, %v342
    %v351 = vpack.c.bf16 %v345, %v344
    %v352 = vpack.c.bf16 %v347, %v346
    %v353 = vpack.c.bf16 %v349, %v348
    %v354 = vld [vmem:[%s15] sm:$0xf]
    %v355 = vld [vmem:[%s15 + $0x4] sm:$0xf]
    %v356 = vld [vmem:[%s15 + $0x8] sm:$0xf]
    %v357 = vld [vmem:[%s15 + $0xc] sm:$0xf]
    %v358 = vld [vmem:[%s15 + $0x10] sm:$0xf]
    %v359 = vld [vmem:[%s15 + $0x14] sm:$0xf]
    %v360 = vld [vmem:[%s15 + $0x18] sm:$0xf]
    %v361 = vld [vmem:[%s15 + $0x1c] sm:$0xf]
    %v362 = vld [vmem:[%s17] sm:$0xff]
    %v363 = vld [vmem:[%s17 + $0x8] sm:$0xff]
    %v364 = vld [vmem:[%s17 + $0x10] sm:$0xff]
    %v365 = vld [vmem:[%s17 + $0x18] sm:$0xff]
    %v366 = vld [vmem:[%s17 + $0x20] sm:$0xff]
    %v367 = vld [vmem:[%s17 + $0x28] sm:$0xff]
    %v368 = vld [vmem:[%s17 + $0x30] sm:$0xff]
    %v369 = vld [vmem:[%s17 + $0x38] sm:$0xff]
    %v378 = vunpack.c.l.b16 %v354
    %v379 = vunpack.c.l.b16 %v355
    %v380 = vunpack.c.l.b16 %v356
    %v381 = vunpack.c.l.b16 %v357
    %v382 = vunpack.c.l.b16 %v358
    %v383 = vunpack.c.l.b16 %v359
    %v384 = vunpack.c.l.b16 %v360
    %v385 = vunpack.c.l.b16 %v361
    %v386 = vpack.c.b16 %v379, %v378
    %v387 = vpack.c.b16 %v381, %v380
    %v388 = vpack.c.b16 %v383, %v382
    %v389 = vpack.c.b16 %v385, %v384
    %vm394 = vcmask 523264
    %v396 = vsel %vm394, %v350, 0
    %v399 = vsel %vm394, %v351, 0
    %v402 = vsel %vm394, %v352, 0
    %v405 = vsel %vm394, %v353, 0
    %407 = vmatpush.bf16.msra.mxu0 0
    %408 = vmatpush.bf16.msra.mxu0 0
    %409 = vmatpush.bf16.msra.mxu0 0
    %410 = vmatpush.bf16.msra.mxu0 0
    %411 = vmatpush.bf16.msra.mxu0 %v389
    %412 = vmatpush.bf16.msra.mxu0 %v388
    %413 = vmatpush.bf16.msra.mxu0 %v387
    %414 = vmatpush.bf16.msra.mxu0 %v386
    %415 = vmatmul.bf16.gmra.mxu0 %v396
    %v416 = vpop.f32.mrf.mxu0
    %v417 = vadd.f32 %v362, %v416
    %v418 = vpop.f32.mrf.mxu0
    %v419 = vadd.f32 %v363, %v418
    %420 = vmatmul.bf16.gmra.mxu0 %v399
    %v421 = vpop.f32.mrf.mxu0
    %v422 = vadd.f32 %v364, %v421
    %v423 = vpop.f32.mrf.mxu0
    %v424 = vadd.f32 %v365, %v423
    %425 = vmatmul.bf16.gmra.mxu0 %v402
    %v426 = vpop.f32.mrf.mxu0
    %v427 = vadd.f32 %v366, %v426
    %v428 = vpop.f32.mrf.mxu0
    %v429 = vadd.f32 %v367, %v428
    %430 = vmatmul.bf16.gmra.mxu0 %v405
    %v431 = vpop.f32.mrf.mxu0
    %v432 = vadd.f32 %v368, %v431
    %v433 = vpop.f32.mrf.mxu0
    %v434 = vadd.f32 %v369, %v433
    %435 = vdwg.mxu0
    %436 = vadd.xlane.f32.xlu0 %v417
    %v437 = vpop.xlane.xlu0 %436
    %438 = vadd.xlane.f32.xlu0 %v419
    %v439 = vpop.xlane.xlu0 %438
    %440 = vadd.xlane.f32.xlu0 %v422
    %v441 = vpop.xlane.xlu0 %440
    %442 = vadd.xlane.f32.xlu0 %v424
    %v443 = vpop.xlane.xlu0 %442
    %444 = vadd.xlane.f32.xlu0 %v427
    %v445 = vpop.xlane.xlu0 %444
    %446 = vadd.xlane.f32.xlu0 %v429
    %v447 = vpop.xlane.xlu0 %446
    %448 = vadd.xlane.f32.xlu0 %v432
    %v449 = vpop.xlane.xlu0 %448
    %450 = vadd.xlane.f32.xlu0 %v434
    %v451 = vpop.xlane.xlu0 %450
    %v452 = vrcp.pop 128.0
    %v453 = vmul.f32 128.0, %v452
    %v454 = vsub.f32 1.0, %v453
    %v455 = vmul.f32 %v452, %v454
    %v456 = vadd.f32 %v452, %v455
    %vm457 = vweird.f32 %v452
    %v458 = vsel %vm457, %v452, %v456
    %v459 = vmul.f32 %v437, %v458
    %v460 = vmul.f32 %v439, %v458
    %v461 = vmul.f32 %v441, %v458
    %v462 = vmul.f32 %v443, %v458
    %v463 = vmul.f32 %v445, %v458
    %v464 = vmul.f32 %v447, %v458
    %v465 = vmul.f32 %v449, %v458
    %v466 = vmul.f32 %v451, %v458
    %v467 = vsub.f32 %v417, %v459
    %v468 = vsub.f32 %v419, %v460
    %v469 = vsub.f32 %v422, %v461
    %v470 = vsub.f32 %v424, %v462
    %v471 = vsub.f32 %v427, %v463
    %v472 = vsub.f32 %v429, %v464
    %v473 = vsub.f32 %v432, %v465
    %v474 = vsub.f32 %v434, %v466
    %v475 = vmul.f32 %v467, %v467
    %v476 = vmul.f32 %v468, %v468
    %v477 = vmul.f32 %v469, %v469
    %v478 = vmul.f32 %v470, %v470
    %v479 = vmul.f32 %v471, %v471
    %v480 = vmul.f32 %v472, %v472
    %v481 = vmul.f32 %v473, %v473
    %v482 = vmul.f32 %v474, %v474
    %483 = vadd.xlane.f32.xlu0 %v475
    %v484 = vpop.xlane.xlu0 %483
    %485 = vadd.xlane.f32.xlu0 %v476
    %v486 = vpop.xlane.xlu0 %485
    %487 = vadd.xlane.f32.xlu0 %v477
    %v488 = vpop.xlane.xlu0 %487
    %489 = vadd.xlane.f32.xlu0 %v478
    %v490 = vpop.xlane.xlu0 %489
    %491 = vadd.xlane.f32.xlu0 %v479
    %v492 = vpop.xlane.xlu0 %491
    %493 = vadd.xlane.f32.xlu0 %v480
    %v494 = vpop.xlane.xlu0 %493
    %495 = vadd.xlane.f32.xlu0 %v481
    %v496 = vpop.xlane.xlu0 %495
    %497 = vadd.xlane.f32.xlu0 %v482
    %v498 = vpop.xlane.xlu0 %497
    %v499 = vmul.f32 %v484, %v458
    %v500 = vmul.f32 %v486, %v458
    %v501 = vmul.f32 %v488, %v458
    %v502 = vmul.f32 %v490, %v458
    %v503 = vmul.f32 %v492, %v458
    %v504 = vmul.f32 %v494, %v458
    %v505 = vmul.f32 %v496, %v458
    %v506 = vmul.f32 %v498, %v458
    %v507 = vadd.f32 %v499, 1e-12
    %v508 = vadd.f32 %v500, 1e-12
    %v509 = vadd.f32 %v501, 1e-12
    %v510 = vadd.f32 %v502, 1e-12
    %v511 = vadd.f32 %v503, 1e-12
    %v512 = vadd.f32 %v504, 1e-12
    %v513 = vadd.f32 %v505, 1e-12
    %v514 = vadd.f32 %v506, 1e-12
    %v515 = vrsqrt.pop %v507
    %v516 = vmul.f32 %v515, %v507
    %v517 = vmul.f32 %v516, %v515
    %v518 = vmul.f32 0.5, %v517
    %v519 = vsub.f32 1.5, %v518
    %v520 = vmul.f32 %v515, %v519
    %vm521 = vweird.f32 %v507
    %vm522 = vweird.f32 %v515
    %vm523 = vmor %vm521, %vm522
    %v524 = vsel %vm523, %v515, %v520
    %v525 = vrsqrt.pop %v508
    %v526 = vmul.f32 %v525, %v508
    %v527 = vmul.f32 %v526, %v525
    %v528 = vmul.f32 0.5, %v527
    %v529 = vsub.f32 1.5, %v528
    %v530 = vmul.f32 %v525, %v529
    %vm531 = vweird.f32 %v508
    %vm532 = vweird.f32 %v525
    %vm533 = vmor %vm531, %vm532
    %v534 = vsel %vm533, %v525, %v530
    %v535 = vrsqrt.pop %v509
    %v536 = vmul.f32 %v535, %v509
    %v537 = vmul.f32 %v536, %v535
    %v538 = vmul.f32 0.5, %v537
    %v539 = vsub.f32 1.5, %v538
    %v540 = vmul.f32 %v535, %v539
    %vm541 = vweird.f32 %v509
    %vm542 = vweird.f32 %v535
    %vm543 = vmor %vm541, %vm542
    %v544 = vsel %vm543, %v535, %v540
    %v545 = vrsqrt.pop %v510
    %v546 = vmul.f32 %v545, %v510
    %v547 = vmul.f32 %v546, %v545
    %v548 = vmul.f32 0.5, %v547
    %v549 = vsub.f32 1.5, %v548
    %v550 = vmul.f32 %v545, %v549
    %vm551 = vweird.f32 %v510
    %vm552 = vweird.f32 %v545
    %vm553 = vmor %vm551, %vm552
    %v554 = vsel %vm553, %v545, %v550
    %v555 = vrsqrt.pop %v511
    %v556 = vmul.f32 %v555, %v511
    %v557 = vmul.f32 %v556, %v555
    %v558 = vmul.f32 0.5, %v557
    %v559 = vsub.f32 1.5, %v558
    %v560 = vmul.f32 %v555, %v559
    %vm561 = vweird.f32 %v511
    %vm562 = vweird.f32 %v555
    %vm563 = vmor %vm561, %vm562
    %v564 = vsel %vm563, %v555, %v560
    %v565 = vrsqrt.pop %v512
    %v566 = vmul.f32 %v565, %v512
    %v567 = vmul.f32 %v566, %v565
    %v568 = vmul.f32 0.5, %v567
    %v569 = vsub.f32 1.5, %v568
    %v570 = vmul.f32 %v565, %v569
    %vm571 = vweird.f32 %v512
    %vm572 = vweird.f32 %v565
    %vm573 = vmor %vm571, %vm572
    %v574 = vsel %vm573, %v565, %v570
    %v575 = vrsqrt.pop %v513
    %v576 = vmul.f32 %v575, %v513
    %v577 = vmul.f32 %v576, %v575
    %v578 = vmul.f32 0.5, %v577
    %v579 = vsub.f32 1.5, %v578
    %v580 = vmul.f32 %v575, %v579
    %vm581 = vweird.f32 %v513
    %vm582 = vweird.f32 %v575
    %vm583 = vmor %vm581, %vm582
    %v584 = vsel %vm583, %v575, %v580
    %v585 = vrsqrt.pop %v514
    %v586 = vmul.f32 %v585, %v514
    %v587 = vmul.f32 %v586, %v585
    %v588 = vmul.f32 0.5, %v587
    %v589 = vsub.f32 1.5, %v588
    %v590 = vmul.f32 %v585, %v589
    %vm591 = vweird.f32 %v514
    %vm592 = vweird.f32 %v585
    %vm593 = vmor %vm591, %vm592
    %v594 = vsel %vm593, %v585, %v590
    %v595 = vmul.f32 %v467, %v524
    %v596 = vmul.f32 %v468, %v534
    %v597 = vmul.f32 %v469, %v544
    %v598 = vmul.f32 %v470, %v554
    %v599 = vmul.f32 %v471, %v564
    %v600 = vmul.f32 %v472, %v574
    %v601 = vmul.f32 %v473, %v584
    %v602 = vmul.f32 %v474, %v594
    %v603 = vld [vmem:[%s19] sm:$0x1]
    %v605 = vperm.slane %v603, 0
    %v607 = vmul.f32 %v595, %v605
    %v608 = vmul.f32 %v596, %v605
    %v609 = vmul.f32 %v597, %v605
    %v610 = vmul.f32 %v598, %v605
    %v611 = vmul.f32 %v599, %v605
    %v612 = vmul.f32 %v600, %v605
    %v613 = vmul.f32 %v601, %v605
    %v614 = vmul.f32 %v602, %v605
    %v615 = vld [vmem:[%s21] sm:$0x1]
    %v617 = vperm.slane %v615, 0
    %v619 = vadd.f32 %v607, %v617
    %v620 = vadd.f32 %v608, %v617
    %v621 = vadd.f32 %v609, %v617
    %v622 = vadd.f32 %v610, %v617
    %v623 = vadd.f32 %v611, %v617
    %v624 = vadd.f32 %v612, %v617
    %v625 = vadd.f32 %v613, %v617
    %v626 = vadd.f32 %v614, %v617
    %v627 = vpack.c.bf16 %v620, %v619
    %v628 = vpack.c.bf16 %v622, %v621
    %v629 = vpack.c.bf16 %v624, %v623
    %v630 = vpack.c.bf16 %v626, %v625
    %v631 = vld [vmem:[#allocation2] sm:$0xff]
    %v632 = vld [vmem:[#allocation2 + $0x8] sm:$0xf]
    %v633 = vld [vmem:[#allocation2 + $0xc] sm:$0xff]
    %v634 = vld [vmem:[#allocation2 + $0x14] sm:$0xf]
    %v635 = vld [vmem:[#allocation2 + $0x18] sm:$0xff]
    %v636 = vld [vmem:[#allocation2 + $0x20] sm:$0xf]
    %v637 = vld [vmem:[#allocation2 + $0x24] sm:$0xff]
    %v638 = vld [vmem:[#allocation2 + $0x2c] sm:$0xf]
    %v639 = vld [vmem:[#allocation2 + $0x30] sm:$0xff]
    %v640 = vld [vmem:[#allocation2 + $0x38] sm:$0xf]
    %v641 = vld [vmem:[#allocation2 + $0x3c] sm:$0xff]
    %v642 = vld [vmem:[#allocation2 + $0x44] sm:$0xf]
    %v643 = vld [vmem:[#allocation2 + $0x48] sm:$0xff]
    %v644 = vld [vmem:[#allocation2 + $0x50] sm:$0xf]
    %v645 = vld [vmem:[#allocation2 + $0x54] sm:$0xff]
    %v646 = vld [vmem:[#allocation2 + $0x5c] sm:$0xf]
    %v647 = vld [vmem:[#allocation2 + $0x60] sm:$0xff]
    %v648 = vld [vmem:[#allocation2 + $0x68] sm:$0xf]
    %v649 = vld [vmem:[#allocation2 + $0x6c] sm:$0xff]
    %v650 = vld [vmem:[#allocation2 + $0x74] sm:$0xf]
    %v651 = vld [vmem:[#allocation2 + $0x78] sm:$0xff]
    %v652 = vld [vmem:[#allocation2 + $0x80] sm:$0xf]
    %v653 = vld [vmem:[#allocation2 + $0x84] sm:$0xff]
    %v654 = vld [vmem:[#allocation2 + $0x8c] sm:$0xf]
    %v655 = vld [vmem:[#allocation2 + $0x90] sm:$0xff]
    %v656 = vld [vmem:[#allocation2 + $0x98] sm:$0xf]
    %v657 = vld [vmem:[#allocation2 + $0x9c] sm:$0xff]
    %v658 = vld [vmem:[#allocation2 + $0xa4] sm:$0xf]
    %v659 = vld [vmem:[#allocation2 + $0xa8] sm:$0xff]
    %v660 = vld [vmem:[#allocation2 + $0xb0] sm:$0xf]
    %v661 = vld [vmem:[#allocation2 + $0xb4] sm:$0xff]
    %v662 = vld [vmem:[#allocation2 + $0xbc] sm:$0xf]
    %v663 = vld [vmem:[%s25] sm:$0x7]
    %v665 = vperm.slane %v663, 0
    %v666 = vperm.slane %v663, 1
    %v667 = vperm.slane %v663, 2
    %v703 = vunpack.c.l.b16 %v631
    %v704 = vunpack.c.h.b16 %v631
    %v705 = vunpack.c.l.b16 %v632
    %v706 = vunpack.c.l.b16 %v633
    %v707 = vunpack.c.h.b16 %v633
    %v708 = vunpack.c.l.b16 %v634
    %v709 = vunpack.c.l.b16 %v635
    %v710 = vunpack.c.h.b16 %v635
    %v711 = vunpack.c.l.b16 %v636
    %v712 = vunpack.c.l.b16 %v637
    %v713 = vunpack.c.h.b16 %v637
    %v714 = vunpack.c.l.b16 %v638
    %v715 = vunpack.c.l.b16 %v639
    %v716 = vunpack.c.h.b16 %v639
    %v717 = vunpack.c.l.b16 %v640
    %v718 = vunpack.c.l.b16 %v641
    %v719 = vunpack.c.h.b16 %v641
    %v720 = vunpack.c.l.b16 %v642
    %v721 = vunpack.c.l.b16 %v643
    %v722 = vunpack.c.h.b16 %v643
    %v723 = vunpack.c.l.b16 %v644
    %v724 = vunpack.c.l.b16 %v645
    %v725 = vunpack.c.h.b16 %v645
    %v726 = vunpack.c.l.b16 %v646
    %v727 = vunpack.c.l.b16 %v647
    %v728 = vunpack.c.h.b16 %v647
    %v729 = vunpack.c.l.b16 %v648
    %v730 = vunpack.c.l.b16 %v649
    %v731 = vunpack.c.h.b16 %v649
    %v732 = vunpack.c.l.b16 %v650
    %v733 = vunpack.c.l.b16 %v651
    %v734 = vunpack.c.h.b16 %v651
    %v735 = vunpack.c.l.b16 %v652
    %v736 = vunpack.c.l.b16 %v653
    %v737 = vunpack.c.h.b16 %v653
    %v738 = vunpack.c.l.b16 %v654
    %v739 = vunpack.c.l.b16 %v655
    %v740 = vunpack.c.h.b16 %v655
    %v741 = vunpack.c.l.b16 %v656
    %v742 = vunpack.c.l.b16 %v657
    %v743 = vunpack.c.h.b16 %v657
    %v744 = vunpack.c.l.b16 %v658
    %v745 = vunpack.c.l.b16 %v659
    %v746 = vunpack.c.h.b16 %v659
    %v747 = vunpack.c.l.b16 %v660
    %v748 = vunpack.c.l.b16 %v661
    %v749 = vunpack.c.h.b16 %v661
    %v750 = vunpack.c.l.b16 %v662
    %v751 = vpack.c.b16 %v706, %v703
    %v752 = vpack.c.b16 %v707, %v704
    %v753 = vpack.c.b16 %v708, %v705
    %v754 = vpack.c.b16 %v712, %v709
    %v755 = vpack.c.b16 %v713, %v710
    %v756 = vpack.c.b16 %v714, %v711
    %v757 = vpack.c.b16 %v718, %v715
    %v758 = vpack.c.b16 %v719, %v716
    %v759 = vpack.c.b16 %v720, %v717
    %v760 = vpack.c.b16 %v724, %v721
    %v761 = vpack.c.b16 %v725, %v722
    %v762 = vpack.c.b16 %v726, %v723
    %v763 = vpack.c.b16 %v730, %v727
    %v764 = vpack.c.b16 %v731, %v728
    %v765 = vpack.c.b16 %v732, %v729
    %v766 = vpack.c.b16 %v736, %v733
    %v767 = vpack.c.b16 %v737, %v734
    %v768 = vpack.c.b16 %v738, %v735
    %v769 = vpack.c.b16 %v742, %v739
    %v770 = vpack.c.b16 %v743, %v740
    %v771 = vpack.c.b16 %v744, %v741
    %v772 = vpack.c.b16 %v748, %v745
    %v773 = vpack.c.b16 %v749, %v746
    %v774 = vpack.c.b16 %v750, %v747
    %799 = vmatpush.bf16.msra.mxu0 %v772
    %800 = vmatpush.bf16.msra.mxu0 %v769
    %801 = vmatpush.bf16.msra.mxu0 %v766
    %802 = vmatpush.bf16.msra.mxu0 %v763
    %803 = vmatpush.bf16.msra.mxu0 %v760
    %804 = vmatpush.bf16.msra.mxu0 %v757
    %805 = vmatpush.bf16.msra.mxu0 %v754
    %806 = vmatpush.bf16.msra.mxu0 %v751
    %807 = vmatmul.bf16.gmra.mxu0 %v627
    %v808 = vpop.f32.mrf.mxu0
    %v809 = vadd.f32 %v665, %v808
    %v810 = vpop.f32.mrf.mxu0
    %v811 = vadd.f32 %v665, %v810
    %812 = vmatmul.bf16.gmra.mxu0 %v628
    %v813 = vpop.f32.mrf.mxu0
    %v814 = vadd.f32 %v665, %v813
    %v815 = vpop.f32.mrf.mxu0
    %v816 = vadd.f32 %v665, %v815
    %817 = vmatmul.bf16.gmra.mxu0 %v629
    %v818 = vpop.f32.mrf.mxu0
    %v819 = vadd.f32 %v665, %v818
    %v820 = vpop.f32.mrf.mxu0
    %v821 = vadd.f32 %v665, %v820
    %822 = vmatmul.bf16.gmra.mxu0 %v630
    %v823 = vpop.f32.mrf.mxu0
    %v824 = vadd.f32 %v665, %v823
    %v825 = vpop.f32.mrf.mxu0
    %v826 = vadd.f32 %v665, %v825
    %827 = vdwg.mxu0
    %828 = vmatpush.bf16.msra.mxu0 %v773
    %829 = vmatpush.bf16.msra.mxu0 %v770
    %830 = vmatpush.bf16.msra.mxu0 %v767
    %831 = vmatpush.bf16.msra.mxu0 %v764
    %832 = vmatpush.bf16.msra.mxu0 %v761
    %833 = vmatpush.bf16.msra.mxu0 %v758
    %834 = vmatpush.bf16.msra.mxu0 %v755
    %835 = vmatpush.bf16.msra.mxu0 %v752
    %836 = vmatmul.bf16.gmra.mxu0 %v627
    %v837 = vpop.f32.mrf.mxu0
    %v838 = vadd.f32 %v666, %v837
    %v839 = vpop.f32.mrf.mxu0
    %v840 = vadd.f32 %v666, %v839
    %841 = vmatmul.bf16.gmra.mxu0 %v628
    %v842 = vpop.f32.mrf.mxu0
    %v843 = vadd.f32 %v666, %v842
    %v844 = vpop.f32.mrf.mxu0
    %v845 = vadd.f32 %v666, %v844
    %846 = vmatmul.bf16.gmra.mxu0 %v629
    %v847 = vpop.f32.mrf.mxu0
    %v848 = vadd.f32 %v666, %v847
    %v849 = vpop.f32.mrf.mxu0
    %v850 = vadd.f32 %v666, %v849
    %851 = vmatmul.bf16.gmra.mxu0 %v630
    %v852 = vpop.f32.mrf.mxu0
    %v853 = vadd.f32 %v666, %v852
    %v854 = vpop.f32.mrf.mxu0
    %v855 = vadd.f32 %v666, %v854
    %856 = vdwg.mxu0
    %857 = vmatpush.bf16.msra.mxu0 %v774
    %858 = vmatpush.bf16.msra.mxu0 %v771
    %859 = vmatpush.bf16.msra.mxu0 %v768
    %860 = vmatpush.bf16.msra.mxu0 %v765
    %861 = vmatpush.bf16.msra.mxu0 %v762
    %862 = vmatpush.bf16.msra.mxu0 %v759
    %863 = vmatpush.bf16.msra.mxu0 %v756
    %864 = vmatpush.bf16.msra.mxu0 %v753
    %865 = vmatmul.bf16.gmra.mxu0 %v627
    %v866 = vpop.f32.mrf.mxu0
    %v867 = vadd.f32 %v667, %v866
    %v868 = vpop.f32.mrf.mxu0
    %v869 = vadd.f32 %v667, %v868
    %870 = vmatmul.bf16.gmra.mxu0 %v628
    %v871 = vpop.f32.mrf.mxu0
    %v872 = vadd.f32 %v667, %v871
    %v873 = vpop.f32.mrf.mxu0
    %v874 = vadd.f32 %v667, %v873
    %875 = vmatmul.bf16.gmra.mxu0 %v629
    %v876 = vpop.f32.mrf.mxu0
    %v877 = vadd.f32 %v667, %v876
    %v878 = vpop.f32.mrf.mxu0
    %v879 = vadd.f32 %v667, %v878
    %880 = vmatmul.bf16.gmra.mxu0 %v630
    %v881 = vpop.f32.mrf.mxu0
    %v882 = vadd.f32 %v667, %v881
    %v883 = vpop.f32.mrf.mxu0
    %v884 = vadd.f32 %v667, %v883
    %885 = vdwg.mxu0
    %v886 = vld [vmem:[%s3] sm:$0xff]
    %v887 = vld [vmem:[%s3 + $0x8] sm:$0xff]
    %v888 = vld [vmem:[%s3 + $0x10] sm:$0xff]
    %v889 = vld [vmem:[%s3 + $0x18] sm:$0xff]
    %v890 = vld [vmem:[%s3 + $0x20] sm:$0xff]
    %v891 = vld [vmem:[%s3 + $0x28] sm:$0xff]
    %v892 = vld [vmem:[%s3 + $0x30] sm:$0xff]
    %v893 = vld [vmem:[%s3 + $0x38] sm:$0xff]
    %v894 = vld [vmem:[%s5] sm:$0x1]
    %895 = vset.pattern.permute.xlu0 0
    %896 = vperm.xlu0 %895, %v886
    %v897 = vpop.permute.xlu0 %896
    %898 = vset.pattern.permute.xlu0 0
    %899 = vperm.xlu0 %898, %v887
    %v900 = vpop.permute.xlu0 %899
    %901 = vset.pattern.permute.xlu0 0
    %902 = vperm.xlu0 %901, %v888
    %v903 = vpop.permute.xlu0 %902
    %904 = vset.pattern.permute.xlu0 0
    %905 = vperm.xlu0 %904, %v889
    %v906 = vpop.permute.xlu0 %905
    %907 = vset.pattern.permute.xlu0 0
    %908 = vperm.xlu0 %907, %v890
    %v909 = vpop.permute.xlu0 %908
    %910 = vset.pattern.permute.xlu0 0
    %911 = vperm.xlu0 %910, %v891
    %v912 = vpop.permute.xlu0 %911
    %913 = vset.pattern.permute.xlu0 0
    %914 = vperm.xlu0 %913, %v892
    %v915 = vpop.permute.xlu0 %914
    %916 = vset.pattern.permute.xlu0 0
    %917 = vperm.xlu0 %916, %v893
    %v918 = vpop.permute.xlu0 %917
    %v919 = vperm.slane %v894, 0
    %vm920 = vcmp.eq.s32.totalorder %v897, %v919
    %vm921 = vcmp.eq.s32.totalorder %v900, %v919
    %vm922 = vcmp.eq.s32.totalorder %v903, %v919
    %vm923 = vcmp.eq.s32.totalorder %v906, %v919
    %vm924 = vcmp.eq.s32.totalorder %v909, %v919
    %vm925 = vcmp.eq.s32.totalorder %v912, %v919
    %vm926 = vcmp.eq.s32.totalorder %v915, %v919
    %vm927 = vcmp.eq.s32.totalorder %v918, %v919
    %v928 = vld [vmem:[%s7] sm:$0x1]
    %vm929 = vcmp.gt.f32.partialorder %v928, 0.0
    %v930 = vsel %vm929, 1, 0
    %v931 = vperm.slane %v930, 0
    %vm932 = vcmp.eq.s32.totalorder %v931, 1
    %vm933 = vmand %vm920, %vm932
    %vm934 = vmand %vm921, %vm932
    %vm935 = vmand %vm922, %vm932
    %vm936 = vmand %vm923, %vm932
    %vm937 = vmand %vm924, %vm932
    %vm938 = vmand %vm925, %vm932
    %vm939 = vmand %vm926, %vm932
    %vm940 = vmand %vm927, %vm932
    %v941 = vsel %vm933, 0.0, -1e+09
    %v942 = vsel %vm934, 0.0, -1e+09
    %v943 = vsel %vm935, 0.0, -1e+09
    %v944 = vsel %vm936, 0.0, -1e+09
    %v945 = vsel %vm937, 0.0, -1e+09
    %v946 = vsel %vm938, 0.0, -1e+09
    %v947 = vsel %vm939, 0.0, -1e+09
    %v948 = vsel %vm940, 0.0, -1e+09
    %v949 = vpack.c.bf16 %v811, %v809
    %v950 = vpack.c.bf16 %v816, %v814
    %v951 = vpack.c.bf16 %v821, %v819
    %v952 = vpack.c.bf16 %v826, %v824
    %v953 = vpack.c.bf16 %v840, %v838
    %v954 = vpack.c.bf16 %v845, %v843
    %v955 = vpack.c.bf16 %v850, %v848
    %v956 = vpack.c.bf16 %v855, %v853
    %v957 = vpack.c.bf16 %v869, %v867
    %v958 = vpack.c.bf16 %v874, %v872
    %v959 = vpack.c.bf16 %v879, %v877
    %v960 = vpack.c.bf16 %v884, %v882
    %v962 = vsel %vm394, %v949, 0
    %v965 = vsel %vm394, %v950, 0
    %v968 = vsel %vm394, %v951, 0
    %v971 = vsel %vm394, %v952, 0
    %v974 = vsel %vm394, %v953, 0
    %v977 = vsel %vm394, %v954, 0
    %v980 = vsel %vm394, %v955, 0
    %v983 = vsel %vm394, %v956, 0
    %985 = vmatpush.bf16.xpose.msra.mxu0 0
    %986 = vmatpush.bf16.xpose.msra.mxu0 0
    %987 = vmatpush.bf16.xpose.msra.mxu0 0
    %988 = vmatpush.bf16.xpose.msra.mxu0 0
    %989 = vmatpush.bf16.xpose.msra.mxu0 %v983
    %990 = vmatpush.bf16.xpose.msra.mxu0 %v980
    %991 = vmatpush.bf16.xpose.msra.mxu0 %v977
    %992 = vmatpush.bf16.xpose.msra.mxu0 %v974
    %993 = vmatmul.bf16.gmra.mxu0 %v962
    %v994 = vpop.f32.mrf.mxu0
    %v995 = vadd.f32 0.0, %v994
    %v996 = vpop.f32.mrf.mxu0
    %v997 = vadd.f32 0.0, %v996
    %998 = vmatmul.bf16.gmra.mxu0 %v965
    %v999 = vpop.f32.mrf.mxu0
    %v1000 = vadd.f32 0.0, %v999
    %v1001 = vpop.f32.mrf.mxu0
    %v1002 = vadd.f32 0.0, %v1001
    %1003 = vmatmul.bf16.gmra.mxu0 %v968
    %v1004 = vpop.f32.mrf.mxu0
    %v1005 = vadd.f32 0.0, %v1004
    %v1006 = vpop.f32.mrf.mxu0
    %v1007 = vadd.f32 0.0, %v1006
    %1008 = vmatmul.bf16.gmra.mxu0 %v971
    %v1009 = vpop.f32.mrf.mxu0
    %v1010 = vadd.f32 0.0, %v1009
    %v1011 = vpop.f32.mrf.mxu0
    %v1012 = vadd.f32 0.0, %v1011
    %1013 = vdwg.mxu0
    %v1014 = vmul.f32 %v995, 0.125
    %v1015 = vmul.f32 %v997, 0.125
    %v1016 = vmul.f32 %v1000, 0.125
    %v1017 = vmul.f32 %v1002, 0.125
    %v1018 = vmul.f32 %v1005, 0.125
    %v1019 = vmul.f32 %v1007, 0.125
    %v1020 = vmul.f32 %v1010, 0.125
    %v1021 = vmul.f32 %v1012, 0.125
    %v1022 = vadd.f32 %v1014, %v941
    %v1023 = vadd.f32 %v1015, %v942
    %v1024 = vadd.f32 %v1016, %v943
    %v1025 = vadd.f32 %v1017, %v944
    %v1026 = vadd.f32 %v1018, %v945
    %v1027 = vadd.f32 %v1019, %v946
    %v1028 = vadd.f32 %v1020, %v947
    %v1029 = vadd.f32 %v1021, %v948
    %v1030 = vsel %vm394, %v1022, -inf
    %1031 = vmax.xlane.f32.xlu0 %v1030
    %v1032 = vpop.xlane.xlu0 %1031
    %v1033 = vsel %vm394, %v1023, -inf
    %1034 = vmax.xlane.f32.xlu0 %v1033
    %v1035 = vpop.xlane.xlu0 %1034
    %v1036 = vsel %vm394, %v1024, -inf
    %1037 = vmax.xlane.f32.xlu0 %v1036
    %v1038 = vpop.xlane.xlu0 %1037
    %v1039 = vsel %vm394, %v1025, -inf
    %1040 = vmax.xlane.f32.xlu0 %v1039
    %v1041 = vpop.xlane.xlu0 %1040
    %v1042 = vsel %vm394, %v1026, -inf
    %1043 = vmax.xlane.f32.xlu0 %v1042
    %v1044 = vpop.xlane.xlu0 %1043
    %v1045 = vsel %vm394, %v1027, -inf
    %1046 = vmax.xlane.f32.xlu0 %v1045
    %v1047 = vpop.xlane.xlu0 %1046
    %v1048 = vsel %vm394, %v1028, -inf
    %1049 = vmax.xlane.f32.xlu0 %v1048
    %v1050 = vpop.xlane.xlu0 %1049
    %v1051 = vsel %vm394, %v1029, -inf
    %1052 = vmax.xlane.f32.xlu0 %v1051
    %v1053 = vpop.xlane.xlu0 %1052
    %v1054 = vsub.f32 %v1022, %v1032
    %v1055 = vsub.f32 %v1023, %v1035
    %v1056 = vsub.f32 %v1024, %v1038
    %v1057 = vsub.f32 %v1025, %v1041
    %v1058 = vsub.f32 %v1026, %v1044
    %v1059 = vsub.f32 %v1027, %v1047
    %v1060 = vsub.f32 %v1028, %v1050
    %v1061 = vsub.f32 %v1029, %v1053
    %v1062 = vmul.f32 %v1054, 1.442695
    %v1063 = vpow.pop %v1062
    %v1064 = vmul.f32 %v1055, 1.442695
    %v1065 = vpow.pop %v1064
    %v1066 = vmul.f32 %v1056, 1.442695
    %v1067 = vpow.pop %v1066
    %v1068 = vmul.f32 %v1057, 1.442695
    %v1069 = vpow.pop %v1068
    %v1070 = vmul.f32 %v1058, 1.442695
    %v1071 = vpow.pop %v1070
    %v1072 = vmul.f32 %v1059, 1.442695
    %v1073 = vpow.pop %v1072
    %v1074 = vmul.f32 %v1060, 1.442695
    %v1075 = vpow.pop %v1074
    %v1076 = vmul.f32 %v1061, 1.442695
    %v1077 = vpow.pop %v1076
    %v1078 = vsel %vm394, %v1063, 0.0
    %1079 = vadd.xlane.f32.xlu0 %v1078
    %v1080 = vpop.xlane.xlu0 %1079
    %v1081 = vsel %vm394, %v1065, 0.0
    %1082 = vadd.xlane.f32.xlu0 %v1081
    %v1083 = vpop.xlane.xlu0 %1082
    %v1084 = vsel %vm394, %v1067, 0.0
    %1085 = vadd.xlane.f32.xlu0 %v1084
    %v1086 = vpop.xlane.xlu0 %1085
    %v1087 = vsel %vm394, %v1069, 0.0
    %1088 = vadd.xlane.f32.xlu0 %v1087
    %v1089 = vpop.xlane.xlu0 %1088
    %v1090 = vsel %vm394, %v1071, 0.0
    %1091 = vadd.xlane.f32.xlu0 %v1090
    %v1092 = vpop.xlane.xlu0 %1091
    %v1093 = vsel %vm394, %v1073, 0.0
    %1094 = vadd.xlane.f32.xlu0 %v1093
    %v1095 = vpop.xlane.xlu0 %1094
    %v1096 = vsel %vm394, %v1075, 0.0
    %1097 = vadd.xlane.f32.xlu0 %v1096
    %v1098 = vpop.xlane.xlu0 %1097
    %v1099 = vsel %vm394, %v1077, 0.0
    %1100 = vadd.xlane.f32.xlu0 %v1099
    %v1101 = vpop.xlane.xlu0 %1100
    %v1102 = vrcp.pop %v1080
    %v1103 = vrcp.pop %v1083
    %v1104 = vrcp.pop %v1086
    %v1105 = vrcp.pop %v1089
    %v1106 = vrcp.pop %v1092
    %v1107 = vrcp.pop %v1095
    %v1108 = vrcp.pop %v1098
    %v1109 = vrcp.pop %v1101
    %v1110 = vmul.f32 %v1063, %v1102
    %v1111 = vmul.f32 %v1065, %v1103
    %v1112 = vmul.f32 %v1067, %v1104
    %v1113 = vmul.f32 %v1069, %v1105
    %v1114 = vmul.f32 %v1071, %v1106
    %v1115 = vmul.f32 %v1073, %v1107
    %v1116 = vmul.f32 %v1075, %v1108
    %v1117 = vmul.f32 %v1077, %v1109
    %v1118 = vpack.c.bf16 %v1111, %v1110
    %v1119 = vpack.c.bf16 %v1113, %v1112
    %v1120 = vpack.c.bf16 %v1115, %v1114
    %v1121 = vpack.c.bf16 %v1117, %v1116
    %v1123 = vsel %vm394, %v1118, 0
    %v1126 = vsel %vm394, %v1119, 0
    %v1129 = vsel %vm394, %v1120, 0
    %v1132 = vsel %vm394, %v1121, 0
    %1134 = vmatpush.bf16.msra.mxu0 0
    %1135 = vmatpush.bf16.msra.mxu0 0
    %1136 = vmatpush.bf16.msra.mxu0 0
    %1137 = vmatpush.bf16.msra.mxu0 0
    %1138 = vmatpush.bf16.msra.mxu0 %v960
    %1139 = vmatpush.bf16.msra.mxu0 %v959
    %1140 = vmatpush.bf16.msra.mxu0 %v958
    %1141 = vmatpush.bf16.msra.mxu0 %v957
    %1142 = vmatmul.bf16.gmra.mxu0 %v1123
    %v1143 = vpop.f32.mrf.mxu0
    %v1144 = vadd.f32 0.0, %v1143
    %v1145 = vpop.f32.mrf.mxu0
    %v1146 = vadd.f32 0.0, %v1145
    %1147 = vmatmul.bf16.gmra.mxu0 %v1126
    %v1148 = vpop.f32.mrf.mxu0
    %v1149 = vadd.f32 0.0, %v1148
    %v1150 = vpop.f32.mrf.mxu0
    %v1151 = vadd.f32 0.0, %v1150
    %1152 = vmatmul.bf16.gmra.mxu0 %v1129
    %v1153 = vpop.f32.mrf.mxu0
    %v1154 = vadd.f32 0.0, %v1153
    %v1155 = vpop.f32.mrf.mxu0
    %v1156 = vadd.f32 0.0, %v1155
    %1157 = vmatmul.bf16.gmra.mxu0 %v1132
    %v1158 = vpop.f32.mrf.mxu0
    %v1159 = vadd.f32 0.0, %v1158
    %v1160 = vpop.f32.mrf.mxu0
    %v1161 = vadd.f32 0.0, %v1160
    %1162 = vdwg.mxu0
    %1167 = vrot.lane.b32.xlu0 %v949, 64
    %v1168 = vpop.permute.xlu0 %1167
    %1169 = vrot.lane.b32.xlu0 %v950, 64
    %v1170 = vpop.permute.xlu0 %1169
    %1171 = vrot.lane.b32.xlu0 %v951, 64
    %v1172 = vpop.permute.xlu0 %1171
    %1173 = vrot.lane.b32.xlu0 %v952, 64
    %v1174 = vpop.permute.xlu0 %1173
    %1179 = vrot.lane.b32.xlu0 %v953, 64
    %v1180 = vpop.permute.xlu0 %1179
    %1181 = vrot.lane.b32.xlu0 %v954, 64
    %v1182 = vpop.permute.xlu0 %1181
    %1183 = vrot.lane.b32.xlu0 %v955, 64
    %v1184 = vpop.permute.xlu0 %1183
    %1185 = vrot.lane.b32.xlu0 %v956, 64
    %v1186 = vpop.permute.xlu0 %1185
    %v1188 = vsel %vm394, %v1168, 0
    %v1191 = vsel %vm394, %v1170, 0
    %v1194 = vsel %vm394, %v1172, 0
    %v1197 = vsel %vm394, %v1174, 0
    %v1200 = vsel %vm394, %v1180, 0
    %v1203 = vsel %vm394, %v1182, 0
    %v1206 = vsel %vm394, %v1184, 0
    %v1209 = vsel %vm394, %v1186, 0
    %1211 = vmatpush.bf16.xpose.msra.mxu0 0
    %1212 = vmatpush.bf16.xpose.msra.mxu0 0
    %1213 = vmatpush.bf16.xpose.msra.mxu0 0
    %1214 = vmatpush.bf16.xpose.msra.mxu0 0
    %1215 = vmatpush.bf16.xpose.msra.mxu0 %v1209
    %1216 = vmatpush.bf16.xpose.msra.mxu0 %v1206
    %1217 = vmatpush.bf16.xpose.msra.mxu0 %v1203
    %1218 = vmatpush.bf16.xpose.msra.mxu0 %v1200
    %1219 = vmatmul.bf16.gmra.mxu0 %v1188
    %v1220 = vpop.f32.mrf.mxu0
    %v1221 = vadd.f32 0.0, %v1220
    %v1222 = vpop.f32.mrf.mxu0
    %v1223 = vadd.f32 0.0, %v1222
    %1224 = vmatmul.bf16.gmra.mxu0 %v1191
    %v1225 = vpop.f32.mrf.mxu0
    %v1226 = vadd.f32 0.0, %v1225
    %v1227 = vpop.f32.mrf.mxu0
    %v1228 = vadd.f32 0.0, %v1227
    %1229 = vmatmul.bf16.gmra.mxu0 %v1194
    %v1230 = vpop.f32.mrf.mxu0
    %v1231 = vadd.f32 0.0, %v1230
    %v1232 = vpop.f32.mrf.mxu0
    %v1233 = vadd.f32 0.0, %v1232
    %1234 = vmatmul.bf16.gmra.mxu0 %v1197
    %v1235 = vpop.f32.mrf.mxu0
    %v1236 = vadd.f32 0.0, %v1235
    %v1237 = vpop.f32.mrf.mxu0
    %v1238 = vadd.f32 0.0, %v1237
    %1239 = vdwg.mxu0
    %v1240 = vmul.f32 %v1221, 0.125
    %v1241 = vmul.f32 %v1223, 0.125
    %v1242 = vmul.f32 %v1226, 0.125
    %v1243 = vmul.f32 %v1228, 0.125
    %v1244 = vmul.f32 %v1231, 0.125
    %v1245 = vmul.f32 %v1233, 0.125
    %v1246 = vmul.f32 %v1236, 0.125
    %v1247 = vmul.f32 %v1238, 0.125
    %v1248 = vadd.f32 %v1240, %v941
    %v1249 = vadd.f32 %v1241, %v942
    %v1250 = vadd.f32 %v1242, %v943
    %v1251 = vadd.f32 %v1243, %v944
    %v1252 = vadd.f32 %v1244, %v945
    %v1253 = vadd.f32 %v1245, %v946
    %v1254 = vadd.f32 %v1246, %v947
    %v1255 = vadd.f32 %v1247, %v948
    %v1256 = vsel %vm394, %v1248, -inf
    %1257 = vmax.xlane.f32.xlu0 %v1256
    %v1258 = vpop.xlane.xlu0 %1257
    %v1259 = vsel %vm394, %v1249, -inf
    %1260 = vmax.xlane.f32.xlu0 %v1259
    %v1261 = vpop.xlane.xlu0 %1260
    %v1262 = vsel %vm394, %v1250, -inf
    %1263 = vmax.xlane.f32.xlu0 %v1262
    %v1264 = vpop.xlane.xlu0 %1263
    %v1265 = vsel %vm394, %v1251, -inf
    %1266 = vmax.xlane.f32.xlu0 %v1265
    %v1267 = vpop.xlane.xlu0 %1266
    %v1268 = vsel %vm394, %v1252, -inf
    %1269 = vmax.xlane.f32.xlu0 %v1268
    %v1270 = vpop.xlane.xlu0 %1269
    %v1271 = vsel %vm394, %v1253, -inf
    %1272 = vmax.xlane.f32.xlu0 %v1271
    %v1273 = vpop.xlane.xlu0 %1272
    %v1274 = vsel %vm394, %v1254, -inf
    %1275 = vmax.xlane.f32.xlu0 %v1274
    %v1276 = vpop.xlane.xlu0 %1275
    %v1277 = vsel %vm394, %v1255, -inf
    %1278 = vmax.xlane.f32.xlu0 %v1277
    %v1279 = vpop.xlane.xlu0 %1278
    %v1280 = vsub.f32 %v1248, %v1258
    %v1281 = vsub.f32 %v1249, %v1261
    %v1282 = vsub.f32 %v1250, %v1264
    %v1283 = vsub.f32 %v1251, %v1267
    %v1284 = vsub.f32 %v1252, %v1270
    %v1285 = vsub.f32 %v1253, %v1273
    %v1286 = vsub.f32 %v1254, %v1276
    %v1287 = vsub.f32 %v1255, %v1279
    %v1288 = vmul.f32 %v1280, 1.442695
    %v1289 = vpow.pop %v1288
    %v1290 = vmul.f32 %v1281, 1.442695
    %v1291 = vpow.pop %v1290
    %v1292 = vmul.f32 %v1282, 1.442695
    %v1293 = vpow.pop %v1292
    %v1294 = vmul.f32 %v1283, 1.442695
    %v1295 = vpow.pop %v1294
    %v1296 = vmul.f32 %v1284, 1.442695
    %v1297 = vpow.pop %v1296
    %v1298 = vmul.f32 %v1285, 1.442695
    %v1299 = vpow.pop %v1298
    %v1300 = vmul.f32 %v1286, 1.442695
    %v1301 = vpow.pop %v1300
    %v1302 = vmul.f32 %v1287, 1.442695
    %v1303 = vpow.pop %v1302
    %v1304 = vsel %vm394, %v1289, 0.0
    %1305 = vadd.xlane.f32.xlu0 %v1304
    %v1306 = vpop.xlane.xlu0 %1305
    %v1307 = vsel %vm394, %v1291, 0.0
    %1308 = vadd.xlane.f32.xlu0 %v1307
    %v1309 = vpop.xlane.xlu0 %1308
    %v1310 = vsel %vm394, %v1293, 0.0
    %1311 = vadd.xlane.f32.xlu0 %v1310
    %v1312 = vpop.xlane.xlu0 %1311
    %v1313 = vsel %vm394, %v1295, 0.0
    %1314 = vadd.xlane.f32.xlu0 %v1313
    %v1315 = vpop.xlane.xlu0 %1314
    %v1316 = vsel %vm394, %v1297, 0.0
    %1317 = vadd.xlane.f32.xlu0 %v1316
    %v1318 = vpop.xlane.xlu0 %1317
    %v1319 = vsel %vm394, %v1299, 0.0
    %1320 = vadd.xlane.f32.xlu0 %v1319
    %v1321 = vpop.xlane.xlu0 %1320
    %v1322 = vsel %vm394, %v1301, 0.0
    %1323 = vadd.xlane.f32.xlu0 %v1322
    %v1324 = vpop.xlane.xlu0 %1323
    %v1325 = vsel %vm394, %v1303, 0.0
    %1326 = vadd.xlane.f32.xlu0 %v1325
    %v1327 = vpop.xlane.xlu0 %1326
    %v1328 = vrcp.pop %v1306
    %v1329 = vrcp.pop %v1309
    %v1330 = vrcp.pop %v1312
    %v1331 = vrcp.pop %v1315
    %v1332 = vrcp.pop %v1318
    %v1333 = vrcp.pop %v1321
    %v1334 = vrcp.pop %v1324
    %v1335 = vrcp.pop %v1327
    %v1336 = vmul.f32 %v1289, %v1328
    %v1337 = vmul.f32 %v1291, %v1329
    %v1338 = vmul.f32 %v1293, %v1330
    %v1339 = vmul.f32 %v1295, %v1331
    %v1340 = vmul.f32 %v1297, %v1332
    %v1341 = vmul.f32 %v1299, %v1333
    %v1342 = vmul.f32 %v1301, %v1334
    %v1343 = vmul.f32 %v1303, %v1335
    %v1344 = vpack.c.bf16 %v1337, %v1336
    %v1345 = vpack.c.bf16 %v1339, %v1338
    %v1346 = vpack.c.bf16 %v1341, %v1340
    %v1347 = vpack.c.bf16 %v1343, %v1342
    %1352 = vrot.lane.b32.xlu0 %v957, 64
    %v1353 = vpop.permute.xlu0 %1352
    %1354 = vrot.lane.b32.xlu0 %v958, 64
    %v1355 = vpop.permute.xlu0 %1354
    %1356 = vrot.lane.b32.xlu0 %v959, 64
    %v1357 = vpop.permute.xlu0 %1356
    %1358 = vrot.lane.b32.xlu0 %v960, 64
    %v1359 = vpop.permute.xlu0 %1358
    %v1365 = vsel %vm394, %v1344, 0
    %v1368 = vsel %vm394, %v1345, 0
    %v1371 = vsel %vm394, %v1346, 0
    %v1374 = vsel %vm394, %v1347, 0
    %1376 = vmatpush.bf16.msra.mxu0 0
    %1377 = vmatpush.bf16.msra.mxu0 0
    %1378 = vmatpush.bf16.msra.mxu0 0
    %1379 = vmatpush.bf16.msra.mxu0 0
    %1380 = vmatpush.bf16.msra.mxu0 %v1359
    %1381 = vmatpush.bf16.msra.mxu0 %v1357
    %1382 = vmatpush.bf16.msra.mxu0 %v1355
    %1383 = vmatpush.bf16.msra.mxu0 %v1353
    %1384 = vmatmul.bf16.gmra.mxu0 %v1365
    %v1385 = vpop.f32.mrf.mxu0
    %v1386 = vadd.f32 0.0, %v1385
    %v1387 = vpop.f32.mrf.mxu0
    %v1388 = vadd.f32 0.0, %v1387
    %1389 = vmatmul.bf16.gmra.mxu0 %v1368
    %v1390 = vpop.f32.mrf.mxu0
    %v1391 = vadd.f32 0.0, %v1390
    %v1392 = vpop.f32.mrf.mxu0
    %v1393 = vadd.f32 0.0, %v1392
    %1394 = vmatmul.bf16.gmra.mxu0 %v1371
    %v1395 = vpop.f32.mrf.mxu0
    %v1396 = vadd.f32 0.0, %v1395
    %v1397 = vpop.f32.mrf.mxu0
    %v1398 = vadd.f32 0.0, %v1397
    %1399 = vmatmul.bf16.gmra.mxu0 %v1374
    %v1400 = vpop.f32.mrf.mxu0
    %v1401 = vadd.f32 0.0, %v1400
    %v1402 = vpop.f32.mrf.mxu0
    %v1403 = vadd.f32 0.0, %v1402
    %1404 = vdwg.mxu0
    %1413 = vrot.lane.b32.xlu0 %v1386, 64
    %v1414 = vpop.permute.xlu0 %1413
    %1415 = vrot.lane.b32.xlu0 %v1388, 64
    %v1416 = vpop.permute.xlu0 %1415
    %1417 = vrot.lane.b32.xlu0 %v1391, 64
    %v1418 = vpop.permute.xlu0 %1417
    %1419 = vrot.lane.b32.xlu0 %v1393, 64
    %v1420 = vpop.permute.xlu0 %1419
    %1421 = vrot.lane.b32.xlu0 %v1396, 64
    %v1422 = vpop.permute.xlu0 %1421
    %1423 = vrot.lane.b32.xlu0 %v1398, 64
    %v1424 = vpop.permute.xlu0 %1423
    %1425 = vrot.lane.b32.xlu0 %v1401, 64
    %v1426 = vpop.permute.xlu0 %1425
    %1427 = vrot.lane.b32.xlu0 %v1403, 64
    %v1428 = vpop.permute.xlu0 %1427
    %v1437 = vsel %vm394, %v1144, %v1414
    %v1438 = vsel %vm394, %v1146, %v1416
    %v1439 = vsel %vm394, %v1149, %v1418
    %v1440 = vsel %vm394, %v1151, %v1420
    %v1441 = vsel %vm394, %v1154, %v1422
    %v1442 = vsel %vm394, %v1156, %v1424
    %v1443 = vsel %vm394, %v1159, %v1426
    %v1444 = vsel %vm394, %v1161, %v1428
    %v1445 = vpack.c.bf16 %v1438, %v1437
    %v1446 = vpack.c.bf16 %v1440, %v1439
    %v1447 = vpack.c.bf16 %v1442, %v1441
    %v1448 = vpack.c.bf16 %v1444, %v1443
    %v1449 = vld [vmem:[#allocation5] sm:$0xf]
    %v1450 = vld [vmem:[#allocation5 + $0x4] sm:$0xf]
    %v1451 = vld [vmem:[#allocation5 + $0x8] sm:$0xf]
    %v1452 = vld [vmem:[#allocation5 + $0xc] sm:$0xf]
    %v1453 = vld [vmem:[#allocation5 + $0x10] sm:$0xf]
    %v1454 = vld [vmem:[#allocation5 + $0x14] sm:$0xf]
    %v1455 = vld [vmem:[#allocation5 + $0x18] sm:$0xf]
    %v1456 = vld [vmem:[#allocation5 + $0x1c] sm:$0xf]
    %v1457 = vld [vmem:[#allocation5 + $0x20] sm:$0xf]
    %v1458 = vld [vmem:[#allocation5 + $0x24] sm:$0xf]
    %v1459 = vld [vmem:[#allocation5 + $0x28] sm:$0xf]
    %v1460 = vld [vmem:[#allocation5 + $0x2c] sm:$0xf]
    %v1461 = vld [vmem:[#allocation5 + $0x30] sm:$0xf]
    %v1462 = vld [vmem:[#allocation5 + $0x34] sm:$0xf]
    %v1463 = vld [vmem:[#allocation5 + $0x38] sm:$0xf]
    %v1464 = vld [vmem:[#allocation5 + $0x3c] sm:$0xf]
    %v1465 = vld [vmem:[%s29] sm:$0x1]
    %v1467 = vperm.slane %v1465, 0
    %v1485 = vunpack.c.l.b16 %v1449
    %v1486 = vunpack.c.l.b16 %v1450
    %v1487 = vunpack.c.l.b16 %v1451
    %v1488 = vunpack.c.l.b16 %v1452
    %v1489 = vunpack.c.l.b16 %v1453
    %v1490 = vunpack.c.l.b16 %v1454
    %v1491 = vunpack.c.l.b16 %v1455
    %v1492 = vunpack.c.l.b16 %v1456
    %v1493 = vunpack.c.l.b16 %v1457
    %v1494 = vunpack.c.l.b16 %v1458
    %v1495 = vunpack.c.l.b16 %v1459
    %v1496 = vunpack.c.l.b16 %v1460
    %v1497 = vunpack.c.l.b16 %v1461
    %v1498 = vunpack.c.l.b16 %v1462
    %v1499 = vunpack.c.l.b16 %v1463
    %v1500 = vunpack.c.l.b16 %v1464
    %v1501 = vpack.c.b16 %v1486, %v1485
    %v1502 = vpack.c.b16 %v1488, %v1487
    %v1503 = vpack.c.b16 %v1490, %v1489
    %v1504 = vpack.c.b16 %v1492, %v1491
    %v1505 = vpack.c.b16 %v1494, %v1493
    %v1506 = vpack.c.b16 %v1496, %v1495
    %v1507 = vpack.c.b16 %v1498, %v1497
    %v1508 = vpack.c.b16 %v1500, %v1499
    %1517 = vmatpush.bf16.msra.mxu0 %v1508
    %1518 = vmatpush.bf16.msra.mxu0 %v1507
    %1519 = vmatpush.bf16.msra.mxu0 %v1506
    %1520 = vmatpush.bf16.msra.mxu0 %v1505
    %1521 = vmatpush.bf16.msra.mxu0 %v1504
    %1522 = vmatpush.bf16.msra.mxu0 %v1503
    %1523 = vmatpush.bf16.msra.mxu0 %v1502
    %1524 = vmatpush.bf16.msra.mxu0 %v1501
    %1525 = vmatmul.bf16.gmra.mxu0 %v1445
    %v1526 = vpop.f32.mrf.mxu0
    %v1527 = vadd.f32 %v1467, %v1526
    %v1528 = vpop.f32.mrf.mxu0
    %v1529 = vadd.f32 %v1467, %v1528
    %1530 = vmatmul.bf16.gmra.mxu0 %v1446
    %v1531 = vpop.f32.mrf.mxu0
    %v1532 = vadd.f32 %v1467, %v1531
    %v1533 = vpop.f32.mrf.mxu0
    %v1534 = vadd.f32 %v1467, %v1533
    %1535 = vmatmul.bf16.gmra.mxu0 %v1447
    %v1536 = vpop.f32.mrf.mxu0
    %v1537 = vadd.f32 %v1467, %v1536
    %v1538 = vpop.f32.mrf.mxu0
    %v1539 = vadd.f32 %v1467, %v1538
    %1540 = vmatmul.bf16.gmra.mxu0 %v1448
    %v1541 = vpop.f32.mrf.mxu0
    %v1542 = vadd.f32 %v1467, %v1541
    %v1543 = vpop.f32.mrf.mxu0
    %v1544 = vadd.f32 %v1467, %v1543
    %1545 = vdwg.mxu0
    %v1546 = vadd.f32 %v619, %v1527
    %v1547 = vadd.f32 %v620, %v1529
    %v1548 = vadd.f32 %v621, %v1532
    %v1549 = vadd.f32 %v622, %v1534
    %v1550 = vadd.f32 %v623, %v1537
    %v1551 = vadd.f32 %v624, %v1539
    %v1552 = vadd.f32 %v625, %v1542
    %v1553 = vadd.f32 %v626, %v1544
    %1554 = vadd.xlane.f32.xlu0 %v1546
    %v1555 = vpop.xlane.xlu0 %1554
    %1556 = vadd.xlane.f32.xlu0 %v1547
    %v1557 = vpop.xlane.xlu0 %1556
    %1558 = vadd.xlane.f32.xlu0 %v1548
    %v1559 = vpop.xlane.xlu0 %1558
    %1560 = vadd.xlane.f32.xlu0 %v1549
    %v1561 = vpop.xlane.xlu0 %1560
    %1562 = vadd.xlane.f32.xlu0 %v1550
    %v1563 = vpop.xlane.xlu0 %1562
    %1564 = vadd.xlane.f32.xlu0 %v1551
    %v1565 = vpop.xlane.xlu0 %1564
    %1566 = vadd.xlane.f32.xlu0 %v1552
    %v1567 = vpop.xlane.xlu0 %1566
    %1568 = vadd.xlane.f32.xlu0 %v1553
    %v1569 = vpop.xlane.xlu0 %1568
    %v1570 = vmul.f32 %v1555, %v458
    %v1571 = vmul.f32 %v1557, %v458
    %v1572 = vmul.f32 %v1559, %v458
    %v1573 = vmul.f32 %v1561, %v458
    %v1574 = vmul.f32 %v1563, %v458
    %v1575 = vmul.f32 %v1565, %v458
    %v1576 = vmul.f32 %v1567, %v458
    %v1577 = vmul.f32 %v1569, %v458
    %v1578 = vsub.f32 %v1546, %v1570
    %v1579 = vsub.f32 %v1547, %v1571
    %v1580 = vsub.f32 %v1548, %v1572
    %v1581 = vsub.f32 %v1549, %v1573
    %v1582 = vsub.f32 %v1550, %v1574
    %v1583 = vsub.f32 %v1551, %v1575
    %v1584 = vsub.f32 %v1552, %v1576
    %v1585 = vsub.f32 %v1553, %v1577
    %v1586 = vmul.f32 %v1578, %v1578
    %v1587 = vmul.f32 %v1579, %v1579
    %v1588 = vmul.f32 %v1580, %v1580
    %v1589 = vmul.f32 %v1581, %v1581
    %v1590 = vmul.f32 %v1582, %v1582
    %v1591 = vmul.f32 %v1583, %v1583
    %v1592 = vmul.f32 %v1584, %v1584
    %v1593 = vmul.f32 %v1585, %v1585
    %1594 = vadd.xlane.f32.xlu0 %v1586
    %v1595 = vpop.xlane.xlu0 %1594
    %1596 = vadd.xlane.f32.xlu0 %v1587
    %v1597 = vpop.xlane.xlu0 %1596
    %1598 = vadd.xlane.f32.xlu0 %v1588
    %v1599 = vpop.xlane.xlu0 %1598
    %1600 = vadd.xlane.f32.xlu0 %v1589
    %v1601 = vpop.xlane.xlu0 %1600
    %1602 = vadd.xlane.f32.xlu0 %v1590
    %v1603 = vpop.xlane.xlu0 %1602
    %1604 = vadd.xlane.f32.xlu0 %v1591
    %v1605 = vpop.xlane.xlu0 %1604
    %1606 = vadd.xlane.f32.xlu0 %v1592
    %v1607 = vpop.xlane.xlu0 %1606
    %1608 = vadd.xlane.f32.xlu0 %v1593
    %v1609 = vpop.xlane.xlu0 %1608
    %v1610 = vmul.f32 %v1595, %v458
    %v1611 = vmul.f32 %v1597, %v458
    %v1612 = vmul.f32 %v1599, %v458
    %v1613 = vmul.f32 %v1601, %v458
    %v1614 = vmul.f32 %v1603, %v458
    %v1615 = vmul.f32 %v1605, %v458
    %v1616 = vmul.f32 %v1607, %v458
    %v1617 = vmul.f32 %v1609, %v458
    %v1618 = vadd.f32 %v1610, 1e-12
    %v1619 = vadd.f32 %v1611, 1e-12
    %v1620 = vadd.f32 %v1612, 1e-12
    %v1621 = vadd.f32 %v1613, 1e-12
    %v1622 = vadd.f32 %v1614, 1e-12
    %v1623 = vadd.f32 %v1615, 1e-12
    %v1624 = vadd.f32 %v1616, 1e-12
    %v1625 = vadd.f32 %v1617, 1e-12
    %v1626 = vrsqrt.pop %v1618
    %v1627 = vmul.f32 %v1626, %v1618
    %v1628 = vmul.f32 %v1627, %v1626
    %v1629 = vmul.f32 0.5, %v1628
    %v1630 = vsub.f32 1.5, %v1629
    %v1631 = vmul.f32 %v1626, %v1630
    %vm1632 = vweird.f32 %v1618
    %vm1633 = vweird.f32 %v1626
    %vm1634 = vmor %vm1632, %vm1633
    %v1635 = vsel %vm1634, %v1626, %v1631
    %v1636 = vrsqrt.pop %v1619
    %v1637 = vmul.f32 %v1636, %v1619
    %v1638 = vmul.f32 %v1637, %v1636
    %v1639 = vmul.f32 0.5, %v1638
    %v1640 = vsub.f32 1.5, %v1639
    %v1641 = vmul.f32 %v1636, %v1640
    %vm1642 = vweird.f32 %v1619
    %vm1643 = vweird.f32 %v1636
    %vm1644 = vmor %vm1642, %vm1643
    %v1645 = vsel %vm1644, %v1636, %v1641
    %v1646 = vrsqrt.pop %v1620
    %v1647 = vmul.f32 %v1646, %v1620
    %v1648 = vmul.f32 %v1647, %v1646
    %v1649 = vmul.f32 0.5, %v1648
    %v1650 = vsub.f32 1.5, %v1649
    %v1651 = vmul.f32 %v1646, %v1650
    %vm1652 = vweird.f32 %v1620
    %vm1653 = vweird.f32 %v1646
    %vm1654 = vmor %vm1652, %vm1653
    %v1655 = vsel %vm1654, %v1646, %v1651
    %v1656 = vrsqrt.pop %v1621
    %v1657 = vmul.f32 %v1656, %v1621
    %v1658 = vmul.f32 %v1657, %v1656
    %v1659 = vmul.f32 0.5, %v1658
    %v1660 = vsub.f32 1.5, %v1659
    %v1661 = vmul.f32 %v1656, %v1660
    %vm1662 = vweird.f32 %v1621
    %vm1663 = vweird.f32 %v1656
    %vm1664 = vmor %vm1662, %vm1663
    %v1665 = vsel %vm1664, %v1656, %v1661
    %v1666 = vrsqrt.pop %v1622
    %v1667 = vmul.f32 %v1666, %v1622
    %v1668 = vmul.f32 %v1667, %v1666
    %v1669 = vmul.f32 0.5, %v1668
    %v1670 = vsub.f32 1.5, %v1669
    %v1671 = vmul.f32 %v1666, %v1670
    %vm1672 = vweird.f32 %v1622
    %vm1673 = vweird.f32 %v1666
    %vm1674 = vmor %vm1672, %vm1673
    %v1675 = vsel %vm1674, %v1666, %v1671
    %v1676 = vrsqrt.pop %v1623
    %v1677 = vmul.f32 %v1676, %v1623
    %v1678 = vmul.f32 %v1677, %v1676
    %v1679 = vmul.f32 0.5, %v1678
    %v1680 = vsub.f32 1.5, %v1679
    %v1681 = vmul.f32 %v1676, %v1680
    %vm1682 = vweird.f32 %v1623
    %vm1683 = vweird.f32 %v1676
    %vm1684 = vmor %vm1682, %vm1683
    %v1685 = vsel %vm1684, %v1676, %v1681
    %v1686 = vrsqrt.pop %v1624
    %v1687 = vmul.f32 %v1686, %v1624
    %v1688 = vmul.f32 %v1687, %v1686
    %v1689 = vmul.f32 0.5, %v1688
    %v1690 = vsub.f32 1.5, %v1689
    %v1691 = vmul.f32 %v1686, %v1690
    %vm1692 = vweird.f32 %v1624
    %vm1693 = vweird.f32 %v1686
    %vm1694 = vmor %vm1692, %vm1693
    %v1695 = vsel %vm1694, %v1686, %v1691
    %v1696 = vrsqrt.pop %v1625
    %v1697 = vmul.f32 %v1696, %v1625
    %v1698 = vmul.f32 %v1697, %v1696
    %v1699 = vmul.f32 0.5, %v1698
    %v1700 = vsub.f32 1.5, %v1699
    %v1701 = vmul.f32 %v1696, %v1700
    %vm1702 = vweird.f32 %v1625
    %vm1703 = vweird.f32 %v1696
    %vm1704 = vmor %vm1702, %vm1703
    %v1705 = vsel %vm1704, %v1696, %v1701
    %v1706 = vmul.f32 %v1578, %v1635
    %v1707 = vmul.f32 %v1579, %v1645
    %v1708 = vmul.f32 %v1580, %v1655
    %v1709 = vmul.f32 %v1581, %v1665
    %v1710 = vmul.f32 %v1582, %v1675
    %v1711 = vmul.f32 %v1583, %v1685
    %v1712 = vmul.f32 %v1584, %v1695
    %v1713 = vmul.f32 %v1585, %v1705
    %v1714 = vld [vmem:[%s31] sm:$0x1]
    %v1716 = vperm.slane %v1714, 0
    %v1718 = vmul.f32 %v1706, %v1716
    %v1719 = vmul.f32 %v1707, %v1716
    %v1720 = vmul.f32 %v1708, %v1716
    %v1721 = vmul.f32 %v1709, %v1716
    %v1722 = vmul.f32 %v1710, %v1716
    %v1723 = vmul.f32 %v1711, %v1716
    %v1724 = vmul.f32 %v1712, %v1716
    %v1725 = vmul.f32 %v1713, %v1716
    %v1726 = vld [vmem:[%s33] sm:$0x1]
    %v1728 = vperm.slane %v1726, 0
    %v1730 = vadd.f32 %v1718, %v1728
    %v1731 = vadd.f32 %v1719, %v1728
    %v1732 = vadd.f32 %v1720, %v1728
    %v1733 = vadd.f32 %v1721, %v1728
    %v1734 = vadd.f32 %v1722, %v1728
    %v1735 = vadd.f32 %v1723, %v1728
    %v1736 = vadd.f32 %v1724, %v1728
    %v1737 = vadd.f32 %v1725, %v1728
    %v1738 = vpack.c.bf16 %v1731, %v1730
    %v1739 = vpack.c.bf16 %v1733, %v1732
    %v1740 = vpack.c.bf16 %v1735, %v1734
    %v1741 = vpack.c.bf16 %v1737, %v1736
    %v1742 = vld [vmem:[%s35] sm:$0xff]
    %v1743 = vld [vmem:[%s35 + $0x8] sm:$0xff]
    %v1744 = vld [vmem:[%s35 + $0x10] sm:$0xff]
    %v1745 = vld [vmem:[%s35 + $0x18] sm:$0xff]
    %v1746 = vld [vmem:[%s35 + $0x20] sm:$0xff]
    %v1747 = vld [vmem:[%s35 + $0x28] sm:$0xff]
    %v1748 = vld [vmem:[%s35 + $0x30] sm:$0xff]
    %v1749 = vld [vmem:[%s35 + $0x38] sm:$0xff]
    %v1750 = vld [vmem:[%s35 + $0x40] sm:$0xff]
    %v1751 = vld [vmem:[%s35 + $0x48] sm:$0xff]
    %v1752 = vld [vmem:[%s35 + $0x50] sm:$0xff]
    %v1753 = vld [vmem:[%s35 + $0x58] sm:$0xff]
    %v1754 = vld [vmem:[%s35 + $0x60] sm:$0xff]
    %v1755 = vld [vmem:[%s35 + $0x68] sm:$0xff]
    %v1756 = vld [vmem:[%s35 + $0x70] sm:$0xff]
    %v1757 = vld [vmem:[%s35 + $0x78] sm:$0xff]
    %v1758 = vld [vmem:[%s37] sm:$0x3]
    %v1760 = vperm.slane %v1758, 0
    %v1761 = vperm.slane %v1758, 1
    %v1780 = vunpack.c.l.b16 %v1742
    %v1781 = vunpack.c.h.b16 %v1742
    %v1782 = vunpack.c.l.b16 %v1743
    %v1783 = vunpack.c.h.b16 %v1743
    %v1784 = vunpack.c.l.b16 %v1744
    %v1785 = vunpack.c.h.b16 %v1744
    %v1786 = vunpack.c.l.b16 %v1745
    %v1787 = vunpack.c.h.b16 %v1745
    %v1788 = vunpack.c.l.b16 %v1746
    %v1789 = vunpack.c.h.b16 %v1746
    %v1790 = vunpack.c.l.b16 %v1747
    %v1791 = vunpack.c.h.b16 %v1747
    %v1792 = vunpack.c.l.b16 %v1748
    %v1793 = vunpack.c.h.b16 %v1748
    %v1794 = vunpack.c.l.b16 %v1749
    %v1795 = vunpack.c.h.b16 %v1749
    %v1796 = vunpack.c.l.b16 %v1750
    %v1797 = vunpack.c.h.b16 %v1750
    %v1798 = vunpack.c.l.b16 %v1751
    %v1799 = vunpack.c.h.b16 %v1751
    %v1800 = vunpack.c.l.b16 %v1752
    %v1801 = vunpack.c.h.b16 %v1752
    %v1802 = vunpack.c.l.b16 %v1753
    %v1803 = vunpack.c.h.b16 %v1753
    %v1804 = vunpack.c.l.b16 %v1754
    %v1805 = vunpack.c.h.b16 %v1754
    %v1806 = vunpack.c.l.b16 %v1755
    %v1807 = vunpack.c.h.b16 %v1755
    %v1808 = vunpack.c.l.b16 %v1756
    %v1809 = vunpack.c.h.b16 %v1756
    %v1810 = vunpack.c.l.b16 %v1757
    %v1811 = vunpack.c.h.b16 %v1757
    %v1812 = vpack.c.b16 %v1782, %v1780
    %v1813 = vpack.c.b16 %v1783, %v1781
    %v1814 = vpack.c.b16 %v1786, %v1784
    %v1815 = vpack.c.b16 %v1787, %v1785
    %v1816 = vpack.c.b16 %v1790, %v1788
    %v1817 = vpack.c.b16 %v1791, %v1789
    %v1818 = vpack.c.b16 %v1794, %v1792
    %v1819 = vpack.c.b16 %v1795, %v1793
    %v1820 = vpack.c.b16 %v1798, %v1796
    %v1821 = vpack.c.b16 %v1799, %v1797
    %v1822 = vpack.c.b16 %v1802, %v1800
    %v1823 = vpack.c.b16 %v1803, %v1801
    %v1824 = vpack.c.b16 %v1806, %v1804
    %v1825 = vpack.c.b16 %v1807, %v1805
    %v1826 = vpack.c.b16 %v1810, %v1808
    %v1827 = vpack.c.b16 %v1811, %v1809
    %1844 = vmatpush.bf16.msra.mxu0 %v1826
    %1845 = vmatpush.bf16.msra.mxu0 %v1824
    %1846 = vmatpush.bf16.msra.mxu0 %v1822
    %1847 = vmatpush.bf16.msra.mxu0 %v1820
    %1848 = vmatpush.bf16.msra.mxu0 %v1818
    %1849 = vmatpush.bf16.msra.mxu0 %v1816
    %1850 = vmatpush.bf16.msra.mxu0 %v1814
    %1851 = vmatpush.bf16.msra.mxu0 %v1812
    %1852 = vmatmul.bf16.gmra.mxu0 %v1738
    %v1853 = vpop.f32.mrf.mxu0
    %v1854 = vadd.f32 %v1760, %v1853
    %v1855 = vpop.f32.mrf.mxu0
    %v1856 = vadd.f32 %v1760, %v1855
    %1857 = vmatmul.bf16.gmra.mxu0 %v1739
    %v1858 = vpop.f32.mrf.mxu0
    %v1859 = vadd.f32 %v1760, %v1858
    %v1860 = vpop.f32.mrf.mxu0
    %v1861 = vadd.f32 %v1760, %v1860
    %1862 = vmatmul.bf16.gmra.mxu0 %v1740
    %v1863 = vpop.f32.mrf.mxu0
    %v1864 = vadd.f32 %v1760, %v1863
    %v1865 = vpop.f32.mrf.mxu0
    %v1866 = vadd.f32 %v1760, %v1865
    %1867 = vmatmul.bf16.gmra.mxu0 %v1741
    %v1868 = vpop.f32.mrf.mxu0
    %v1869 = vadd.f32 %v1760, %v1868
    %v1870 = vpop.f32.mrf.mxu0
    %v1871 = vadd.f32 %v1760, %v1870
    %1872 = vdwg.mxu0
    %1873 = vmatpush.bf16.msra.mxu0 %v1827
    %1874 = vmatpush.bf16.msra.mxu0 %v1825
    %1875 = vmatpush.bf16.msra.mxu0 %v1823
    %1876 = vmatpush.bf16.msra.mxu0 %v1821
    %1877 = vmatpush.bf16.msra.mxu0 %v1819
    %1878 = vmatpush.bf16.msra.mxu0 %v1817
    %1879 = vmatpush.bf16.msra.mxu0 %v1815
    %1880 = vmatpush.bf16.msra.mxu0 %v1813
    %1881 = vmatmul.bf16.gmra.mxu0 %v1738
    %v1882 = vpop.f32.mrf.mxu0
    %v1883 = vadd.f32 %v1761, %v1882
    %v1884 = vpop.f32.mrf.mxu0
    %v1885 = vadd.f32 %v1761, %v1884
    %1886 = vmatmul.bf16.gmra.mxu0 %v1739
    %v1887 = vpop.f32.mrf.mxu0
    %v1888 = vadd.f32 %v1761, %v1887
    %v1889 = vpop.f32.mrf.mxu0
    %v1890 = vadd.f32 %v1761, %v1889
    %1891 = vmatmul.bf16.gmra.mxu0 %v1740
    %v1892 = vpop.f32.mrf.mxu0
    %v1893 = vadd.f32 %v1761, %v1892
    %v1894 = vpop.f32.mrf.mxu0
    %v1895 = vadd.f32 %v1761, %v1894
    %1896 = vmatmul.bf16.gmra.mxu0 %v1741
    %v1897 = vpop.f32.mrf.mxu0
    %v1898 = vadd.f32 %v1761, %v1897
    %v1899 = vpop.f32.mrf.mxu0
    %v1900 = vadd.f32 %v1761, %v1899
    %1901 = vdwg.mxu0
    %v1902 = vmul.f32 %v1854, %v1854
    %v1903 = vmul.f32 %v1883, %v1883
    %v1904 = vmul.f32 %v1856, %v1856
    %v1905 = vmul.f32 %v1885, %v1885
    %v1906 = vmul.f32 %v1859, %v1859
    %v1907 = vmul.f32 %v1888, %v1888
    %v1908 = vmul.f32 %v1861, %v1861
    %v1909 = vmul.f32 %v1890, %v1890
    %v1910 = vmul.f32 %v1864, %v1864
    %v1911 = vmul.f32 %v1893, %v1893
    %v1912 = vmul.f32 %v1866, %v1866
    %v1913 = vmul.f32 %v1895, %v1895
    %v1914 = vmul.f32 %v1869, %v1869
    %v1915 = vmul.f32 %v1898, %v1898
    %v1916 = vmul.f32 %v1871, %v1871
    %v1917 = vmul.f32 %v1900, %v1900
    %v1918 = vmul.f32 %v1854, %v1902
    %v1919 = vmul.f32 %v1883, %v1903
    %v1920 = vmul.f32 %v1856, %v1904
    %v1921 = vmul.f32 %v1885, %v1905
    %v1922 = vmul.f32 %v1859, %v1906
    %v1923 = vmul.f32 %v1888, %v1907
    %v1924 = vmul.f32 %v1861, %v1908
    %v1925 = vmul.f32 %v1890, %v1909
    %v1926 = vmul.f32 %v1864, %v1910
    %v1927 = vmul.f32 %v1893, %v1911
    %v1928 = vmul.f32 %v1866, %v1912
    %v1929 = vmul.f32 %v1895, %v1913
    %v1930 = vmul.f32 %v1869, %v1914
    %v1931 = vmul.f32 %v1898, %v1915
    %v1932 = vmul.f32 %v1871, %v1916
    %v1933 = vmul.f32 %v1900, %v1917
    %v1934 = vmul.f32 %v1918, 0.044715
    %v1935 = vmul.f32 %v1919, 0.044715
    %v1936 = vmul.f32 %v1920, 0.044715
    %v1937 = vmul.f32 %v1921, 0.044715
    %v1938 = vmul.f32 %v1922, 0.044715
    %v1939 = vmul.f32 %v1923, 0.044715
    %v1940 = vmul.f32 %v1924, 0.044715
    %v1941 = vmul.f32 %v1925, 0.044715
    %v1942 = vmul.f32 %v1926, 0.044715
    %v1943 = vmul.f32 %v1927, 0.044715
    %v1944 = vmul.f32 %v1928, 0.044715
    %v1945 = vmul.f32 %v1929, 0.044715
    %v1946 = vmul.f32 %v1930, 0.044715
    %v1947 = vmul.f32 %v1931, 0.044715
    %v1948 = vmul.f32 %v1932, 0.044715
    %v1949 = vmul.f32 %v1933, 0.044715
    %v1950 = vadd.f32 %v1854, %v1934
    %v1951 = vadd.f32 %v1883, %v1935
    %v1952 = vadd.f32 %v1856, %v1936
    %v1953 = vadd.f32 %v1885, %v1937
    %v1954 = vadd.f32 %v1859, %v1938
    %v1955 = vadd.f32 %v1888, %v1939
    %v1956 = vadd.f32 %v1861, %v1940
    %v1957 = vadd.f32 %v1890, %v1941
    %v1958 = vadd.f32 %v1864, %v1942
    %v1959 = vadd.f32 %v1893, %v1943
    %v1960 = vadd.f32 %v1866, %v1944
    %v1961 = vadd.f32 %v1895, %v1945
    %v1962 = vadd.f32 %v1869, %v1946
    %v1963 = vadd.f32 %v1898, %v1947
    %v1964 = vadd.f32 %v1871, %v1948
    %v1965 = vadd.f32 %v1900, %v1949
    %v1966 = vmul.f32 %v1950, 0.7978846
    %v1967 = vmul.f32 %v1951, 0.7978846
    %v1968 = vmul.f32 %v1952, 0.7978846
    %v1969 = vmul.f32 %v1953, 0.7978846
    %v1970 = vmul.f32 %v1954, 0.7978846
    %v1971 = vmul.f32 %v1955, 0.7978846
    %v1972 = vmul.f32 %v1956, 0.7978846
    %v1973 = vmul.f32 %v1957, 0.7978846
    %v1974 = vmul.f32 %v1958, 0.7978846
    %v1975 = vmul.f32 %v1959, 0.7978846
    %v1976 = vmul.f32 %v1960, 0.7978846
    %v1977 = vmul.f32 %v1961, 0.7978846
    %v1978 = vmul.f32 %v1962, 0.7978846
    %v1979 = vmul.f32 %v1963, 0.7978846
    %v1980 = vmul.f32 %v1964, 0.7978846
    %v1981 = vmul.f32 %v1965, 0.7978846
    %v1982 = vtanh.pop %v1966
    %v1983 = vtanh.pop %v1967
    %v1984 = vtanh.pop %v1968
    %v1985 = vtanh.pop %v1969
    %v1986 = vtanh.pop %v1970
    %v1987 = vtanh.pop %v1971
    %v1988 = vtanh.pop %v1972
    %v1989 = vtanh.pop %v1973
    %v1990 = vtanh.pop %v1974
    %v1991 = vtanh.pop %v1975
    %v1992 = vtanh.pop %v1976
    %v1993 = vtanh.pop %v1977
    %v1994 = vtanh.pop %v1978
    %v1995 = vtanh.pop %v1979
    %v1996 = vtanh.pop %v1980
    %v1997 = vtanh.pop %v1981
    %v1998 = vadd.f32 %v1982, 1.0
    %v1999 = vadd.f32 %v1983, 1.0
    %v2000 = vadd.f32 %v1984, 1.0
    %v2001 = vadd.f32 %v1985, 1.0
    %v2002 = vadd.f32 %v1986, 1.0
    %v2003 = vadd.f32 %v1987, 1.0
    %v2004 = vadd.f32 %v1988, 1.0
    %v2005 = vadd.f32 %v1989, 1.0
    %v2006 = vadd.f32 %v1990, 1.0
    %v2007 = vadd.f32 %v1991, 1.0
    %v2008 = vadd.f32 %v1992, 1.0
    %v2009 = vadd.f32 %v1993, 1.0
    %v2010 = vadd.f32 %v1994, 1.0
    %v2011 = vadd.f32 %v1995, 1.0
    %v2012 = vadd.f32 %v1996, 1.0
    %v2013 = vadd.f32 %v1997, 1.0
    %v2014 = vmul.f32 %v1998, 0.5
    %v2015 = vmul.f32 %v1999, 0.5
    %v2016 = vmul.f32 %v2000, 0.5
    %v2017 = vmul.f32 %v2001, 0.5
    %v2018 = vmul.f32 %v2002, 0.5
    %v2019 = vmul.f32 %v2003, 0.5
    %v2020 = vmul.f32 %v2004, 0.5
    %v2021 = vmul.f32 %v2005, 0.5
    %v2022 = vmul.f32 %v2006, 0.5
    %v2023 = vmul.f32 %v2007, 0.5
    %v2024 = vmul.f32 %v2008, 0.5
    %v2025 = vmul.f32 %v2009, 0.5
    %v2026 = vmul.f32 %v2010, 0.5
    %v2027 = vmul.f32 %v2011, 0.5
    %v2028 = vmul.f32 %v2012, 0.5
    %v2029 = vmul.f32 %v2013, 0.5
    %v2030 = vmul.f32 %v1854, %v2014
    %v2031 = vmul.f32 %v1883, %v2015
    %v2032 = vmul.f32 %v1856, %v2016
    %v2033 = vmul.f32 %v1885, %v2017
    %v2034 = vmul.f32 %v1859, %v2018
    %v2035 = vmul.f32 %v1888, %v2019
    %v2036 = vmul.f32 %v1861, %v2020
    %v2037 = vmul.f32 %v1890, %v2021
    %v2038 = vmul.f32 %v1864, %v2022
    %v2039 = vmul.f32 %v1893, %v2023
    %v2040 = vmul.f32 %v1866, %v2024
    %v2041 = vmul.f32 %v1895, %v2025
    %v2042 = vmul.f32 %v1869, %v2026
    %v2043 = vmul.f32 %v1898, %v2027
    %v2044 = vmul.f32 %v1871, %v2028
    %v2045 = vmul.f32 %v1900, %v2029
    %v2046 = vpack.c.bf16 %v2032, %v2030
    %v2047 = vpack.c.bf16 %v2033, %v2031
    %v2048 = vpack.c.bf16 %v2036, %v2034
    %v2049 = vpack.c.bf16 %v2037, %v2035
    %v2050 = vpack.c.bf16 %v2040, %v2038
    %v2051 = vpack.c.bf16 %v2041, %v2039
    %v2052 = vpack.c.bf16 %v2044, %v2042
    %v2053 = vpack.c.bf16 %v2045, %v2043
    %v2054 = vld [vmem:[#allocation7] sm:$0xf]
    %v2055 = vld [vmem:[#allocation7 + $0x4] sm:$0xf]
    %v2056 = vld [vmem:[#allocation7 + $0x8] sm:$0xf]
    %v2057 = vld [vmem:[#allocation7 + $0xc] sm:$0xf]
    %v2058 = vld [vmem:[#allocation7 + $0x10] sm:$0xf]
    %v2059 = vld [vmem:[#allocation7 + $0x14] sm:$0xf]
    %v2060 = vld [vmem:[#allocation7 + $0x18] sm:$0xf]
    %v2061 = vld [vmem:[#allocation7 + $0x1c] sm:$0xf]
    %v2062 = vld [vmem:[#allocation7 + $0x20] sm:$0xf]
    %v2063 = vld [vmem:[#allocation7 + $0x24] sm:$0xf]
    %v2064 = vld [vmem:[#allocation7 + $0x28] sm:$0xf]
    %v2065 = vld [vmem:[#allocation7 + $0x2c] sm:$0xf]
    %v2066 = vld [vmem:[#allocation7 + $0x30] sm:$0xf]
    %v2067 = vld [vmem:[#allocation7 + $0x34] sm:$0xf]
    %v2068 = vld [vmem:[#allocation7 + $0x38] sm:$0xf]
    %v2069 = vld [vmem:[#allocation7 + $0x3c] sm:$0xf]
    %v2070 = vld [vmem:[#allocation7 + $0x40] sm:$0xf]
    %v2071 = vld [vmem:[#allocation7 + $0x44] sm:$0xf]
    %v2072 = vld [vmem:[#allocation7 + $0x48] sm:$0xf]
    %v2073 = vld [vmem:[#allocation7 + $0x4c] sm:$0xf]
    %v2074 = vld [vmem:[#allocation7 + $0x50] sm:$0xf]
    %v2075 = vld [vmem:[#allocation7 + $0x54] sm:$0xf]
    %v2076 = vld [vmem:[#allocation7 + $0x58] sm:$0xf]
    %v2077 = vld [vmem:[#allocation7 + $0x5c] sm:$0xf]
    %v2078 = vld [vmem:[#allocation7 + $0x60] sm:$0xf]
    %v2079 = vld [vmem:[#allocation7 + $0x64] sm:$0xf]
    %v2080 = vld [vmem:[#allocation7 + $0x68] sm:$0xf]
    %v2081 = vld [vmem:[#allocation7 + $0x6c] sm:$0xf]
    %v2082 = vld [vmem:[#allocation7 + $0x70] sm:$0xf]
    %v2083 = vld [vmem:[#allocation7 + $0x74] sm:$0xf]
    %v2084 = vld [vmem:[#allocation7 + $0x78] sm:$0xf]
    %v2085 = vld [vmem:[#allocation7 + $0x7c] sm:$0xf]
    %v2086 = vld [vmem:[%s41] sm:$0x1]
    %v2088 = vperm.slane %v2086, 0
    %v2122 = vunpack.c.l.b16 %v2054
    %v2123 = vunpack.c.l.b16 %v2055
    %v2124 = vunpack.c.l.b16 %v2056
    %v2125 = vunpack.c.l.b16 %v2057
    %v2126 = vunpack.c.l.b16 %v2058
    %v2127 = vunpack.c.l.b16 %v2059
    %v2128 = vunpack.c.l.b16 %v2060
    %v2129 = vunpack.c.l.b16 %v2061
    %v2130 = vunpack.c.l.b16 %v2062
    %v2131 = vunpack.c.l.b16 %v2063
    %v2132 = vunpack.c.l.b16 %v2064
    %v2133 = vunpack.c.l.b16 %v2065
    %v2134 = vunpack.c.l.b16 %v2066
    %v2135 = vunpack.c.l.b16 %v2067
    %v2136 = vunpack.c.l.b16 %v2068
    %v2137 = vunpack.c.l.b16 %v2069
    %v2138 = vunpack.c.l.b16 %v2070
    %v2139 = vunpack.c.l.b16 %v2071
    %v2140 = vunpack.c.l.b16 %v2072
    %v2141 = vunpack.c.l.b16 %v2073
    %v2142 = vunpack.c.l.b16 %v2074
    %v2143 = vunpack.c.l.b16 %v2075
    %v2144 = vunpack.c.l.b16 %v2076
    %v2145 = vunpack.c.l.b16 %v2077
    %v2146 = vunpack.c.l.b16 %v2078
    %v2147 = vunpack.c.l.b16 %v2079
    %v2148 = vunpack.c.l.b16 %v2080
    %v2149 = vunpack.c.l.b16 %v2081
    %v2150 = vunpack.c.l.b16 %v2082
    %v2151 = vunpack.c.l.b16 %v2083
    %v2152 = vunpack.c.l.b16 %v2084
    %v2153 = vunpack.c.l.b16 %v2085
    %v2154 = vpack.c.b16 %v2123, %v2122
    %v2155 = vpack.c.b16 %v2125, %v2124
    %v2156 = vpack.c.b16 %v2127, %v2126
    %v2157 = vpack.c.b16 %v2129, %v2128
    %v2158 = vpack.c.b16 %v2131, %v2130
    %v2159 = vpack.c.b16 %v2133, %v2132
    %v2160 = vpack.c.b16 %v2135, %v2134
    %v2161 = vpack.c.b16 %v2137, %v2136
    %v2162 = vpack.c.b16 %v2139, %v2138
    %v2163 = vpack.c.b16 %v2141, %v2140
    %v2164 = vpack.c.b16 %v2143, %v2142
    %v2165 = vpack.c.b16 %v2145, %v2144
    %v2166 = vpack.c.b16 %v2147, %v2146
    %v2167 = vpack.c.b16 %v2149, %v2148
    %v2168 = vpack.c.b16 %v2151, %v2150
    %v2169 = vpack.c.b16 %v2153, %v2152
    %2186 = vmatpush.bf16.msra.mxu0 %v2161
    %2187 = vmatpush.bf16.msra.mxu0 %v2160
    %2188 = vmatpush.bf16.msra.mxu0 %v2159
    %2189 = vmatpush.bf16.msra.mxu0 %v2158
    %2190 = vmatpush.bf16.msra.mxu0 %v2157
    %2191 = vmatpush.bf16.msra.mxu0 %v2156
    %2192 = vmatpush.bf16.msra.mxu0 %v2155
    %2193 = vmatpush.bf16.msra.mxu0 %v2154
    %2194 = vmatmul.bf16.gmra.mxu0 %v2046
    %v2195 = vpop.f32.mrf.mxu0
    %v2196 = vadd.f32 %v2088, %v2195
    %v2197 = vpop.f32.mrf.mxu0
    %v2198 = vadd.f32 %v2088, %v2197
    %2199 = vmatmul.bf16.gmra.mxu0 %v2048
    %v2200 = vpop.f32.mrf.mxu0
    %v2201 = vadd.f32 %v2088, %v2200
    %v2202 = vpop.f32.mrf.mxu0
    %v2203 = vadd.f32 %v2088, %v2202
    %2204 = vmatmul.bf16.gmra.mxu0 %v2050
    %v2205 = vpop.f32.mrf.mxu0
    %v2206 = vadd.f32 %v2088, %v2205
    %v2207 = vpop.f32.mrf.mxu0
    %v2208 = vadd.f32 %v2088, %v2207
    %2209 = vmatmul.bf16.gmra.mxu0 %v2052
    %v2210 = vpop.f32.mrf.mxu0
    %v2211 = vadd.f32 %v2088, %v2210
    %v2212 = vpop.f32.mrf.mxu0
    %v2213 = vadd.f32 %v2088, %v2212
    %2214 = vdwg.mxu0
    %2215 = vmatpush.bf16.msra.mxu0 %v2169
    %2216 = vmatpush.bf16.msra.mxu0 %v2168
    %2217 = vmatpush.bf16.msra.mxu0 %v2167
    %2218 = vmatpush.bf16.msra.mxu0 %v2166
    %2219 = vmatpush.bf16.msra.mxu0 %v2165
    %2220 = vmatpush.bf16.msra.mxu0 %v2164
    %2221 = vmatpush.bf16.msra.mxu0 %v2163
    %2222 = vmatpush.bf16.msra.mxu0 %v2162
    %2223 = vmatmul.bf16.gmra.mxu0 %v2047
    %v2224 = vpop.f32.mrf.mxu0
    %v2225 = vadd.f32 %v2196, %v2224
    %v2226 = vpop.f32.mrf.mxu0
    %v2227 = vadd.f32 %v2198, %v2226
    %2228 = vmatmul.bf16.gmra.mxu0 %v2049
    %v2229 = vpop.f32.mrf.mxu0
    %v2230 = vadd.f32 %v2201, %v2229
    %v2231 = vpop.f32.mrf.mxu0
    %v2232 = vadd.f32 %v2203, %v2231
    %2233 = vmatmul.bf16.gmra.mxu0 %v2051
    %v2234 = vpop.f32.mrf.mxu0
    %v2235 = vadd.f32 %v2206, %v2234
    %v2236 = vpop.f32.mrf.mxu0
    %v2237 = vadd.f32 %v2208, %v2236
    %2238 = vmatmul.bf16.gmra.mxu0 %v2053
    %v2239 = vpop.f32.mrf.mxu0
    %v2240 = vadd.f32 %v2211, %v2239
    %v2241 = vpop.f32.mrf.mxu0
    %v2242 = vadd.f32 %v2213, %v2241
    %2243 = vdwg.mxu0
    %v2244 = vadd.f32 %v1730, %v2225
    %v2245 = vadd.f32 %v1731, %v2227
    %v2246 = vadd.f32 %v1732, %v2230
    %v2247 = vadd.f32 %v1733, %v2232
    %v2248 = vadd.f32 %v1734, %v2235
    %v2249 = vadd.f32 %v1735, %v2237
    %v2250 = vadd.f32 %v1736, %v2240
    %v2251 = vadd.f32 %v1737, %v2242
    %2252 = vadd.xlane.f32.xlu0 %v2244
    %v2253 = vpop.xlane.xlu0 %2252
    %2254 = vadd.xlane.f32.xlu0 %v2245
    %v2255 = vpop.xlane.xlu0 %2254
    %2256 = vadd.xlane.f32.xlu0 %v2246
    %v2257 = vpop.xlane.xlu0 %2256
    %2258 = vadd.xlane.f32.xlu0 %v2247
    %v2259 = vpop.xlane.xlu0 %2258
    %2260 = vadd.xlane.f32.xlu0 %v2248
    %v2261 = vpop.xlane.xlu0 %2260
    %2262 = vadd.xlane.f32.xlu0 %v2249
    %v2263 = vpop.xlane.xlu0 %2262
    %2264 = vadd.xlane.f32.xlu0 %v2250
    %v2265 = vpop.xlane.xlu0 %2264
    %2266 = vadd.xlane.f32.xlu0 %v2251
    %v2267 = vpop.xlane.xlu0 %2266
    %v2268 = vmul.f32 %v2253, %v458
    %v2269 = vmul.f32 %v2255, %v458
    %v2270 = vmul.f32 %v2257, %v458
    %v2271 = vmul.f32 %v2259, %v458
    %v2272 = vmul.f32 %v2261, %v458
    %v2273 = vmul.f32 %v2263, %v458
    %v2274 = vmul.f32 %v2265, %v458
    %v2275 = vmul.f32 %v2267, %v458
    %v2276 = vsub.f32 %v2244, %v2268
    %v2277 = vsub.f32 %v2245, %v2269
    %v2278 = vsub.f32 %v2246, %v2270
    %v2279 = vsub.f32 %v2247, %v2271
    %v2280 = vsub.f32 %v2248, %v2272
    %v2281 = vsub.f32 %v2249, %v2273
    %v2282 = vsub.f32 %v2250, %v2274
    %v2283 = vsub.f32 %v2251, %v2275
    %v2284 = vmul.f32 %v2276, %v2276
    %v2285 = vmul.f32 %v2277, %v2277
    %v2286 = vmul.f32 %v2278, %v2278
    %v2287 = vmul.f32 %v2279, %v2279
    %v2288 = vmul.f32 %v2280, %v2280
    %v2289 = vmul.f32 %v2281, %v2281
    %v2290 = vmul.f32 %v2282, %v2282
    %v2291 = vmul.f32 %v2283, %v2283
    %2292 = vadd.xlane.f32.xlu0 %v2284
    %v2293 = vpop.xlane.xlu0 %2292
    %2294 = vadd.xlane.f32.xlu0 %v2285
    %v2295 = vpop.xlane.xlu0 %2294
    %2296 = vadd.xlane.f32.xlu0 %v2286
    %v2297 = vpop.xlane.xlu0 %2296
    %2298 = vadd.xlane.f32.xlu0 %v2287
    %v2299 = vpop.xlane.xlu0 %2298
    %2300 = vadd.xlane.f32.xlu0 %v2288
    %v2301 = vpop.xlane.xlu0 %2300
    %2302 = vadd.xlane.f32.xlu0 %v2289
    %v2303 = vpop.xlane.xlu0 %2302
    %2304 = vadd.xlane.f32.xlu0 %v2290
    %v2305 = vpop.xlane.xlu0 %2304
    %2306 = vadd.xlane.f32.xlu0 %v2291
    %v2307 = vpop.xlane.xlu0 %2306
    %v2308 = vmul.f32 %v2293, %v458
    %v2309 = vmul.f32 %v2295, %v458
    %v2310 = vmul.f32 %v2297, %v458
    %v2311 = vmul.f32 %v2299, %v458
    %v2312 = vmul.f32 %v2301, %v458
    %v2313 = vmul.f32 %v2303, %v458
    %v2314 = vmul.f32 %v2305, %v458
    %v2315 = vmul.f32 %v2307, %v458
    %v2316 = vadd.f32 %v2308, 1e-12
    %v2317 = vadd.f32 %v2309, 1e-12
    %v2318 = vadd.f32 %v2310, 1e-12
    %v2319 = vadd.f32 %v2311, 1e-12
    %v2320 = vadd.f32 %v2312, 1e-12
    %v2321 = vadd.f32 %v2313, 1e-12
    %v2322 = vadd.f32 %v2314, 1e-12
    %v2323 = vadd.f32 %v2315, 1e-12
    %v2324 = vrsqrt.pop %v2316
    %v2325 = vmul.f32 %v2324, %v2316
    %v2326 = vmul.f32 %v2325, %v2324
    %v2327 = vmul.f32 0.5, %v2326
    %v2328 = vsub.f32 1.5, %v2327
    %v2329 = vmul.f32 %v2324, %v2328
    %vm2330 = vweird.f32 %v2316
    %vm2331 = vweird.f32 %v2324
    %vm2332 = vmor %vm2330, %vm2331
    %v2333 = vsel %vm2332, %v2324, %v2329
    %v2334 = vrsqrt.pop %v2317
    %v2335 = vmul.f32 %v2334, %v2317
    %v2336 = vmul.f32 %v2335, %v2334
    %v2337 = vmul.f32 0.5, %v2336
    %v2338 = vsub.f32 1.5, %v2337
    %v2339 = vmul.f32 %v2334, %v2338
    %vm2340 = vweird.f32 %v2317
    %vm2341 = vweird.f32 %v2334
    %vm2342 = vmor %vm2340, %vm2341
    %v2343 = vsel %vm2342, %v2334, %v2339
    %v2344 = vrsqrt.pop %v2318
    %v2345 = vmul.f32 %v2344, %v2318
    %v2346 = vmul.f32 %v2345, %v2344
    %v2347 = vmul.f32 0.5, %v2346
    %v2348 = vsub.f32 1.5, %v2347
    %v2349 = vmul.f32 %v2344, %v2348
    %vm2350 = vweird.f32 %v2318
    %vm2351 = vweird.f32 %v2344
    %vm2352 = vmor %vm2350, %vm2351
    %v2353 = vsel %vm2352, %v2344, %v2349
    %v2354 = vrsqrt.pop %v2319
    %v2355 = vmul.f32 %v2354, %v2319
    %v2356 = vmul.f32 %v2355, %v2354
    %v2357 = vmul.f32 0.5, %v2356
    %v2358 = vsub.f32 1.5, %v2357
    %v2359 = vmul.f32 %v2354, %v2358
    %vm2360 = vweird.f32 %v2319
    %vm2361 = vweird.f32 %v2354
    %vm2362 = vmor %vm2360, %vm2361
    %v2363 = vsel %vm2362, %v2354, %v2359
    %v2364 = vrsqrt.pop %v2320
    %v2365 = vmul.f32 %v2364, %v2320
    %v2366 = vmul.f32 %v2365, %v2364
    %v2367 = vmul.f32 0.5, %v2366
    %v2368 = vsub.f32 1.5, %v2367
    %v2369 = vmul.f32 %v2364, %v2368
    %vm2370 = vweird.f32 %v2320
    %vm2371 = vweird.f32 %v2364
    %vm2372 = vmor %vm2370, %vm2371
    %v2373 = vsel %vm2372, %v2364, %v2369
    %v2374 = vrsqrt.pop %v2321
    %v2375 = vmul.f32 %v2374, %v2321
    %v2376 = vmul.f32 %v2375, %v2374
    %v2377 = vmul.f32 0.5, %v2376
    %v2378 = vsub.f32 1.5, %v2377
    %v2379 = vmul.f32 %v2374, %v2378
    %vm2380 = vweird.f32 %v2321
    %vm2381 = vweird.f32 %v2374
    %vm2382 = vmor %vm2380, %vm2381
    %v2383 = vsel %vm2382, %v2374, %v2379
    %v2384 = vrsqrt.pop %v2322
    %v2385 = vmul.f32 %v2384, %v2322
    %v2386 = vmul.f32 %v2385, %v2384
    %v2387 = vmul.f32 0.5, %v2386
    %v2388 = vsub.f32 1.5, %v2387
    %v2389 = vmul.f32 %v2384, %v2388
    %vm2390 = vweird.f32 %v2322
    %vm2391 = vweird.f32 %v2384
    %vm2392 = vmor %vm2390, %vm2391
    %v2393 = vsel %vm2392, %v2384, %v2389
    %v2394 = vrsqrt.pop %v2323
    %v2395 = vmul.f32 %v2394, %v2323
    %v2396 = vmul.f32 %v2395, %v2394
    %v2397 = vmul.f32 0.5, %v2396
    %v2398 = vsub.f32 1.5, %v2397
    %v2399 = vmul.f32 %v2394, %v2398
    %vm2400 = vweird.f32 %v2323
    %vm2401 = vweird.f32 %v2394
    %vm2402 = vmor %vm2400, %vm2401
    %v2403 = vsel %vm2402, %v2394, %v2399
    %v2404 = vmul.f32 %v2276, %v2333
    %v2405 = vmul.f32 %v2277, %v2343
    %v2406 = vmul.f32 %v2278, %v2353
    %v2407 = vmul.f32 %v2279, %v2363
    %v2408 = vmul.f32 %v2280, %v2373
    %v2409 = vmul.f32 %v2281, %v2383
    %v2410 = vmul.f32 %v2282, %v2393
    %v2411 = vmul.f32 %v2283, %v2403
    %v2412 = vld [vmem:[%s43] sm:$0x1]
    %v2414 = vperm.slane %v2412, 0
    %v2416 = vmul.f32 %v2404, %v2414
    %v2417 = vmul.f32 %v2405, %v2414
    %v2418 = vmul.f32 %v2406, %v2414
    %v2419 = vmul.f32 %v2407, %v2414
    %v2420 = vmul.f32 %v2408, %v2414
    %v2421 = vmul.f32 %v2409, %v2414
    %v2422 = vmul.f32 %v2410, %v2414
    %v2423 = vmul.f32 %v2411, %v2414
    %v2424 = vld [vmem:[%s45] sm:$0x1]
    %v2426 = vperm.slane %v2424, 0
    %v2428 = vadd.f32 %v2416, %v2426
    %v2429 = vadd.f32 %v2417, %v2426
    %v2430 = vadd.f32 %v2418, %v2426
    %v2431 = vadd.f32 %v2419, %v2426
    %v2432 = vadd.f32 %v2420, %v2426
    %v2433 = vadd.f32 %v2421, %v2426
    %v2434 = vadd.f32 %v2422, %v2426
    %v2435 = vadd.f32 %v2423, %v2426
    %v2436 = vlaneseq
    %v2437 = vshrl.u32 %v2436, 7
    %v2438 = vmul.u32 %v2437, 8
    %vm2439 = vcmp.eq.s32.totalorder %v309, %v2438
    %v2440 = vsel %vm2439, 1.0, 0.0
    %v2441 = vpack.c.bf16 %v2440, %v2440
    %v2442 = vpack.c.bf16 %v2429, %v2428
    %v2443 = vpack.c.bf16 %v2431, %v2430
    %v2444 = vpack.c.bf16 %v2433, %v2432
    %v2445 = vpack.c.bf16 %v2435, %v2434
    %v2447 = vsel %vm394, %v2441, 0
    %2449 = vmatpush.bf16.msra.mxu0 0
    %2450 = vmatpush.bf16.msra.mxu0 0
    %2451 = vmatpush.bf16.msra.mxu0 0
    %2452 = vmatpush.bf16.msra.mxu0 0
    %2453 = vmatpush.bf16.msra.mxu0 %v2445
    %2454 = vmatpush.bf16.msra.mxu0 %v2444
    %2455 = vmatpush.bf16.msra.mxu0 %v2443
    %2456 = vmatpush.bf16.msra.mxu0 %v2442
    %2457 = vmatmul.bf16.gmra.mxu0 %v2447
    %v2458 = vpop.f32.mrf.mxu0
    %v2459 = vadd.f32 0.0, %v2458
    %v2460 = vpop.f32.mrf.mxu0
    %2461 = vdwg.mxu0
    %v2462 = vpack.c.bf16 %v2459, %v2459
    %v2463 = vld [vmem:[#allocation8] sm:$0xf]
    %v2464 = vld [vmem:[#allocation8 + $0x4] sm:$0xf]
    %v2465 = vld [vmem:[#allocation8 + $0x8] sm:$0xf]
    %v2466 = vld [vmem:[#allocation8 + $0xc] sm:$0xf]
    %v2467 = vld [vmem:[#allocation8 + $0x10] sm:$0xf]
    %v2468 = vld [vmem:[#allocation8 + $0x14] sm:$0xf]
    %v2469 = vld [vmem:[#allocation8 + $0x18] sm:$0xf]
    %v2470 = vld [vmem:[#allocation8 + $0x1c] sm:$0xf]
    %v2471 = vld [vmem:[#allocation8 + $0x20] sm:$0xf]
    %v2472 = vld [vmem:[#allocation8 + $0x24] sm:$0xf]
    %v2473 = vld [vmem:[#allocation8 + $0x28] sm:$0xf]
    %v2474 = vld [vmem:[#allocation8 + $0x2c] sm:$0xf]
    %v2475 = vld [vmem:[#allocation8 + $0x30] sm:$0xf]
    %v2476 = vld [vmem:[#allocation8 + $0x34] sm:$0xf]
    %v2477 = vld [vmem:[#allocation8 + $0x38] sm:$0xf]
    %v2478 = vld [vmem:[#allocation8 + $0x3c] sm:$0xf]
    %v2479 = vld [vmem:[%s49] sm:$0x1]
    %v2481 = vperm.slane %v2479, 0
    %v2499 = vunpack.c.l.b16 %v2463
    %v2500 = vunpack.c.l.b16 %v2464
    %v2501 = vunpack.c.l.b16 %v2465
    %v2502 = vunpack.c.l.b16 %v2466
    %v2503 = vunpack.c.l.b16 %v2467
    %v2504 = vunpack.c.l.b16 %v2468
    %v2505 = vunpack.c.l.b16 %v2469
    %v2506 = vunpack.c.l.b16 %v2470
    %v2507 = vunpack.c.l.b16 %v2471
    %v2508 = vunpack.c.l.b16 %v2472
    %v2509 = vunpack.c.l.b16 %v2473
    %v2510 = vunpack.c.l.b16 %v2474
    %v2511 = vunpack.c.l.b16 %v2475
    %v2512 = vunpack.c.l.b16 %v2476
    %v2513 = vunpack.c.l.b16 %v2477
    %v2514 = vunpack.c.l.b16 %v2478
    %v2515 = vpack.c.b16 %v2500, %v2499
    %v2516 = vpack.c.b16 %v2502, %v2501
    %v2517 = vpack.c.b16 %v2504, %v2503
    %v2518 = vpack.c.b16 %v2506, %v2505
    %v2519 = vpack.c.b16 %v2508, %v2507
    %v2520 = vpack.c.b16 %v2510, %v2509
    %v2521 = vpack.c.b16 %v2512, %v2511
    %v2522 = vpack.c.b16 %v2514, %v2513
    %2531 = vmatpush.bf16.msra.mxu0 %v2522
    %2532 = vmatpush.bf16.msra.mxu0 %v2521
    %2533 = vmatpush.bf16.msra.mxu0 %v2520
    %2534 = vmatpush.bf16.msra.mxu0 %v2519
    %2535 = vmatpush.bf16.msra.mxu0 %v2518
    %2536 = vmatpush.bf16.msra.mxu0 %v2517
    %2537 = vmatpush.bf16.msra.mxu0 %v2516
    %2538 = vmatpush.bf16.msra.mxu0 %v2515
    %2539 = vmatmul.bf16.gmra.mxu0 %v2462
    %v2540 = vpop.f32.mrf.mxu0
    %v2541 = vadd.f32 %v2481, %v2540
    %v2542 = vpop.f32.mrf.mxu0
    %2543 = vdwg.mxu0
    %v2544 = vtanh.pop %v2541
    %v2545 = vpack.c.bf16 %v2544, %v2544
    %v2546 = vld [vmem:[#allocation10] sm:$0xf]
    %v2547 = vld [vmem:[#allocation10 + $0x4] sm:$0xf]
    %v2548 = vld [vmem:[#allocation10 + $0x8] sm:$0xf]
    %v2549 = vld [vmem:[#allocation10 + $0xc] sm:$0xf]
    %v2550 = vld [vmem:[#allocation10 + $0x10] sm:$0xf]
    %v2551 = vld [vmem:[#allocation10 + $0x14] sm:$0xf]
    %v2552 = vld [vmem:[#allocation10 + $0x18] sm:$0xf]
    %v2553 = vld [vmem:[#allocation10 + $0x1c] sm:$0xf]
    %v2554 = vld [vmem:[#allocation10 + $0x20] sm:$0xf]
    %v2555 = vld [vmem:[#allocation10 + $0x24] sm:$0xf]
    %v2556 = vld [vmem:[#allocation10 + $0x28] sm:$0xf]
    %v2557 = vld [vmem:[#allocation10 + $0x2c] sm:$0xf]
    %v2558 = vld [vmem:[#allocation10 + $0x30] sm:$0xf]
    %v2559 = vld [vmem:[#allocation10 + $0x34] sm:$0xf]
    %v2560 = vld [vmem:[#allocation10 + $0x38] sm:$0xf]
    %v2561 = vld [vmem:[#allocation10 + $0x3c] sm:$0xf]
    %v2562 = vld [vmem:[%s53] sm:$0x1]
    %v2564 = vperm.slane %v2562, 0
    %v2582 = vunpack.c.l.b16 %v2546
    %v2583 = vunpack.c.l.b16 %v2547
    %v2584 = vunpack.c.l.b16 %v2548
    %v2585 = vunpack.c.l.b16 %v2549
    %v2586 = vunpack.c.l.b16 %v2550
    %v2587 = vunpack.c.l.b16 %v2551
    %v2588 = vunpack.c.l.b16 %v2552
    %v2589 = vunpack.c.l.b16 %v2553
    %v2590 = vunpack.c.l.b16 %v2554
    %v2591 = vunpack.c.l.b16 %v2555
    %v2592 = vunpack.c.l.b16 %v2556
    %v2593 = vunpack.c.l.b16 %v2557
    %v2594 = vunpack.c.l.b16 %v2558
    %v2595 = vunpack.c.l.b16 %v2559
    %v2596 = vunpack.c.l.b16 %v2560
    %v2597 = vunpack.c.l.b16 %v2561
    %v2598 = vpack.c.b16 %v2583, %v2582
    %v2599 = vpack.c.b16 %v2585, %v2584
    %v2600 = vpack.c.b16 %v2587, %v2586
    %v2601 = vpack.c.b16 %v2589, %v2588
    %v2602 = vpack.c.b16 %v2591, %v2590
    %v2603 = vpack.c.b16 %v2593, %v2592
    %v2604 = vpack.c.b16 %v2595, %v2594
    %v2605 = vpack.c.b16 %v2597, %v2596
    %2614 = vmatpush.bf16.msra.mxu0 %v2605
    %2615 = vmatpush.bf16.msra.mxu0 %v2604
    %2616 = vmatpush.bf16.msra.mxu0 %v2603
    %2617 = vmatpush.bf16.msra.mxu0 %v2602
    %2618 = vmatpush.bf16.msra.mxu0 %v2601
    %2619 = vmatpush.bf16.msra.mxu0 %v2600
    %2620 = vmatpush.bf16.msra.mxu0 %v2599
    %2621 = vmatpush.bf16.msra.mxu0 %v2598
    %2622 = vmatmul.bf16.gmra.mxu0 %v2545
    %v2623 = vpop.f32.mrf.mxu0
    %v2624 = vadd.f32 %v2564, %v2623
    %v2625 = vpop.f32.mrf.mxu0
    %2626 = vdwg.mxu0
    %v2627 = vpack.c.bf16 %v2624, %v2624
    %v2628 = vld [vmem:[#allocation11] sm:$0xff]
    %v2629 = vld [vmem:[#allocation11 + $0x8] sm:$0xff]
    %v2630 = vld [vmem:[#allocation11 + $0x10] sm:$0xff]
    %v2631 = vld [vmem:[#allocation11 + $0x18] sm:$0xff]
    %v2632 = vld [vmem:[#allocation11 + $0x20] sm:$0xff]
    %v2633 = vld [vmem:[#allocation11 + $0x28] sm:$0xff]
    %v2634 = vld [vmem:[#allocation11 + $0x30] sm:$0xff]
    %v2635 = vld [vmem:[#allocation11 + $0x38] sm:$0xff]
    %v2636 = vld [vmem:[#allocation11 + $0x40] sm:$0xff]
    %v2637 = vld [vmem:[#allocation11 + $0x48] sm:$0xff]
    %v2638 = vld [vmem:[#allocation11 + $0x50] sm:$0xff]
    %v2639 = vld [vmem:[#allocation11 + $0x58] sm:$0xff]
    %v2640 = vld [vmem:[#allocation11 + $0x60] sm:$0xff]
    %v2641 = vld [vmem:[#allocation11 + $0x68] sm:$0xff]
    %v2642 = vld [vmem:[#allocation11 + $0x70] sm:$0xff]
    %v2643 = vld [vmem:[#allocation11 + $0x78] sm:$0xff]
    %v2644 = vld [vmem:[#allocation11 + $0x80] sm:$0xff]
    %v2645 = vld [vmem:[#allocation11 + $0x88] sm:$0xff]
    %v2646 = vld [vmem:[#allocation11 + $0x90] sm:$0xff]
    %v2647 = vld [vmem:[#allocation11 + $0x98] sm:$0xff]
    %v2648 = vld [vmem:[#allocation11 + $0xa0] sm:$0xff]
    %v2649 = vld [vmem:[#allocation11 + $0xa8] sm:$0xff]
    %v2650 = vld [vmem:[#allocation11 + $0xb0] sm:$0xff]
    %v2651 = vld [vmem:[#allocation11 + $0xb8] sm:$0xff]
    %v2652 = vld [vmem:[#allocation11 + $0xc0] sm:$0xff]
    %v2653 = vld [vmem:[#allocation11 + $0xc8] sm:$0xff]
    %v2654 = vld [vmem:[#allocation11 + $0xd0] sm:$0xff]
    %v2655 = vld [vmem:[#allocation11 + $0xd8] sm:$0xff]
    %v2656 = vld [vmem:[#allocation11 + $0xe0] sm:$0xff]
    %v2657 = vld [vmem:[#allocation11 + $0xe8] sm:$0xff]
    %v2658 = vld [vmem:[#allocation11 + $0xf0] sm:$0xff]
    %v2659 = vld [vmem:[#allocation11 + $0xf8] sm:$0xff]
    %v2660 = vld [vmem:[#allocation11 + $0x100] sm:$0xff]
    %v2661 = vld [vmem:[#allocation11 + $0x108] sm:$0xff]
    %v2662 = vld [vmem:[#allocation11 + $0x110] sm:$0xff]
    %v2663 = vld [vmem:[#allocation11 + $0x118] sm:$0xff]
    %v2664 = vld [vmem:[#allocation11 + $0x120] sm:$0xff]
    %v2665 = vld [vmem:[#allocation11 + $0x128] sm:$0xff]
    %v2666 = vld [vmem:[#allocation11 + $0x130] sm:$0xff]
    %v2667 = vld [vmem:[#allocation11 + $0x138] sm:$0xff]
    %v2668 = vld [vmem:[#allocation11 + $0x140] sm:$0xff]
    %v2669 = vld [vmem:[#allocation11 + $0x148] sm:$0xff]
    %v2670 = vld [vmem:[#allocation11 + $0x150] sm:$0xff]
    %v2671 = vld [vmem:[#allocation11 + $0x158] sm:$0xff]
    %v2672 = vld [vmem:[#allocation11 + $0x160] sm:$0xff]
    %v2673 = vld [vmem:[#allocation11 + $0x168] sm:$0xff]
    %v2674 = vld [vmem:[#allocation11 + $0x170] sm:$0xff]
    %v2675 = vld [vmem:[#allocation11 + $0x178] sm:$0xff]
    %v2676 = vld [vmem:[%s57] sm:$0x3f]
    %v2678 = vperm.slane %v2676, 0
    %v2679 = vperm.slane %v2676, 1
    %v2680 = vperm.slane %v2676, 2
    %v2681 = vperm.slane %v2676, 3
    %v2682 = vperm.slane %v2676, 4
    %v2683 = vperm.slane %v2676, 5
    %v2738 = vunpack.c.l.b16 %v2628
    %v2739 = vunpack.c.h.b16 %v2628
    %v2740 = vunpack.c.l.b16 %v2629
    %v2741 = vunpack.c.h.b16 %v2629
    %v2742 = vunpack.c.l.b16 %v2630
    %v2743 = vunpack.c.h.b16 %v2630
    %v2744 = vunpack.c.l.b16 %v2631
    %v2745 = vunpack.c.h.b16 %v2631
    %v2746 = vunpack.c.l.b16 %v2632
    %v2747 = vunpack.c.h.b16 %v2632
    %v2748 = vunpack.c.l.b16 %v2633
    %v2749 = vunpack.c.h.b16 %v2633
    %v2750 = vunpack.c.l.b16 %v2634
    %v2751 = vunpack.c.h.b16 %v2634
    %v2752 = vunpack.c.l.b16 %v2635
    %v2753 = vunpack.c.h.b16 %v2635
    %v2754 = vunpack.c.l.b16 %v2636
    %v2755 = vunpack.c.h.b16 %v2636
    %v2756 = vunpack.c.l.b16 %v2637
    %v2757 = vunpack.c.h.b16 %v2637
    %v2758 = vunpack.c.l.b16 %v2638
    %v2759 = vunpack.c.h.b16 %v2638
    %v2760 = vunpack.c.l.b16 %v2639
    %v2761 = vunpack.c.h.b16 %v2639
    %v2762 = vunpack.c.l.b16 %v2640
    %v2763 = vunpack.c.h.b16 %v2640
    %v2764 = vunpack.c.l.b16 %v2641
    %v2765 = vunpack.c.h.b16 %v2641
    %v2766 = vunpack.c.l.b16 %v2642
    %v2767 = vunpack.c.h.b16 %v2642
    %v2768 = vunpack.c.l.b16 %v2643
    %v2769 = vunpack.c.h.b16 %v2643
    %v2770 = vunpack.c.l.b16 %v2644
    %v2771 = vunpack.c.h.b16 %v2644
    %v2772 = vunpack.c.l.b16 %v2645
    %v2773 = vunpack.c.h.b16 %v2645
    %v2774 = vunpack.c.l.b16 %v2646
    %v2775 = vunpack.c.h.b16 %v2646
    %v2776 = vunpack.c.l.b16 %v2647
    %v2777 = vunpack.c.h.b16 %v2647
    %v2778 = vunpack.c.l.b16 %v2648
    %v2779 = vunpack.c.h.b16 %v2648
    %v2780 = vunpack.c.l.b16 %v2649
    %v2781 = vunpack.c.h.b16 %v2649
    %v2782 = vunpack.c.l.b16 %v2650
    %v2783 = vunpack.c.h.b16 %v2650
    %v2784 = vunpack.c.l.b16 %v2651
    %v2785 = vunpack.c.h.b16 %v2651
    %v2786 = vunpack.c.l.b16 %v2652
    %v2787 = vunpack.c.h.b16 %v2652
    %v2788 = vunpack.c.l.b16 %v2653
    %v2789 = vunpack.c.h.b16 %v2653
    %v2790 = vunpack.c.l.b16 %v2654
    %v2791 = vunpack.c.h.b16 %v2654
    %v2792 = vunpack.c.l.b16 %v2655
    %v2793 = vunpack.c.h.b16 %v2655
    %v2794 = vunpack.c.l.b16 %v2656
    %v2795 = vunpack.c.h.b16 %v2656
    %v2796 = vunpack.c.l.b16 %v2657
    %v2797 = vunpack.c.h.b16 %v2657
    %v2798 = vunpack.c.l.b16 %v2658
    %v2799 = vunpack.c.h.b16 %v2658
    %v2800 = vunpack.c.l.b16 %v2659
    %v2801 = vunpack.c.h.b16 %v2659
    %v2802 = vunpack.c.l.b16 %v2660
    %v2803 = vunpack.c.h.b16 %v2660
    %v2804 = vunpack.c.l.b16 %v2661
    %v2805 = vunpack.c.h.b16 %v2661
    %v2806 = vunpack.c.l.b16 %v2662
    %v2807 = vunpack.c.h.b16 %v2662
    %v2808 = vunpack.c.l.b16 %v2663
    %v2809 = vunpack.c.h.b16 %v2663
    %v2810 = vunpack.c.l.b16 %v2664
    %v2811 = vunpack.c.h.b16 %v2664
    %v2812 = vunpack.c.l.b16 %v2665
    %v2813 = vunpack.c.h.b16 %v2665
    %v2814 = vunpack.c.l.b16 %v2666
    %v2815 = vunpack.c.h.b16 %v2666
    %v2816 = vunpack.c.l.b16 %v2667
    %v2817 = vunpack.c.h.b16 %v2667
    %v2818 = vunpack.c.l.b16 %v2668
    %v2819 = vunpack.c.h.b16 %v2668
    %v2820 = vunpack.c.l.b16 %v2669
    %v2821 = vunpack.c.h.b16 %v2669
    %v2822 = vunpack.c.l.b16 %v2670
    %v2823 = vunpack.c.h.b16 %v2670
    %v2824 = vunpack.c.l.b16 %v2671
    %v2825 = vunpack.c.h.b16 %v2671
    %v2826 = vunpack.c.l.b16 %v2672
    %v2827 = vunpack.c.h.b16 %v2672
    %v2828 = vunpack.c.l.b16 %v2673
    %v2829 = vunpack.c.h.b16 %v2673
    %v2830 = vunpack.c.l.b16 %v2674
    %v2831 = vunpack.c.h.b16 %v2674
    %v2832 = vunpack.c.l.b16 %v2675
    %v2833 = vunpack.c.h.b16 %v2675
    %v2834 = vpack.c.b16 %v2744, %v2738
    %v2835 = vpack.c.b16 %v2745, %v2739
    %v2836 = vpack.c.b16 %v2746, %v2740
    %v2837 = vpack.c.b16 %v2747, %v2741
    %v2838 = vpack.c.b16 %v2748, %v2742
    %v2839 = vpack.c.b16 %v2749, %v2743
    %v2840 = vpack.c.b16 %v2756, %v2750
    %v2841 = vpack.c.b16 %v2757, %v2751
    %v2842 = vpack.c.b16 %v2758, %v2752
    %v2843 = vpack.c.b16 %v2759, %v2753
    %v2844 = vpack.c.b16 %v2760, %v2754
    %v2845 = vpack.c.b16 %v2761, %v2755
    %v2846 = vpack.c.b16 %v2768, %v2762
    %v2847 = vpack.c.b16 %v2769, %v2763
    %v2848 = vpack.c.b16 %v2770, %v2764
    %v2849 = vpack.c.b16 %v2771, %v2765
    %v2850 = vpack.c.b16 %v2772, %v2766
    %v2851 = vpack.c.b16 %v2773, %v2767
    %v2852 = vpack.c.b16 %v2780, %v2774
    %v2853 = vpack.c.b16 %v2781, %v2775
    %v2854 = vpack.c.b16 %v2782, %v2776
    %v2855 = vpack.c.b16 %v2783, %v2777
    %v2856 = vpack.c.b16 %v2784, %v2778
    %v2857 = vpack.c.b16 %v2785, %v2779
    %v2858 = vpack.c.b16 %v2792, %v2786
    %v2859 = vpack.c.b16 %v2793, %v2787
    %v2860 = vpack.c.b16 %v2794, %v2788
    %v2861 = vpack.c.b16 %v2795, %v2789
    %v2862 = vpack.c.b16 %v2796, %v2790
    %v2863 = vpack.c.b16 %v2797, %v2791
    %v2864 = vpack.c.b16 %v2804, %v2798
    %v2865 = vpack.c.b16 %v2805, %v2799
    %v2866 = vpack.c.b16 %v2806, %v2800
    %v2867 = vpack.c.b16 %v2807, %v2801
    %v2868 = vpack.c.b16 %v2808, %v2802
    %v2869 = vpack.c.b16 %v2809, %v2803
    %v2870 = vpack.c.b16 %v2816, %v2810
    %v2871 = vpack.c.b16 %v2817, %v2811
    %v2872 = vpack.c.b16 %v2818, %v2812
    %v2873 = vpack.c.b16 %v2819, %v2813
    %v2874 = vpack.c.b16 %v2820, %v2814
    %v2875 = vpack.c.b16 %v2821, %v2815
    %v2876 = vpack.c.b16 %v2828, %v2822
    %v2877 = vpack.c.b16 %v2829, %v2823
    %v2878 = vpack.c.b16 %v2830, %v2824
    %v2879 = vpack.c.b16 %v2831, %v2825
    %v2880 = vpack.c.b16 %v2832, %v2826
    %v2881 = vpack.c.b16 %v2833, %v2827
    %2930 = vmatpush.bf16.msra.mxu0 %v2876
    %2931 = vmatpush.bf16.msra.mxu0 %v2870
    %2932 = vmatpush.bf16.msra.mxu0 %v2864
    %2933 = vmatpush.bf16.msra.mxu0 %v2858
    %2934 = vmatpush.bf16.msra.mxu0 %v2852
    %2935 = vmatpush.bf16.msra.mxu0 %v2846
    %2936 = vmatpush.bf16.msra.mxu0 %v2840
    %2937 = vmatpush.bf16.msra.mxu0 %v2834
    %2938 = vmatmul.bf16.gmra.mxu0 %v2627
    %v2939 = vpop.f32.mrf.mxu0
    %v2940 = vadd.f32 %v2678, %v2939
    %v2941 = vpop.f32.mrf.mxu0
    %2942 = vdwg.mxu0
    %2943 = vmatpush.bf16.msra.mxu0 %v2877
    %2944 = vmatpush.bf16.msra.mxu0 %v2871
    %2945 = vmatpush.bf16.msra.mxu0 %v2865
    %2946 = vmatpush.bf16.msra.mxu0 %v2859
    %2947 = vmatpush.bf16.msra.mxu0 %v2853
    %2948 = vmatpush.bf16.msra.mxu0 %v2847
    %2949 = vmatpush.bf16.msra.mxu0 %v2841
    %2950 = vmatpush.bf16.msra.mxu0 %v2835
    %2951 = vmatmul.bf16.gmra.mxu0 %v2627
    %v2952 = vpop.f32.mrf.mxu0
    %v2953 = vadd.f32 %v2679, %v2952
    %v2954 = vpop.f32.mrf.mxu0
    %2955 = vdwg.mxu0
    %2956 = vmatpush.bf16.msra.mxu0 %v2878
    %2957 = vmatpush.bf16.msra.mxu0 %v2872
    %2958 = vmatpush.bf16.msra.mxu0 %v2866
    %2959 = vmatpush.bf16.msra.mxu0 %v2860
    %2960 = vmatpush.bf16.msra.mxu0 %v2854
    %2961 = vmatpush.bf16.msra.mxu0 %v2848
    %2962 = vmatpush.bf16.msra.mxu0 %v2842
    %2963 = vmatpush.bf16.msra.mxu0 %v2836
    %2964 = vmatmul.bf16.gmra.mxu0 %v2627
    %v2965 = vpop.f32.mrf.mxu0
    %v2966 = vadd.f32 %v2680, %v2965
    %v2967 = vpop.f32.mrf.mxu0
    %2968 = vdwg.mxu0
    %2969 = vmatpush.bf16.msra.mxu0 %v2879
    %2970 = vmatpush.bf16.msra.mxu0 %v2873
    %2971 = vmatpush.bf16.msra.mxu0 %v2867
    %2972 = vmatpush.bf16.msra.mxu0 %v2861
    %2973 = vmatpush.bf16.msra.mxu0 %v2855
    %2974 = vmatpush.bf16.msra.mxu0 %v2849
    %2975 = vmatpush.bf16.msra.mxu0 %v2843
    %2976 = vmatpush.bf16.msra.mxu0 %v2837
    %2977 = vmatmul.bf16.gmra.mxu0 %v2627
    %v2978 = vpop.f32.mrf.mxu0
    %v2979 = vadd.f32 %v2681, %v2978
    %v2980 = vpop.f32.mrf.mxu0
    %2981 = vdwg.mxu0
    %2982 = vmatpush.bf16.msra.mxu0 %v2880
    %2983 = vmatpush.bf16.msra.mxu0 %v2874
    %2984 = vmatpush.bf16.msra.mxu0 %v2868
    %2985 = vmatpush.bf16.msra.mxu0 %v2862
    %2986 = vmatpush.bf16.msra.mxu0 %v2856
    %2987 = vmatpush.bf16.msra.mxu0 %v2850
    %2988 = vmatpush.bf16.msra.mxu0 %v2844
    %2989 = vmatpush.bf16.msra.mxu0 %v2838
    %2990 = vmatmul.bf16.gmra.mxu0 %v2627
    %v2991 = vpop.f32.mrf.mxu0
    %v2992 = vadd.f32 %v2682, %v2991
    %v2993 = vpop.f32.mrf.mxu0
    %2994 = vdwg.mxu0
    %2995 = vmatpush.bf16.msra.mxu0 %v2881
    %2996 = vmatpush.bf16.msra.mxu0 %v2875
    %2997 = vmatpush.bf16.msra.mxu0 %v2869
    %2998 = vmatpush.bf16.msra.mxu0 %v2863
    %2999 = vmatpush.bf16.msra.mxu0 %v2857
    %3000 = vmatpush.bf16.msra.mxu0 %v2851
    %3001 = vmatpush.bf16.msra.mxu0 %v2845
    %3002 = vmatpush.bf16.msra.mxu0 %v2839
    %3003 = vmatmul.bf16.gmra.mxu0 %v2627
    %v3004 = vpop.f32.mrf.mxu0
    %v3005 = vadd.f32 %v2683, %v3004
    %v3006 = vpop.f32.mrf.mxu0
    %3007 = vdwg.mxu0
    %v3008 = vld [vmem:[#allocation13] sm:$0xff]
    %v3009 = vld [vmem:[#allocation13 + $0x8] sm:$0xf]
    %v3010 = vld [vmem:[#allocation13 + $0xc] sm:$0xff]
    %v3011 = vld [vmem:[#allocation13 + $0x14] sm:$0xf]
    %v3012 = vld [vmem:[#allocation13 + $0x18] sm:$0xff]
    %v3013 = vld [vmem:[#allocation13 + $0x20] sm:$0xf]
    %v3014 = vld [vmem:[#allocation13 + $0x24] sm:$0xff]
    %v3015 = vld [vmem:[#allocation13 + $0x2c] sm:$0xf]
    %v3016 = vld [vmem:[#allocation13 + $0x30] sm:$0xff]
    %v3017 = vld [vmem:[#allocation13 + $0x38] sm:$0xf]
    %v3018 = vld [vmem:[#allocation13 + $0x3c] sm:$0xff]
    %v3019 = vld [vmem:[#allocation13 + $0x44] sm:$0xf]
    %v3020 = vld [vmem:[#allocation13 + $0x48] sm:$0xff]
    %v3021 = vld [vmem:[#allocation13 + $0x50] sm:$0xf]
    %v3022 = vld [vmem:[#allocation13 + $0x54] sm:$0xff]
    %v3023 = vld [vmem:[#allocation13 + $0x5c] sm:$0xf]
    %v3024 = vld [vmem:[#allocation13 + $0x60] sm:$0xff]
    %v3025 = vld [vmem:[#allocation13 + $0x68] sm:$0xf]
    %v3026 = vld [vmem:[#allocation13 + $0x6c] sm:$0xff]
    %v3027 = vld [vmem:[#allocation13 + $0x74] sm:$0xf]
    %v3028 = vld [vmem:[#allocation13 + $0x78] sm:$0xff]
    %v3029 = vld [vmem:[#allocation13 + $0x80] sm:$0xf]
    %v3030 = vld [vmem:[#allocation13 + $0x84] sm:$0xff]
    %v3031 = vld [vmem:[#allocation13 + $0x8c] sm:$0xf]
    %v3032 = vld [vmem:[#allocation13 + $0x90] sm:$0xff]
    %v3033 = vld [vmem:[#allocation13 + $0x98] sm:$0xf]
    %v3034 = vld [vmem:[#allocation13 + $0x9c] sm:$0xff]
    %v3035 = vld [vmem:[#allocation13 + $0xa4] sm:$0xf]
    %v3036 = vld [vmem:[#allocation13 + $0xa8] sm:$0xff]
    %v3037 = vld [vmem:[#allocation13 + $0xb0] sm:$0xf]
    %v3038 = vld [vmem:[#allocation13 + $0xb4] sm:$0xff]
    %v3039 = vld [vmem:[#allocation13 + $0xbc] sm:$0xf]
    %v3040 = vld [vmem:[%s61] sm:$0x7]
    %v3042 = vperm.slane %v3040, 0
    %v3043 = vperm.slane %v3040, 1
    %v3044 = vperm.slane %v3040, 2
    %v3080 = vunpack.c.l.b16 %v3008
    %v3081 = vunpack.c.h.b16 %v3008
    %v3082 = vunpack.c.l.b16 %v3009
    %v3083 = vunpack.c.l.b16 %v3010
    %v3084 = vunpack.c.h.b16 %v3010
    %v3085 = vunpack.c.l.b16 %v3011
    %v3086 = vunpack.c.l.b16 %v3012
    %v3087 = vunpack.c.h.b16 %v3012
    %v3088 = vunpack.c.l.b16 %v3013
    %v3089 = vunpack.c.l.b16 %v3014
    %v3090 = vunpack.c.h.b16 %v3014
    %v3091 = vunpack.c.l.b16 %v3015
    %v3092 = vunpack.c.l.b16 %v3016
    %v3093 = vunpack.c.h.b16 %v3016
    %v3094 = vunpack.c.l.b16 %v3017
    %v3095 = vunpack.c.l.b16 %v3018
    %v3096 = vunpack.c.h.b16 %v3018
    %v3097 = vunpack.c.l.b16 %v3019
    %v3098 = vunpack.c.l.b16 %v3020
    %v3099 = vunpack.c.h.b16 %v3020
    %v3100 = vunpack.c.l.b16 %v3021
    %v3101 = vunpack.c.l.b16 %v3022
    %v3102 = vunpack.c.h.b16 %v3022
    %v3103 = vunpack.c.l.b16 %v3023
    %v3104 = vunpack.c.l.b16 %v3024
    %v3105 = vunpack.c.h.b16 %v3024
    %v3106 = vunpack.c.l.b16 %v3025
    %v3107 = vunpack.c.l.b16 %v3026
    %v3108 = vunpack.c.h.b16 %v3026
    %v3109 = vunpack.c.l.b16 %v3027
    %v3110 = vunpack.c.l.b16 %v3028
    %v3111 = vunpack.c.h.b16 %v3028
    %v3112 = vunpack.c.l.b16 %v3029
    %v3113 = vunpack.c.l.b16 %v3030
    %v3114 = vunpack.c.h.b16 %v3030
    %v3115 = vunpack.c.l.b16 %v3031
    %v3116 = vunpack.c.l.b16 %v3032
    %v3117 = vunpack.c.h.b16 %v3032
    %v3118 = vunpack.c.l.b16 %v3033
    %v3119 = vunpack.c.l.b16 %v3034
    %v3120 = vunpack.c.h.b16 %v3034
    %v3121 = vunpack.c.l.b16 %v3035
    %v3122 = vunpack.c.l.b16 %v3036
    %v3123 = vunpack.c.h.b16 %v3036
    %v3124 = vunpack.c.l.b16 %v3037
    %v3125 = vunpack.c.l.b16 %v3038
    %v3126 = vunpack.c.h.b16 %v3038
    %v3127 = vunpack.c.l.b16 %v3039
    %v3128 = vpack.c.b16 %v3083, %v3080
    %v3129 = vpack.c.b16 %v3084, %v3081
    %v3130 = vpack.c.b16 %v3085, %v3082
    %v3131 = vpack.c.b16 %v3089, %v3086
    %v3132 = vpack.c.b16 %v3090, %v3087
    %v3133 = vpack.c.b16 %v3091, %v3088
    %v3134 = vpack.c.b16 %v3095, %v3092
    %v3135 = vpack.c.b16 %v3096, %v3093
    %v3136 = vpack.c.b16 %v3097, %v3094
    %v3137 = vpack.c.b16 %v3101, %v3098
    %v3138 = vpack.c.b16 %v3102, %v3099
    %v3139 = vpack.c.b16 %v3103, %v3100
    %v3140 = vpack.c.b16 %v3107, %v3104
    %v3141 = vpack.c.b16 %v3108, %v3105
    %v3142 = vpack.c.b16 %v3109, %v3106
    %v3143 = vpack.c.b16 %v3113, %v3110
    %v3144 = vpack.c.b16 %v3114, %v3111
    %v3145 = vpack.c.b16 %v3115, %v3112
    %v3146 = vpack.c.b16 %v3119, %v3116
    %v3147 = vpack.c.b16 %v3120, %v3117
    %v3148 = vpack.c.b16 %v3121, %v3118
    %v3149 = vpack.c.b16 %v3125, %v3122
    %v3150 = vpack.c.b16 %v3126, %v3123
    %v3151 = vpack.c.b16 %v3127, %v3124
    %3176 = vmatpush.bf16.msra.mxu0 %v3149
    %3177 = vmatpush.bf16.msra.mxu0 %v3146
    %3178 = vmatpush.bf16.msra.mxu0 %v3143
    %3179 = vmatpush.bf16.msra.mxu0 %v3140
    %3180 = vmatpush.bf16.msra.mxu0 %v3137
    %3181 = vmatpush.bf16.msra.mxu0 %v3134
    %3182 = vmatpush.bf16.msra.mxu0 %v3131
    %3183 = vmatpush.bf16.msra.mxu0 %v3128
    %3184 = vmatmul.bf16.gmra.mxu0 0
    %v3185 = vpop.f32.mrf.mxu0
    %v3186 = vadd.f32 %v3042, %v3185
    %v3187 = vpop.f32.mrf.mxu0
    %3188 = vdwg.mxu0
    %3189 = vmatpush.bf16.msra.mxu0 %v3150
    %3190 = vmatpush.bf16.msra.mxu0 %v3147
    %3191 = vmatpush.bf16.msra.mxu0 %v3144
    %3192 = vmatpush.bf16.msra.mxu0 %v3141
    %3193 = vmatpush.bf16.msra.mxu0 %v3138
    %3194 = vmatpush.bf16.msra.mxu0 %v3135
    %3195 = vmatpush.bf16.msra.mxu0 %v3132
    %3196 = vmatpush.bf16.msra.mxu0 %v3129
    %3197 = vmatmul.bf16.gmra.mxu0 0
    %v3198 = vpop.f32.mrf.mxu0
    %v3199 = vadd.f32 %v3043, %v3198
    %v3200 = vpop.f32.mrf.mxu0
    %3201 = vdwg.mxu0
    %3202 = vmatpush.bf16.msra.mxu0 %v3151
    %3203 = vmatpush.bf16.msra.mxu0 %v3148
    %3204 = vmatpush.bf16.msra.mxu0 %v3145
    %3205 = vmatpush.bf16.msra.mxu0 %v3142
    %3206 = vmatpush.bf16.msra.mxu0 %v3139
    %3207 = vmatpush.bf16.msra.mxu0 %v3136
    %3208 = vmatpush.bf16.msra.mxu0 %v3133
    %3209 = vmatpush.bf16.msra.mxu0 %v3130
    %3210 = vmatmul.bf16.gmra.mxu0 0
    %v3211 = vpop.f32.mrf.mxu0
    %v3212 = vadd.f32 %v3044, %v3211
    %v3213 = vpop.f32.mrf.mxu0
    %3214 = vdwg.mxu0
    %v3215 = vadd.f32 %v2940, %v3186
    %v3216 = vxor.u32 %v3215, 2147483648
    %v3217 = vmul.f32 %v3216, 1.442695
    %v3218 = vpow.pop %v3217
    %v3219 = vadd.f32 %v3218, 1.0
    %v3220 = vrcp.pop %v3219
    %v3221 = vmul.f32 %v3219, %v3220
    %v3222 = vsub.f32 1.0, %v3221
    %v3223 = vmul.f32 %v3220, %v3222
    %v3224 = vadd.f32 %v3220, %v3223
    %vm3225 = vweird.f32 %v3219
    %vm3226 = vweird.f32 %v3220
    %vm3227 = vmor %vm3225, %vm3226
    %v3228 = vsel %vm3227, %v3220, %v3224
    %v3229 = vand.u32 2147483647, %v3219
    %vm3230 = vcmp.eq.f32.partialorder %v3229, 8.507059e+37
    %v3231 = vand.u32 %v3219, 2147483648
    %v3232 = vor.u32 1.1754944e-38, %v3231
    %v3233 = vsel %vm3230, %v3232, %v3228
    %v3234 = vmul.f32 1.0, %v3233
    %v3235 = vadd.f32 %v2953, %v3199
    %v3236 = vxor.u32 %v3235, 2147483648
    %v3237 = vmul.f32 %v3236, 1.442695
    %v3238 = vpow.pop %v3237
    %v3239 = vadd.f32 %v3238, 1.0
    %v3240 = vrcp.pop %v3239
    %v3241 = vmul.f32 %v3239, %v3240
    %v3242 = vsub.f32 1.0, %v3241
    %v3243 = vmul.f32 %v3240, %v3242
    %v3244 = vadd.f32 %v3240, %v3243
    %vm3245 = vweird.f32 %v3239
    %vm3246 = vweird.f32 %v3240
    %vm3247 = vmor %vm3245, %vm3246
    %v3248 = vsel %vm3247, %v3240, %v3244
    %v3249 = vand.u32 2147483647, %v3239
    %vm3250 = vcmp.eq.f32.partialorder %v3249, 8.507059e+37
    %v3251 = vand.u32 %v3239, 2147483648
    %v3252 = vor.u32 1.1754944e-38, %v3251
    %v3253 = vsel %vm3250, %v3252, %v3248
    %v3254 = vmul.f32 1.0, %v3253
    %v3255 = vmul.f32 %v3234, %v3212
    %v3256 = vadd.f32 %v2966, %v3255
    %v3257 = vtanh.pop %v3256
    %v3258 = vsub.f32 1.0, %v3254
    %v3259 = vmul.f32 %v3258, %v3257
    %v3260 = vmul.f32 %v3254, 0.0
    %v3261 = vadd.f32 %v3259, %v3260
    %v3262 = vld [vmem:[#allocation14] sm:$0xff]
    %v3263 = vld [vmem:[#allocation14 + $0x8] sm:$0xf]
    %v3264 = vld [vmem:[#allocation14 + $0xc] sm:$0xff]
    %v3265 = vld [vmem:[#allocation14 + $0x14] sm:$0xf]
    %v3266 = vld [vmem:[#allocation14 + $0x18] sm:$0xff]
    %v3267 = vld [vmem:[#allocation14 + $0x20] sm:$0xf]
    %v3268 = vld [vmem:[#allocation14 + $0x24] sm:$0xff]
    %v3269 = vld [vmem:[#allocation14 + $0x2c] sm:$0xf]
    %v3270 = vld [vmem:[#allocation14 + $0x30] sm:$0xff]
    %v3271 = vld [vmem:[#allocation14 + $0x38] sm:$0xf]
    %v3272 = vld [vmem:[#allocation14 + $0x3c] sm:$0xff]
    %v3273 = vld [vmem:[#allocation14 + $0x44] sm:$0xf]
    %v3274 = vld [vmem:[#allocation14 + $0x48] sm:$0xff]
    %v3275 = vld [vmem:[#allocation14 + $0x50] sm:$0xf]
    %v3276 = vld [vmem:[#allocation14 + $0x54] sm:$0xff]
    %v3277 = vld [vmem:[#allocation14 + $0x5c] sm:$0xf]
    %v3278 = vld [vmem:[#allocation14 + $0x60] sm:$0xff]
    %v3279 = vld [vmem:[#allocation14 + $0x68] sm:$0xf]
    %v3280 = vld [vmem:[#allocation14 + $0x6c] sm:$0xff]
    %v3281 = vld [vmem:[#allocation14 + $0x74] sm:$0xf]
    %v3282 = vld [vmem:[#allocation14 + $0x78] sm:$0xff]
    %v3283 = vld [vmem:[#allocation14 + $0x80] sm:$0xf]
    %v3284 = vld [vmem:[#allocation14 + $0x84] sm:$0xff]
    %v3285 = vld [vmem:[#allocation14 + $0x8c] sm:$0xf]
    %v3286 = vld [vmem:[#allocation14 + $0x90] sm:$0xff]
    %v3287 = vld [vmem:[#allocation14 + $0x98] sm:$0xf]
    %v3288 = vld [vmem:[#allocation14 + $0x9c] sm:$0xff]
    %v3289 = vld [vmem:[#allocation14 + $0xa4] sm:$0xf]
    %v3290 = vld [vmem:[#allocation14 + $0xa8] sm:$0xff]
    %v3291 = vld [vmem:[#allocation14 + $0xb0] sm:$0xf]
    %v3292 = vld [vmem:[#allocation14 + $0xb4] sm:$0xff]
    %v3293 = vld [vmem:[#allocation14 + $0xbc] sm:$0xf]
    %v3294 = vld [vmem:[%s65] sm:$0x7]
    %v3296 = vperm.slane %v3294, 0
    %v3297 = vperm.slane %v3294, 1
    %v3298 = vperm.slane %v3294, 2
    %v3334 = vunpack.c.l.b16 %v3262
    %v3335 = vunpack.c.h.b16 %v3262
    %v3336 = vunpack.c.l.b16 %v3263
    %v3337 = vunpack.c.l.b16 %v3264
    %v3338 = vunpack.c.h.b16 %v3264
    %v3339 = vunpack.c.l.b16 %v3265
    %v3340 = vunpack.c.l.b16 %v3266
    %v3341 = vunpack.c.h.b16 %v3266
    %v3342 = vunpack.c.l.b16 %v3267
    %v3343 = vunpack.c.l.b16 %v3268
    %v3344 = vunpack.c.h.b16 %v3268
    %v3345 = vunpack.c.l.b16 %v3269
    %v3346 = vunpack.c.l.b16 %v3270
    %v3347 = vunpack.c.h.b16 %v3270
    %v3348 = vunpack.c.l.b16 %v3271
    %v3349 = vunpack.c.l.b16 %v3272
    %v3350 = vunpack.c.h.b16 %v3272
    %v3351 = vunpack.c.l.b16 %v3273
    %v3352 = vunpack.c.l.b16 %v3274
    %v3353 = vunpack.c.h.b16 %v3274
    %v3354 = vunpack.c.l.b16 %v3275
    %v3355 = vunpack.c.l.b16 %v3276
    %v3356 = vunpack.c.h.b16 %v3276
    %v3357 = vunpack.c.l.b16 %v3277
    %v3358 = vunpack.c.l.b16 %v3278
    %v3359 = vunpack.c.h.b16 %v3278
    %v3360 = vunpack.c.l.b16 %v3279
    %v3361 = vunpack.c.l.b16 %v3280
    %v3362 = vunpack.c.h.b16 %v3280
    %v3363 = vunpack.c.l.b16 %v3281
    %v3364 = vunpack.c.l.b16 %v3282
    %v3365 = vunpack.c.h.b16 %v3282
    %v3366 = vunpack.c.l.b16 %v3283
    %v3367 = vunpack.c.l.b16 %v3284
    %v3368 = vunpack.c.h.b16 %v3284
    %v3369 = vunpack.c.l.b16 %v3285
    %v3370 = vunpack.c.l.b16 %v3286
    %v3371 = vunpack.c.h.b16 %v3286
    %v3372 = vunpack.c.l.b16 %v3287
    %v3373 = vunpack.c.l.b16 %v3288
    %v3374 = vunpack.c.h.b16 %v3288
    %v3375 = vunpack.c.l.b16 %v3289
    %v3376 = vunpack.c.l.b16 %v3290
    %v3377 = vunpack.c.h.b16 %v3290
    %v3378 = vunpack.c.l.b16 %v3291
    %v3379 = vunpack.c.l.b16 %v3292
    %v3380 = vunpack.c.h.b16 %v3292
    %v3381 = vunpack.c.l.b16 %v3293
    %v3382 = vpack.c.b16 %v3337, %v3334
    %v3383 = vpack.c.b16 %v3338, %v3335
    %v3384 = vpack.c.b16 %v3339, %v3336
    %v3385 = vpack.c.b16 %v3343, %v3340
    %v3386 = vpack.c.b16 %v3344, %v3341
    %v3387 = vpack.c.b16 %v3345, %v3342
    %v3388 = vpack.c.b16 %v3349, %v3346
    %v3389 = vpack.c.b16 %v3350, %v3347
    %v3390 = vpack.c.b16 %v3351, %v3348
    %v3391 = vpack.c.b16 %v3355, %v3352
    %v3392 = vpack.c.b16 %v3356, %v3353
    %v3393 = vpack.c.b16 %v3357, %v3354
    %v3394 = vpack.c.b16 %v3361, %v3358
    %v3395 = vpack.c.b16 %v3362, %v3359
    %v3396 = vpack.c.b16 %v3363, %v3360
    %v3397 = vpack.c.b16 %v3367, %v3364
    %v3398 = vpack.c.b16 %v3368, %v3365
    %v3399 = vpack.c.b16 %v3369, %v3366
    %v3400 = vpack.c.b16 %v3373, %v3370
    %v3401 = vpack.c.b16 %v3374, %v3371
    %v3402 = vpack.c.b16 %v3375, %v3372
    %v3403 = vpack.c.b16 %v3379, %v3376
    %v3404 = vpack.c.b16 %v3380, %v3377
    %v3405 = vpack.c.b16 %v3381, %v3378
    %3430 = vmatpush.bf16.msra.mxu0 %v3403
    %3431 = vmatpush.bf16.msra.mxu0 %v3400
    %3432 = vmatpush.bf16.msra.mxu0 %v3397
    %3433 = vmatpush.bf16.msra.mxu0 %v3394
    %3434 = vmatpush.bf16.msra.mxu0 %v3391
    %3435 = vmatpush.bf16.msra.mxu0 %v3388
    %3436 = vmatpush.bf16.msra.mxu0 %v3385
    %3437 = vmatpush.bf16.msra.mxu0 %v3382
    %3438 = vmatmul.bf16.gmra.mxu0 0
    %v3439 = vpop.f32.mrf.mxu0
    %v3440 = vadd.f32 %v3296, %v3439
    %v3441 = vpop.f32.mrf.mxu0
    %3442 = vdwg.mxu0
    %3443 = vmatpush.bf16.msra.mxu0 %v3404
    %3444 = vmatpush.bf16.msra.mxu0 %v3401
    %3445 = vmatpush.bf16.msra.mxu0 %v3398
    %3446 = vmatpush.bf16.msra.mxu0 %v3395
    %3447 = vmatpush.bf16.msra.mxu0 %v3392
    %3448 = vmatpush.bf16.msra.mxu0 %v3389
    %3449 = vmatpush.bf16.msra.mxu0 %v3386
    %3450 = vmatpush.bf16.msra.mxu0 %v3383
    %3451 = vmatmul.bf16.gmra.mxu0 0
    %v3452 = vpop.f32.mrf.mxu0
    %v3453 = vadd.f32 %v3297, %v3452
    %v3454 = vpop.f32.mrf.mxu0
    %3455 = vdwg.mxu0
    %3456 = vmatpush.bf16.msra.mxu0 %v3405
    %3457 = vmatpush.bf16.msra.mxu0 %v3402
    %3458 = vmatpush.bf16.msra.mxu0 %v3399
    %3459 = vmatpush.bf16.msra.mxu0 %v3396
    %3460 = vmatpush.bf16.msra.mxu0 %v3393
    %3461 = vmatpush.bf16.msra.mxu0 %v3390
    %3462 = vmatpush.bf16.msra.mxu0 %v3387
    %3463 = vmatpush.bf16.msra.mxu0 %v3384
    %3464 = vmatmul.bf16.gmra.mxu0 0
    %v3465 = vpop.f32.mrf.mxu0
    %v3466 = vadd.f32 %v3298, %v3465
    %v3467 = vpop.f32.mrf.mxu0
    %3468 = vdwg.mxu0
    %v3470 = vrot.slane %v3440, 2
    %v3472 = vadd.f32 %v2979, %v3470
    %v3473 = vxor.u32 %v3472, 2147483648
    %v3474 = vmul.f32 %v3473, 1.442695
    %v3475 = vpow.pop %v3474
    %v3476 = vadd.f32 %v3475, 1.0
    %v3477 = vrcp.pop %v3476
    %v3478 = vmul.f32 %v3476, %v3477
    %v3479 = vsub.f32 1.0, %v3478
    %v3480 = vmul.f32 %v3477, %v3479
    %v3481 = vadd.f32 %v3477, %v3480
    %vm3482 = vweird.f32 %v3476
    %vm3483 = vweird.f32 %v3477
    %vm3484 = vmor %vm3482, %vm3483
    %v3485 = vsel %vm3484, %v3477, %v3481
    %v3486 = vand.u32 2147483647, %v3476
    %vm3487 = vcmp.eq.f32.partialorder %v3486, 8.507059e+37
    %v3488 = vand.u32 %v3476, 2147483648
    %v3489 = vor.u32 1.1754944e-38, %v3488
    %v3490 = vsel %vm3487, %v3489, %v3485
    %v3491 = vmul.f32 1.0, %v3490
    %v3493 = vrot.slane %v3453, 2
    %v3495 = vadd.f32 %v2992, %v3493
    %v3496 = vxor.u32 %v3495, 2147483648
    %v3497 = vmul.f32 %v3496, 1.442695
    %v3498 = vpow.pop %v3497
    %v3499 = vadd.f32 %v3498, 1.0
    %v3500 = vrcp.pop %v3499
    %v3501 = vmul.f32 %v3499, %v3500
    %v3502 = vsub.f32 1.0, %v3501
    %v3503 = vmul.f32 %v3500, %v3502
    %v3504 = vadd.f32 %v3500, %v3503
    %vm3505 = vweird.f32 %v3499
    %vm3506 = vweird.f32 %v3500
    %vm3507 = vmor %vm3505, %vm3506
    %v3508 = vsel %vm3507, %v3500, %v3504
    %v3509 = vand.u32 2147483647, %v3499
    %vm3510 = vcmp.eq.f32.partialorder %v3509, 8.507059e+37
    %v3511 = vand.u32 %v3499, 2147483648
    %v3512 = vor.u32 1.1754944e-38, %v3511
    %v3513 = vsel %vm3510, %v3512, %v3508
    %v3514 = vmul.f32 1.0, %v3513
    %v3516 = vrot.slane %v3466, 2
    %v3518 = vmul.f32 %v3491, %v3516
    %v3519 = vadd.f32 %v3005, %v3518
    %v3520 = vtanh.pop %v3519
    %v3521 = vsub.f32 1.0, %v3514
    %v3522 = vmul.f32 %v3521, %v3520
    %v3523 = vmul.f32 %v3514, 0.0
    %v3524 = vadd.f32 %v3522, %v3523
    %v3525 = vpack.c.bf16 %v3261, %v3261
    %3526 = vmatpush.bf16.msra.mxu0 %v3149
    %3527 = vmatpush.bf16.msra.mxu0 %v3146
    %3528 = vmatpush.bf16.msra.mxu0 %v3143
    %3529 = vmatpush.bf16.msra.mxu0 %v3140
    %3530 = vmatpush.bf16.msra.mxu0 %v3137
    %3531 = vmatpush.bf16.msra.mxu0 %v3134
    %3532 = vmatpush.bf16.msra.mxu0 %v3131
    %3533 = vmatpush.bf16.msra.mxu0 %v3128
    %3534 = vmatmul.bf16.gmra.mxu0 %v3525
    %v3535 = vpop.f32.mrf.mxu0
    %v3536 = vadd.f32 %v3042, %v3535
    %v3537 = vpop.f32.mrf.mxu0
    %3538 = vdwg.mxu0
    %3539 = vmatpush.bf16.msra.mxu0 %v3150
    %3540 = vmatpush.bf16.msra.mxu0 %v3147
    %3541 = vmatpush.bf16.msra.mxu0 %v3144
    %3542 = vmatpush.bf16.msra.mxu0 %v3141
    %3543 = vmatpush.bf16.msra.mxu0 %v3138
    %3544 = vmatpush.bf16.msra.mxu0 %v3135
    %3545 = vmatpush.bf16.msra.mxu0 %v3132
    %3546 = vmatpush.bf16.msra.mxu0 %v3129
    %3547 = vmatmul.bf16.gmra.mxu0 %v3525
    %v3548 = vpop.f32.mrf.mxu0
    %v3549 = vadd.f32 %v3043, %v3548
    %v3550 = vpop.f32.mrf.mxu0
    %3551 = vdwg.mxu0
    %3552 = vmatpush.bf16.msra.mxu0 %v3151
    %3553 = vmatpush.bf16.msra.mxu0 %v3148
    %3554 = vmatpush.bf16.msra.mxu0 %v3145
    %3555 = vmatpush.bf16.msra.mxu0 %v3142
    %3556 = vmatpush.bf16.msra.mxu0 %v3139
    %3557 = vmatpush.bf16.msra.mxu0 %v3136
    %3558 = vmatpush.bf16.msra.mxu0 %v3133
    %3559 = vmatpush.bf16.msra.mxu0 %v3130
    %3560 = vmatmul.bf16.gmra.mxu0 %v3525
    %v3561 = vpop.f32.mrf.mxu0
    %v3562 = vadd.f32 %v3044, %v3561
    %v3563 = vpop.f32.mrf.mxu0
    %3564 = vdwg.mxu0
    %v3566 = vrot.slane %v3536, 6
    %v3568 = vadd.f32 %v2940, %v3566
    %v3569 = vxor.u32 %v3568, 2147483648
    %v3570 = vmul.f32 %v3569, 1.442695
    %v3571 = vpow.pop %v3570
    %v3572 = vadd.f32 %v3571, 1.0
    %v3573 = vrcp.pop %v3572
    %v3574 = vmul.f32 %v3572, %v3573
    %v3575 = vsub.f32 1.0, %v3574
    %v3576 = vmul.f32 %v3573, %v3575
    %v3577 = vadd.f32 %v3573, %v3576
    %vm3578 = vweird.f32 %v3572
    %vm3579 = vweird.f32 %v3573
    %vm3580 = vmor %vm3578, %vm3579
    %v3581 = vsel %vm3580, %v3573, %v3577
    %v3582 = vand.u32 2147483647, %v3572
    %vm3583 = vcmp.eq.f32.partialorder %v3582, 8.507059e+37
    %v3584 = vand.u32 %v3572, 2147483648
    %v3585 = vor.u32 1.1754944e-38, %v3584
    %v3586 = vsel %vm3583, %v3585, %v3581
    %v3587 = vmul.f32 1.0, %v3586
    %v3589 = vrot.slane %v3549, 6
    %v3591 = vadd.f32 %v2953, %v3589
    %v3592 = vxor.u32 %v3591, 2147483648
    %v3593 = vmul.f32 %v3592, 1.442695
    %v3594 = vpow.pop %v3593
    %v3595 = vadd.f32 %v3594, 1.0
    %v3596 = vrcp.pop %v3595
    %v3597 = vmul.f32 %v3595, %v3596
    %v3598 = vsub.f32 1.0, %v3597
    %v3599 = vmul.f32 %v3596, %v3598
    %v3600 = vadd.f32 %v3596, %v3599
    %vm3601 = vweird.f32 %v3595
    %vm3602 = vweird.f32 %v3596
    %vm3603 = vmor %vm3601, %vm3602
    %v3604 = vsel %vm3603, %v3596, %v3600
    %v3605 = vand.u32 2147483647, %v3595
    %vm3606 = vcmp.eq.f32.partialorder %v3605, 8.507059e+37
    %v3607 = vand.u32 %v3595, 2147483648
    %v3608 = vor.u32 1.1754944e-38, %v3607
    %v3609 = vsel %vm3606, %v3608, %v3604
    %v3610 = vmul.f32 1.0, %v3609
    %v3612 = vrot.slane %v3562, 6
    %v3614 = vmul.f32 %v3587, %v3612
    %v3615 = vadd.f32 %v2966, %v3614
    %v3616 = vtanh.pop %v3615
    %v3617 = vsub.f32 1.0, %v3610
    %v3618 = vmul.f32 %v3617, %v3616
    %v3620 = vrot.slane %v3261, 6
    %v3622 = vmul.f32 %v3610, %v3620
    %v3623 = vadd.f32 %v3618, %v3622
    %v3624 = vpack.c.bf16 %v3524, %v3524
    %v3626 = vrot.slane %v3624, 3
    %3628 = vmatpush.bf16.msra.mxu0 %v3403
    %3629 = vmatpush.bf16.msra.mxu0 %v3400
    %3630 = vmatpush.bf16.msra.mxu0 %v3397
    %3631 = vmatpush.bf16.msra.mxu0 %v3394
    %3632 = vmatpush.bf16.msra.mxu0 %v3391
    %3633 = vmatpush.bf16.msra.mxu0 %v3388
    %3634 = vmatpush.bf16.msra.mxu0 %v3385
    %3635 = vmatpush.bf16.msra.mxu0 %v3382
    %3636 = vmatmul.bf16.gmra.mxu0 %v3626
    %v3637 = vpop.f32.mrf.mxu0
    %v3638 = vadd.f32 %v3296, %v3637
    %v3639 = vpop.f32.mrf.mxu0
    %3640 = vdwg.mxu0
    %3641 = vmatpush.bf16.msra.mxu0 %v3404
    %3642 = vmatpush.bf16.msra.mxu0 %v3401
    %3643 = vmatpush.bf16.msra.mxu0 %v3398
    %3644 = vmatpush.bf16.msra.mxu0 %v3395
    %3645 = vmatpush.bf16.msra.mxu0 %v3392
    %3646 = vmatpush.bf16.msra.mxu0 %v3389
    %3647 = vmatpush.bf16.msra.mxu0 %v3386
    %3648 = vmatpush.bf16.msra.mxu0 %v3383
    %3649 = vmatmul.bf16.gmra.mxu0 %v3626
    %v3650 = vpop.f32.mrf.mxu0
    %v3651 = vadd.f32 %v3297, %v3650
    %v3652 = vpop.f32.mrf.mxu0
    %3653 = vdwg.mxu0
    %3654 = vmatpush.bf16.msra.mxu0 %v3405
    %3655 = vmatpush.bf16.msra.mxu0 %v3402
    %3656 = vmatpush.bf16.msra.mxu0 %v3399
    %3657 = vmatpush.bf16.msra.mxu0 %v3396
    %3658 = vmatpush.bf16.msra.mxu0 %v3393
    %3659 = vmatpush.bf16.msra.mxu0 %v3390
    %3660 = vmatpush.bf16.msra.mxu0 %v3387
    %3661 = vmatpush.bf16.msra.mxu0 %v3384
    %3662 = vmatmul.bf16.gmra.mxu0 %v3626
    %v3663 = vpop.f32.mrf.mxu0
    %v3664 = vadd.f32 %v3298, %v3663
    %v3665 = vpop.f32.mrf.mxu0
    %3666 = vdwg.mxu0
    %v3668 = vrot.slane %v3638, 4
    %v3670 = vadd.f32 %v2979, %v3668
    %v3671 = vxor.u32 %v3670, 2147483648
    %v3672 = vmul.f32 %v3671, 1.442695
    %v3673 = vpow.pop %v3672
    %v3674 = vadd.f32 %v3673, 1.0
    %v3675 = vrcp.pop %v3674
    %v3676 = vmul.f32 %v3674, %v3675
    %v3677 = vsub.f32 1.0, %v3676
    %v3678 = vmul.f32 %v3675, %v3677
    %v3679 = vadd.f32 %v3675, %v3678
    %vm3680 = vweird.f32 %v3674
    %vm3681 = vweird.f32 %v3675
    %vm3682 = vmor %vm3680, %vm3681
    %v3683 = vsel %vm3682, %v3675, %v3679
    %v3684 = vand.u32 2147483647, %v3674
    %vm3685 = vcmp.eq.f32.partialorder %v3684, 8.507059e+37
    %v3686 = vand.u32 %v3674, 2147483648
    %v3687 = vor.u32 1.1754944e-38, %v3686
    %v3688 = vsel %vm3685, %v3687, %v3683
    %v3689 = vmul.f32 1.0, %v3688
    %v3691 = vrot.slane %v3651, 4
    %v3693 = vadd.f32 %v2992, %v3691
    %v3694 = vxor.u32 %v3693, 2147483648
    %v3695 = vmul.f32 %v3694, 1.442695
    %v3696 = vpow.pop %v3695
    %v3697 = vadd.f32 %v3696, 1.0
    %v3698 = vrcp.pop %v3697
    %v3699 = vmul.f32 %v3697, %v3698
    %v3700 = vsub.f32 1.0, %v3699
    %v3701 = vmul.f32 %v3698, %v3700
    %v3702 = vadd.f32 %v3698, %v3701
    %vm3703 = vweird.f32 %v3697
    %vm3704 = vweird.f32 %v3698
    %vm3705 = vmor %vm3703, %vm3704
    %v3706 = vsel %vm3705, %v3698, %v3702
    %v3707 = vand.u32 2147483647, %v3697
    %vm3708 = vcmp.eq.f32.partialorder %v3707, 8.507059e+37
    %v3709 = vand.u32 %v3697, 2147483648
    %v3710 = vor.u32 1.1754944e-38, %v3709
    %v3711 = vsel %vm3708, %v3710, %v3706
    %v3712 = vmul.f32 1.0, %v3711
    %v3714 = vrot.slane %v3664, 4
    %v3716 = vmul.f32 %v3689, %v3714
    %v3717 = vadd.f32 %v3005, %v3716
    %v3718 = vtanh.pop %v3717
    %v3719 = vsub.f32 1.0, %v3712
    %v3720 = vmul.f32 %v3719, %v3718
    %v3722 = vrot.slane %v3524, 2
    %v3724 = vmul.f32 %v3712, %v3722
    %v3725 = vadd.f32 %v3720, %v3724
    %v3726 = vpack.c.bf16 %v3623, %v3623
    %v3728 = vrot.slane %v3726, 1
    %3730 = vmatpush.bf16.msra.mxu0 %v3149
    %3731 = vmatpush.bf16.msra.mxu0 %v3146
    %3732 = vmatpush.bf16.msra.mxu0 %v3143
    %3733 = vmatpush.bf16.msra.mxu0 %v3140
    %3734 = vmatpush.bf16.msra.mxu0 %v3137
    %3735 = vmatpush.bf16.msra.mxu0 %v3134
    %3736 = vmatpush.bf16.msra.mxu0 %v3131
    %3737 = vmatpush.bf16.msra.mxu0 %v3128
    %3738 = vmatmul.bf16.gmra.mxu0 %v3728
    %v3739 = vpop.f32.mrf.mxu0
    %v3740 = vadd.f32 %v3042, %v3739
    %v3741 = vpop.f32.mrf.mxu0
    %3742 = vdwg.mxu0
    %3743 = vmatpush.bf16.msra.mxu0 %v3150
    %3744 = vmatpush.bf16.msra.mxu0 %v3147
    %3745 = vmatpush.bf16.msra.mxu0 %v3144
    %3746 = vmatpush.bf16.msra.mxu0 %v3141
    %3747 = vmatpush.bf16.msra.mxu0 %v3138
    %3748 = vmatpush.bf16.msra.mxu0 %v3135
    %3749 = vmatpush.bf16.msra.mxu0 %v3132
    %3750 = vmatpush.bf16.msra.mxu0 %v3129
    %3751 = vmatmul.bf16.gmra.mxu0 %v3728
    %v3752 = vpop.f32.mrf.mxu0
    %v3753 = vadd.f32 %v3043, %v3752
    %v3754 = vpop.f32.mrf.mxu0
    %3755 = vdwg.mxu0
    %3756 = vmatpush.bf16.msra.mxu0 %v3151
    %3757 = vmatpush.bf16.msra.mxu0 %v3148
    %3758 = vmatpush.bf16.msra.mxu0 %v3145
    %3759 = vmatpush.bf16.msra.mxu0 %v3142
    %3760 = vmatpush.bf16.msra.mxu0 %v3139
    %3761 = vmatpush.bf16.msra.mxu0 %v3136
    %3762 = vmatpush.bf16.msra.mxu0 %v3133
    %3763 = vmatpush.bf16.msra.mxu0 %v3130
    %3764 = vmatmul.bf16.gmra.mxu0 %v3728
    %v3765 = vpop.f32.mrf.mxu0
    %v3766 = vadd.f32 %v3044, %v3765
    %v3767 = vpop.f32.mrf.mxu0
    %3768 = vdwg.mxu0
    %v3770 = vrot.slane %v3740, 4
    %v3772 = vadd.f32 %v2940, %v3770
    %v3773 = vxor.u32 %v3772, 2147483648
    %v3774 = vmul.f32 %v3773, 1.442695
    %v3775 = vpow.pop %v3774
    %v3776 = vadd.f32 %v3775, 1.0
    %v3777 = vrcp.pop %v3776
    %v3778 = vmul.f32 %v3776, %v3777
    %v3779 = vsub.f32 1.0, %v3778
    %v3780 = vmul.f32 %v3777, %v3779
    %v3781 = vadd.f32 %v3777, %v3780
    %vm3782 = vweird.f32 %v3776
    %vm3783 = vweird.f32 %v3777
    %vm3784 = vmor %vm3782, %vm3783
    %v3785 = vsel %vm3784, %v3777, %v3781
    %v3786 = vand.u32 2147483647, %v3776
    %vm3787 = vcmp.eq.f32.partialorder %v3786, 8.507059e+37
    %v3788 = vand.u32 %v3776, 2147483648
    %v3789 = vor.u32 1.1754944e-38, %v3788
    %v3790 = vsel %vm3787, %v3789, %v3785
    %v3791 = vmul.f32 1.0, %v3790
    %v3793 = vrot.slane %v3753, 4
    %v3795 = vadd.f32 %v2953, %v3793
    %v3796 = vxor.u32 %v3795, 2147483648
    %v3797 = vmul.f32 %v3796, 1.442695
    %v3798 = vpow.pop %v3797
    %v3799 = vadd.f32 %v3798, 1.0
    %v3800 = vrcp.pop %v3799
    %v3801 = vmul.f32 %v3799, %v3800
    %v3802 = vsub.f32 1.0, %v3801
    %v3803 = vmul.f32 %v3800, %v3802
    %v3804 = vadd.f32 %v3800, %v3803
    %vm3805 = vweird.f32 %v3799
    %vm3806 = vweird.f32 %v3800
    %vm3807 = vmor %vm3805, %vm3806
    %v3808 = vsel %vm3807, %v3800, %v3804
    %v3809 = vand.u32 2147483647, %v3799
    %vm3810 = vcmp.eq.f32.partialorder %v3809, 8.507059e+37
    %v3811 = vand.u32 %v3799, 2147483648
    %v3812 = vor.u32 1.1754944e-38, %v3811
    %v3813 = vsel %vm3810, %v3812, %v3808
    %v3814 = vmul.f32 1.0, %v3813
    %v3816 = vrot.slane %v3766, 4
    %v3818 = vmul.f32 %v3791, %v3816
    %v3819 = vadd.f32 %v2966, %v3818
    %v3820 = vtanh.pop %v3819
    %v3821 = vsub.f32 1.0, %v3814
    %v3822 = vmul.f32 %v3821, %v3820
    %v3824 = vrot.slane %v3623, 6
    %v3826 = vmul.f32 %v3814, %v3824
    %v3827 = vadd.f32 %v3822, %v3826
    %v3828 = vpack.c.bf16 %v3725, %v3725
    %v3830 = vrot.slane %v3828, 2
    %3832 = vmatpush.bf16.msra.mxu0 %v3403
    %3833 = vmatpush.bf16.msra.mxu0 %v3400
    %3834 = vmatpush.bf16.msra.mxu0 %v3397
    %3835 = vmatpush.bf16.msra.mxu0 %v3394
    %3836 = vmatpush.bf16.msra.mxu0 %v3391
    %3837 = vmatpush.bf16.msra.mxu0 %v3388
    %3838 = vmatpush.bf16.msra.mxu0 %v3385
    %3839 = vmatpush.bf16.msra.mxu0 %v3382
    %3840 = vmatmul.bf16.gmra.mxu0 %v3830
    %v3841 = vpop.f32.mrf.mxu0
    %v3842 = vadd.f32 %v3296, %v3841
    %v3843 = vpop.f32.mrf.mxu0
    %3844 = vdwg.mxu0
    %3845 = vmatpush.bf16.msra.mxu0 %v3404
    %3846 = vmatpush.bf16.msra.mxu0 %v3401
    %3847 = vmatpush.bf16.msra.mxu0 %v3398
    %3848 = vmatpush.bf16.msra.mxu0 %v3395
    %3849 = vmatpush.bf16.msra.mxu0 %v3392
    %3850 = vmatpush.bf16.msra.mxu0 %v3389
    %3851 = vmatpush.bf16.msra.mxu0 %v3386
    %3852 = vmatpush.bf16.msra.mxu0 %v3383
    %3853 = vmatmul.bf16.gmra.mxu0 %v3830
    %v3854 = vpop.f32.mrf.mxu0
    %v3855 = vadd.f32 %v3297, %v3854
    %v3856 = vpop.f32.mrf.mxu0
    %3857 = vdwg.mxu0
    %3858 = vmatpush.bf16.msra.mxu0 %v3405
    %3859 = vmatpush.bf16.msra.mxu0 %v3402
    %3860 = vmatpush.bf16.msra.mxu0 %v3399
    %3861 = vmatpush.bf16.msra.mxu0 %v3396
    %3862 = vmatpush.bf16.msra.mxu0 %v3393
    %3863 = vmatpush.bf16.msra.mxu0 %v3390
    %3864 = vmatpush.bf16.msra.mxu0 %v3387
    %3865 = vmatpush.bf16.msra.mxu0 %v3384
    %3866 = vmatmul.bf16.gmra.mxu0 %v3830
    %v3867 = vpop.f32.mrf.mxu0
    %v3868 = vadd.f32 %v3298, %v3867
    %v3869 = vpop.f32.mrf.mxu0
    %3870 = vdwg.mxu0
    %v3872 = vrot.slane %v3842, 6
    %v3874 = vadd.f32 %v2979, %v3872
    %v3875 = vxor.u32 %v3874, 2147483648
    %v3876 = vmul.f32 %v3875, 1.442695
    %v3877 = vpow.pop %v3876
    %v3878 = vadd.f32 %v3877, 1.0
    %v3879 = vrcp.pop %v3878
    %v3880 = vmul.f32 %v3878, %v3879
    %v3881 = vsub.f32 1.0, %v3880
    %v3882 = vmul.f32 %v3879, %v3881
    %v3883 = vadd.f32 %v3879, %v3882
    %vm3884 = vweird.f32 %v3878
    %vm3885 = vweird.f32 %v3879
    %vm3886 = vmor %vm3884, %vm3885
    %v3887 = vsel %vm3886, %v3879, %v3883
    %v3888 = vand.u32 2147483647, %v3878
    %vm3889 = vcmp.eq.f32.partialorder %v3888, 8.507059e+37
    %v3890 = vand.u32 %v3878, 2147483648
    %v3891 = vor.u32 1.1754944e-38, %v3890
    %v3892 = vsel %vm3889, %v3891, %v3887
    %v3893 = vmul.f32 1.0, %v3892
    %v3895 = vrot.slane %v3855, 6
    %v3897 = vadd.f32 %v2992, %v3895
    %v3898 = vxor.u32 %v3897, 2147483648
    %v3899 = vmul.f32 %v3898, 1.442695
    %v3900 = vpow.pop %v3899
    %v3901 = vadd.f32 %v3900, 1.0
    %v3902 = vrcp.pop %v3901
    %v3903 = vmul.f32 %v3901, %v3902
    %v3904 = vsub.f32 1.0, %v3903
    %v3905 = vmul.f32 %v3902, %v3904
    %v3906 = vadd.f32 %v3902, %v3905
    %vm3907 = vweird.f32 %v3901
    %vm3908 = vweird.f32 %v3902
    %vm3909 = vmor %vm3907, %vm3908
    %v3910 = vsel %vm3909, %v3902, %v3906
    %v3911 = vand.u32 2147483647, %v3901
    %vm3912 = vcmp.eq.f32.partialorder %v3911, 8.507059e+37
    %v3913 = vand.u32 %v3901, 2147483648
    %v3914 = vor.u32 1.1754944e-38, %v3913
    %v3915 = vsel %vm3912, %v3914, %v3910
    %v3916 = vmul.f32 1.0, %v3915
    %v3918 = vrot.slane %v3868, 6
    %v3920 = vmul.f32 %v3893, %v3918
    %v3921 = vadd.f32 %v3005, %v3920
    %v3922 = vtanh.pop %v3921
    %v3923 = vsub.f32 1.0, %v3916
    %v3924 = vmul.f32 %v3923, %v3922
    %v3926 = vrot.slane %v3725, 2
    %v3928 = vmul.f32 %v3916, %v3926
    %v3929 = vadd.f32 %v3924, %v3928
    %v3930 = vpack.c.bf16 %v3827, %v3827
    %v3932 = vrot.slane %v3930, 2
    %3934 = vmatpush.bf16.msra.mxu0 %v3149
    %3935 = vmatpush.bf16.msra.mxu0 %v3146
    %3936 = vmatpush.bf16.msra.mxu0 %v3143
    %3937 = vmatpush.bf16.msra.mxu0 %v3140
    %3938 = vmatpush.bf16.msra.mxu0 %v3137
    %3939 = vmatpush.bf16.msra.mxu0 %v3134
    %3940 = vmatpush.bf16.msra.mxu0 %v3131
    %3941 = vmatpush.bf16.msra.mxu0 %v3128
    %3942 = vmatmul.bf16.gmra.mxu0 %v3932
    %v3943 = vpop.f32.mrf.mxu0
    %v3944 = vadd.f32 %v3042, %v3943
    %v3945 = vpop.f32.mrf.mxu0
    %3946 = vdwg.mxu0
    %3947 = vmatpush.bf16.msra.mxu0 %v3150
    %3948 = vmatpush.bf16.msra.mxu0 %v3147
    %3949 = vmatpush.bf16.msra.mxu0 %v3144
    %3950 = vmatpush.bf16.msra.mxu0 %v3141
    %3951 = vmatpush.bf16.msra.mxu0 %v3138
    %3952 = vmatpush.bf16.msra.mxu0 %v3135
    %3953 = vmatpush.bf16.msra.mxu0 %v3132
    %3954 = vmatpush.bf16.msra.mxu0 %v3129
    %3955 = vmatmul.bf16.gmra.mxu0 %v3932
    %v3956 = vpop.f32.mrf.mxu0
    %v3957 = vadd.f32 %v3043, %v3956
    %v3958 = vpop.f32.mrf.mxu0
    %3959 = vdwg.mxu0
    %3960 = vmatpush.bf16.msra.mxu0 %v3151
    %3961 = vmatpush.bf16.msra.mxu0 %v3148
    %3962 = vmatpush.bf16.msra.mxu0 %v3145
    %3963 = vmatpush.bf16.msra.mxu0 %v3142
    %3964 = vmatpush.bf16.msra.mxu0 %v3139
    %3965 = vmatpush.bf16.msra.mxu0 %v3136
    %3966 = vmatpush.bf16.msra.mxu0 %v3133
    %3967 = vmatpush.bf16.msra.mxu0 %v3130
    %3968 = vmatmul.bf16.gmra.mxu0 %v3932
    %v3969 = vpop.f32.mrf.mxu0
    %v3970 = vadd.f32 %v3044, %v3969
    %v3971 = vpop.f32.mrf.mxu0
    %3972 = vdwg.mxu0
    %v3974 = vrot.slane %v3944, 2
    %v3976 = vadd.f32 %v2940, %v3974
    %v3977 = vxor.u32 %v3976, 2147483648
    %v3978 = vmul.f32 %v3977, 1.442695
    %v3979 = vpow.pop %v3978
    %v3980 = vadd.f32 %v3979, 1.0
    %v3981 = vrcp.pop %v3980
    %v3982 = vmul.f32 %v3980, %v3981
    %v3983 = vsub.f32 1.0, %v3982
    %v3984 = vmul.f32 %v3981, %v3983
    %v3985 = vadd.f32 %v3981, %v3984
    %vm3986 = vweird.f32 %v3980
    %vm3987 = vweird.f32 %v3981
    %vm3988 = vmor %vm3986, %vm3987
    %v3989 = vsel %vm3988, %v3981, %v3985
    %v3990 = vand.u32 2147483647, %v3980
    %vm3991 = vcmp.eq.f32.partialorder %v3990, 8.507059e+37
    %v3992 = vand.u32 %v3980, 2147483648
    %v3993 = vor.u32 1.1754944e-38, %v3992
    %v3994 = vsel %vm3991, %v3993, %v3989
    %v3995 = vmul.f32 1.0, %v3994
    %v3997 = vrot.slane %v3957, 2
    %v3999 = vadd.f32 %v2953, %v3997
    %v4000 = vxor.u32 %v3999, 2147483648
    %v4001 = vmul.f32 %v4000, 1.442695
    %v4002 = vpow.pop %v4001
    %v4003 = vadd.f32 %v4002, 1.0
    %v4004 = vrcp.pop %v4003
    %v4005 = vmul.f32 %v4003, %v4004
    %v4006 = vsub.f32 1.0, %v4005
    %v4007 = vmul.f32 %v4004, %v4006
    %v4008 = vadd.f32 %v4004, %v4007
    %vm4009 = vweird.f32 %v4003
    %vm4010 = vweird.f32 %v4004
    %vm4011 = vmor %vm4009, %vm4010
    %v4012 = vsel %vm4011, %v4004, %v4008
    %v4013 = vand.u32 2147483647, %v4003
    %vm4014 = vcmp.eq.f32.partialorder %v4013, 8.507059e+37
    %v4015 = vand.u32 %v4003, 2147483648
    %v4016 = vor.u32 1.1754944e-38, %v4015
    %v4017 = vsel %vm4014, %v4016, %v4012
    %v4018 = vmul.f32 1.0, %v4017
    %v4020 = vrot.slane %v3970, 2
    %v4022 = vmul.f32 %v3995, %v4020
    %v4023 = vadd.f32 %v2966, %v4022
    %v4024 = vtanh.pop %v4023
    %v4025 = vsub.f32 1.0, %v4018
    %v4026 = vmul.f32 %v4025, %v4024
    %v4028 = vrot.slane %v3827, 6
    %v4030 = vmul.f32 %v4018, %v4028
    %v4031 = vadd.f32 %v4026, %v4030
    %v4032 = vpack.c.bf16 %v3929, %v3929
    %v4034 = vrot.slane %v4032, 1
    %4036 = vmatpush.bf16.msra.mxu0 %v3403
    %4037 = vmatpush.bf16.msra.mxu0 %v3400
    %4038 = vmatpush.bf16.msra.mxu0 %v3397
    %4039 = vmatpush.bf16.msra.mxu0 %v3394
    %4040 = vmatpush.bf16.msra.mxu0 %v3391
    %4041 = vmatpush.bf16.msra.mxu0 %v3388
    %4042 = vmatpush.bf16.msra.mxu0 %v3385
    %4043 = vmatpush.bf16.msra.mxu0 %v3382
    %4044 = vmatmul.bf16.gmra.mxu0 %v4034
    %v4045 = vpop.f32.mrf.mxu0
    %v4046 = vadd.f32 %v3296, %v4045
    %v4047 = vpop.f32.mrf.mxu0
    %4048 = vdwg.mxu0
    %4049 = vmatpush.bf16.msra.mxu0 %v3404
    %4050 = vmatpush.bf16.msra.mxu0 %v3401
    %4051 = vmatpush.bf16.msra.mxu0 %v3398
    %4052 = vmatpush.bf16.msra.mxu0 %v3395
    %4053 = vmatpush.bf16.msra.mxu0 %v3392
    %4054 = vmatpush.bf16.msra.mxu0 %v3389
    %4055 = vmatpush.bf16.msra.mxu0 %v3386
    %4056 = vmatpush.bf16.msra.mxu0 %v3383
    %4057 = vmatmul.bf16.gmra.mxu0 %v4034
    %v4058 = vpop.f32.mrf.mxu0
    %v4059 = vadd.f32 %v3297, %v4058
    %v4060 = vpop.f32.mrf.mxu0
    %4061 = vdwg.mxu0
    %4062 = vmatpush.bf16.msra.mxu0 %v3405
    %4063 = vmatpush.bf16.msra.mxu0 %v3402
    %4064 = vmatpush.bf16.msra.mxu0 %v3399
    %4065 = vmatpush.bf16.msra.mxu0 %v3396
    %4066 = vmatpush.bf16.msra.mxu0 %v3393
    %4067 = vmatpush.bf16.msra.mxu0 %v3390
    %4068 = vmatpush.bf16.msra.mxu0 %v3387
    %4069 = vmatpush.bf16.msra.mxu0 %v3384
    %4070 = vmatmul.bf16.gmra.mxu0 %v4034
    %v4071 = vpop.f32.mrf.mxu0
    %v4072 = vadd.f32 %v3298, %v4071
    %v4073 = vpop.f32.mrf.mxu0
    %4074 = vdwg.mxu0
    %v4075 = vadd.f32 %v2979, %v4046
    %v4076 = vxor.u32 %v4075, 2147483648
    %v4077 = vmul.f32 %v4076, 1.442695
    %v4078 = vpow.pop %v4077
    %v4079 = vadd.f32 %v4078, 1.0
    %v4080 = vrcp.pop %v4079
    %v4081 = vmul.f32 %v4079, %v4080
    %v4082 = vsub.f32 1.0, %v4081
    %v4083 = vmul.f32 %v4080, %v4082
    %v4084 = vadd.f32 %v4080, %v4083
    %vm4085 = vweird.f32 %v4079
    %vm4086 = vweird.f32 %v4080
    %vm4087 = vmor %vm4085, %vm4086
    %v4088 = vsel %vm4087, %v4080, %v4084
    %v4089 = vand.u32 2147483647, %v4079
    %vm4090 = vcmp.eq.f32.partialorder %v4089, 8.507059e+37
    %v4091 = vand.u32 %v4079, 2147483648
    %v4092 = vor.u32 1.1754944e-38, %v4091
    %v4093 = vsel %vm4090, %v4092, %v4088
    %v4094 = vmul.f32 1.0, %v4093
    %v4095 = vadd.f32 %v2992, %v4059
    %v4096 = vxor.u32 %v4095, 2147483648
    %v4097 = vmul.f32 %v4096, 1.442695
    %v4098 = vpow.pop %v4097
    %v4099 = vadd.f32 %v4098, 1.0
    %v4100 = vrcp.pop %v4099
    %v4101 = vmul.f32 %v4099, %v4100
    %v4102 = vsub.f32 1.0, %v4101
    %v4103 = vmul.f32 %v4100, %v4102
    %v4104 = vadd.f32 %v4100, %v4103
    %vm4105 = vweird.f32 %v4099
    %vm4106 = vweird.f32 %v4100
    %vm4107 = vmor %vm4105, %vm4106
    %v4108 = vsel %vm4107, %v4100, %v4104
    %v4109 = vand.u32 2147483647, %v4099
    %vm4110 = vcmp.eq.f32.partialorder %v4109, 8.507059e+37
    %v4111 = vand.u32 %v4099, 2147483648
    %v4112 = vor.u32 1.1754944e-38, %v4111
    %v4113 = vsel %vm4110, %v4112, %v4108
    %v4114 = vmul.f32 1.0, %v4113
    %v4115 = vmul.f32 %v4094, %v4072
    %v4116 = vadd.f32 %v3005, %v4115
    %v4117 = vtanh.pop %v4116
    %v4118 = vsub.f32 1.0, %v4114
    %v4119 = vmul.f32 %v4118, %v4117
    %v4121 = vrot.slane %v3929, 2
    %v4123 = vmul.f32 %v4114, %v4121
    %v4124 = vadd.f32 %v4119, %v4123
    %vm4125 = vcmask 1041408
    %v4126 = vsel %vm4125, %v3261, %v3623
    %v4127 = vsel %vm4125, %v4124, %v3929
    %vm4128 = vcmask 1043456
    %v4129 = vsel %vm4128, %v4126, %v3827
    %v4130 = vsel %vm4128, %v4127, %v3725
    %vm4131 = vcmask 1045504
    %v4132 = vsel %vm4131, %v4129, %v4031
    %v4133 = vsel %vm4131, %v4130, %v3524
    %v4134 = vpack.c.bf16 %v4132, %v4132
    %v4135 = vpack.c.bf16 %v4133, %v4133
    %v4136 = vld [vmem:[%s67] sm:$0xff]
    %v4137 = vld [vmem:[%s67 + $0x8] sm:$0xff]
    %v4138 = vld [vmem:[%s67 + $0x10] sm:$0xff]
    %v4139 = vld [vmem:[%s67 + $0x18] sm:$0xff]
    %v4140 = vld [vmem:[%s67 + $0x20] sm:$0xff]
    %v4141 = vld [vmem:[%s67 + $0x28] sm:$0xff]
    %v4142 = vld [vmem:[%s67 + $0x30] sm:$0xff]
    %v4143 = vld [vmem:[%s67 + $0x38] sm:$0xff]
    %v4144 = vld [vmem:[%s67 + $0x40] sm:$0xff]
    %v4145 = vld [vmem:[%s67 + $0x48] sm:$0xff]
    %v4146 = vld [vmem:[%s67 + $0x50] sm:$0xff]
    %v4147 = vld [vmem:[%s67 + $0x58] sm:$0xff]
    %v4148 = vld [vmem:[%s67 + $0x60] sm:$0xff]
    %v4149 = vld [vmem:[%s67 + $0x68] sm:$0xff]
    %v4150 = vld [vmem:[%s67 + $0x70] sm:$0xff]
    %v4151 = vld [vmem:[%s67 + $0x78] sm:$0xff]
    %v4152 = vld [vmem:[%s67 + $0x80] sm:$0xff]
    %v4153 = vld [vmem:[%s67 + $0x88] sm:$0xff]
    %v4154 = vld [vmem:[%s67 + $0x90] sm:$0xff]
    %v4155 = vld [vmem:[%s67 + $0x98] sm:$0xff]
    %v4156 = vld [vmem:[%s67 + $0xa0] sm:$0xff]
    %v4157 = vld [vmem:[%s67 + $0xa8] sm:$0xff]
    %v4158 = vld [vmem:[%s67 + $0xb0] sm:$0xff]
    %v4159 = vld [vmem:[%s67 + $0xb8] sm:$0xff]
    %v4160 = vld [vmem:[%s67 + $0xc0] sm:$0xff]
    %v4161 = vld [vmem:[%s67 + $0xc8] sm:$0xff]
    %v4162 = vld [vmem:[%s67 + $0xd0] sm:$0xff]
    %v4163 = vld [vmem:[%s67 + $0xd8] sm:$0xff]
    %v4164 = vld [vmem:[%s67 + $0xe0] sm:$0xff]
    %v4165 = vld [vmem:[%s67 + $0xe8] sm:$0xff]
    %v4166 = vld [vmem:[%s67 + $0xf0] sm:$0xff]
    %v4167 = vld [vmem:[%s67 + $0xf8] sm:$0xff]
    %v4168 = vld [vmem:[%s69] sm:$0x3]
    %v4170 = vperm.slane %v4168, 0
    %v4171 = vperm.slane %v4168, 1
    %v4206 = vunpack.c.l.b16 %v4136
    %v4207 = vunpack.c.h.b16 %v4136
    %v4208 = vunpack.c.l.b16 %v4137
    %v4209 = vunpack.c.h.b16 %v4137
    %v4210 = vunpack.c.l.b16 %v4138
    %v4211 = vunpack.c.h.b16 %v4138
    %v4212 = vunpack.c.l.b16 %v4139
    %v4213 = vunpack.c.h.b16 %v4139
    %v4214 = vunpack.c.l.b16 %v4140
    %v4215 = vunpack.c.h.b16 %v4140
    %v4216 = vunpack.c.l.b16 %v4141
    %v4217 = vunpack.c.h.b16 %v4141
    %v4218 = vunpack.c.l.b16 %v4142
    %v4219 = vunpack.c.h.b16 %v4142
    %v4220 = vunpack.c.l.b16 %v4143
    %v4221 = vunpack.c.h.b16 %v4143
    %v4222 = vunpack.c.l.b16 %v4144
    %v4223 = vunpack.c.h.b16 %v4144
    %v4224 = vunpack.c.l.b16 %v4145
    %v4225 = vunpack.c.h.b16 %v4145
    %v4226 = vunpack.c.l.b16 %v4146
    %v4227 = vunpack.c.h.b16 %v4146
    %v4228 = vunpack.c.l.b16 %v4147
    %v4229 = vunpack.c.h.b16 %v4147
    %v4230 = vunpack.c.l.b16 %v4148
    %v4231 = vunpack.c.h.b16 %v4148
    %v4232 = vunpack.c.l.b16 %v4149
    %v4233 = vunpack.c.h.b16 %v4149
    %v4234 = vunpack.c.l.b16 %v4150
    %v4235 = vunpack.c.h.b16 %v4150
    %v4236 = vunpack.c.l.b16 %v4151
    %v4237 = vunpack.c.h.b16 %v4151
    %v4238 = vunpack.c.l.b16 %v4152
    %v4239 = vunpack.c.h.b16 %v4152
    %v4240 = vunpack.c.l.b16 %v4153
    %v4241 = vunpack.c.h.b16 %v4153
    %v4242 = vunpack.c.l.b16 %v4154
    %v4243 = vunpack.c.h.b16 %v4154
    %v4244 = vunpack.c.l.b16 %v4155
    %v4245 = vunpack.c.h.b16 %v4155
    %v4246 = vunpack.c.l.b16 %v4156
    %v4247 = vunpack.c.h.b16 %v4156
    %v4248 = vunpack.c.l.b16 %v4157
    %v4249 = vunpack.c.h.b16 %v4157
    %v4250 = vunpack.c.l.b16 %v4158
    %v4251 = vunpack.c.h.b16 %v4158
    %v4252 = vunpack.c.l.b16 %v4159
    %v4253 = vunpack.c.h.b16 %v4159
    %v4254 = vunpack.c.l.b16 %v4160
    %v4255 = vunpack.c.h.b16 %v4160
    %v4256 = vunpack.c.l.b16 %v4161
    %v4257 = vunpack.c.h.b16 %v4161
    %v4258 = vunpack.c.l.b16 %v4162
    %v4259 = vunpack.c.h.b16 %v4162
    %v4260 = vunpack.c.l.b16 %v4163
    %v4261 = vunpack.c.h.b16 %v4163
    %v4262 = vunpack.c.l.b16 %v4164
    %v4263 = vunpack.c.h.b16 %v4164
    %v4264 = vunpack.c.l.b16 %v4165
    %v4265 = vunpack.c.h.b16 %v4165
    %v4266 = vunpack.c.l.b16 %v4166
    %v4267 = vunpack.c.h.b16 %v4166
    %v4268 = vunpack.c.l.b16 %v4167
    %v4269 = vunpack.c.h.b16 %v4167
    %v4270 = vpack.c.b16 %v4208, %v4206
    %v4271 = vpack.c.b16 %v4209, %v4207
    %v4272 = vpack.c.b16 %v4212, %v4210
    %v4273 = vpack.c.b16 %v4213, %v4211
    %v4274 = vpack.c.b16 %v4216, %v4214
    %v4275 = vpack.c.b16 %v4217, %v4215
    %v4276 = vpack.c.b16 %v4220, %v4218
    %v4277 = vpack.c.b16 %v4221, %v4219
    %v4278 = vpack.c.b16 %v4224, %v4222
    %v4279 = vpack.c.b16 %v4225, %v4223
    %v4280 = vpack.c.b16 %v4228, %v4226
    %v4281 = vpack.c.b16 %v4229, %v4227
    %v4282 = vpack.c.b16 %v4232, %v4230
    %v4283 = vpack.c.b16 %v4233, %v4231
    %v4284 = vpack.c.b16 %v4236, %v4234
    %v4285 = vpack.c.b16 %v4237, %v4235
    %v4286 = vpack.c.b16 %v4240, %v4238
    %v4287 = vpack.c.b16 %v4241, %v4239
    %v4288 = vpack.c.b16 %v4244, %v4242
    %v4289 = vpack.c.b16 %v4245, %v4243
    %v4290 = vpack.c.b16 %v4248, %v4246
    %v4291 = vpack.c.b16 %v4249, %v4247
    %v4292 = vpack.c.b16 %v4252, %v4250
    %v4293 = vpack.c.b16 %v4253, %v4251
    %v4294 = vpack.c.b16 %v4256, %v4254
    %v4295 = vpack.c.b16 %v4257, %v4255
    %v4296 = vpack.c.b16 %v4260, %v4258
    %v4297 = vpack.c.b16 %v4261, %v4259
    %v4298 = vpack.c.b16 %v4264, %v4262
    %v4299 = vpack.c.b16 %v4265, %v4263
    %v4300 = vpack.c.b16 %v4268, %v4266
    %v4301 = vpack.c.b16 %v4269, %v4267
    %4334 = vmatpush.bf16.msra.mxu0 %v4284
    %4335 = vmatpush.bf16.msra.mxu0 %v4282
    %4336 = vmatpush.bf16.msra.mxu0 %v4280
    %4337 = vmatpush.bf16.msra.mxu0 %v4278
    %4338 = vmatpush.bf16.msra.mxu0 %v4276
    %4339 = vmatpush.bf16.msra.mxu0 %v4274
    %4340 = vmatpush.bf16.msra.mxu0 %v4272
    %4341 = vmatpush.bf16.msra.mxu0 %v4270
    %4342 = vmatmul.bf16.gmra.mxu0 %v4134
    %v4343 = vpop.f32.mrf.mxu0
    %v4344 = vadd.f32 %v4170, %v4343
    %v4345 = vpop.f32.mrf.mxu0
    %4346 = vdwg.mxu0
    %4347 = vmatpush.bf16.msra.mxu0 %v4300
    %4348 = vmatpush.bf16.msra.mxu0 %v4298
    %4349 = vmatpush.bf16.msra.mxu0 %v4296
    %4350 = vmatpush.bf16.msra.mxu0 %v4294
    %4351 = vmatpush.bf16.msra.mxu0 %v4292
    %4352 = vmatpush.bf16.msra.mxu0 %v4290
    %4353 = vmatpush.bf16.msra.mxu0 %v4288
    %4354 = vmatpush.bf16.msra.mxu0 %v4286
    %4355 = vmatmul.bf16.gmra.mxu0 %v4135
    %v4356 = vpop.f32.mrf.mxu0
    %v4357 = vadd.f32 %v4344, %v4356
    %v4358 = vpop.f32.mrf.mxu0
    %4359 = vdwg.mxu0
    %4360 = vmatpush.bf16.msra.mxu0 %v4285
    %4361 = vmatpush.bf16.msra.mxu0 %v4283
    %4362 = vmatpush.bf16.msra.mxu0 %v4281
    %4363 = vmatpush.bf16.msra.mxu0 %v4279
    %4364 = vmatpush.bf16.msra.mxu0 %v4277
    %4365 = vmatpush.bf16.msra.mxu0 %v4275
    %4366 = vmatpush.bf16.msra.mxu0 %v4273
    %4367 = vmatpush.bf16.msra.mxu0 %v4271
    %4368 = vmatmul.bf16.gmra.mxu0 %v4134
    %v4369 = vpop.f32.mrf.mxu0
    %v4370 = vadd.f32 %v4171, %v4369
    %v4371 = vpop.f32.mrf.mxu0
    %4372 = vdwg.mxu0
    %4373 = vmatpush.bf16.msra.mxu0 %v4301
    %4374 = vmatpush.bf16.msra.mxu0 %v4299
    %4375 = vmatpush.bf16.msra.mxu0 %v4297
    %4376 = vmatpush.bf16.msra.mxu0 %v4295
    %4377 = vmatpush.bf16.msra.mxu0 %v4293
    %4378 = vmatpush.bf16.msra.mxu0 %v4291
    %4379 = vmatpush.bf16.msra.mxu0 %v4289
    %4380 = vmatpush.bf16.msra.mxu0 %v4287
    %4381 = vmatmul.bf16.gmra.mxu0 %v4135
    %v4382 = vpop.f32.mrf.mxu0
    %v4383 = vadd.f32 %v4370, %v4382
    %v4384 = vpop.f32.mrf.mxu0
    %4385 = vdwg.mxu0
    %v4386 = vtanh.pop %v4357
    %v4387 = vtanh.pop %v4383
    %v4388 = vpack.c.bf16 %v4386, %v4386
    %v4389 = vpack.c.bf16 %v4387, %v4387
    %v4390 = vld [vmem:[%s71] sm:$0xf]
    %v4391 = vld [vmem:[%s71 + $0x4] sm:$0xf]
    %v4392 = vld [vmem:[%s71 + $0x8] sm:$0xf]
    %v4393 = vld [vmem:[%s71 + $0xc] sm:$0xf]
    %v4394 = vld [vmem:[%s71 + $0x10] sm:$0xf]
    %v4395 = vld [vmem:[%s71 + $0x14] sm:$0xf]
    %v4396 = vld [vmem:[%s71 + $0x18] sm:$0xf]
    %v4397 = vld [vmem:[%s71 + $0x1c] sm:$0xf]
    %v4398 = vld [vmem:[%s71 + $0x20] sm:$0xf]
    %v4399 = vld [vmem:[%s71 + $0x24] sm:$0xf]
    %v4400 = vld [vmem:[%s71 + $0x28] sm:$0xf]
    %v4401 = vld [vmem:[%s71 + $0x2c] sm:$0xf]
    %v4402 = vld [vmem:[%s71 + $0x30] sm:$0xf]
    %v4403 = vld [vmem:[%s71 + $0x34] sm:$0xf]
    %v4404 = vld [vmem:[%s71 + $0x38] sm:$0xf]
    %v4405 = vld [vmem:[%s71 + $0x3c] sm:$0xf]
    %v4406 = vld [vmem:[%s71 + $0x40] sm:$0xf]
    %v4407 = vld [vmem:[%s71 + $0x44] sm:$0xf]
    %v4408 = vld [vmem:[%s71 + $0x48] sm:$0xf]
    %v4409 = vld [vmem:[%s71 + $0x4c] sm:$0xf]
    %v4410 = vld [vmem:[%s71 + $0x50] sm:$0xf]
    %v4411 = vld [vmem:[%s71 + $0x54] sm:$0xf]
    %v4412 = vld [vmem:[%s71 + $0x58] sm:$0xf]
    %v4413 = vld [vmem:[%s71 + $0x5c] sm:$0xf]
    %v4414 = vld [vmem:[%s71 + $0x60] sm:$0xf]
    %v4415 = vld [vmem:[%s71 + $0x64] sm:$0xf]
    %v4416 = vld [vmem:[%s71 + $0x68] sm:$0xf]
    %v4417 = vld [vmem:[%s71 + $0x6c] sm:$0xf]
    %v4418 = vld [vmem:[%s71 + $0x70] sm:$0xf]
    %v4419 = vld [vmem:[%s71 + $0x74] sm:$0xf]
    %v4420 = vld [vmem:[%s71 + $0x78] sm:$0xf]
    %v4421 = vld [vmem:[%s71 + $0x7c] sm:$0xf]
    %v4454 = vunpack.c.l.b16 %v4390
    %v4455 = vunpack.c.l.b16 %v4391
    %v4456 = vunpack.c.l.b16 %v4392
    %v4457 = vunpack.c.l.b16 %v4393
    %v4458 = vunpack.c.l.b16 %v4394
    %v4459 = vunpack.c.l.b16 %v4395
    %v4460 = vunpack.c.l.b16 %v4396
    %v4461 = vunpack.c.l.b16 %v4397
    %v4462 = vunpack.c.l.b16 %v4398
    %v4463 = vunpack.c.l.b16 %v4399
    %v4464 = vunpack.c.l.b16 %v4400
    %v4465 = vunpack.c.l.b16 %v4401
    %v4466 = vunpack.c.l.b16 %v4402
    %v4467 = vunpack.c.l.b16 %v4403
    %v4468 = vunpack.c.l.b16 %v4404
    %v4469 = vunpack.c.l.b16 %v4405
    %v4470 = vunpack.c.l.b16 %v4406
    %v4471 = vunpack.c.l.b16 %v4407
    %v4472 = vunpack.c.l.b16 %v4408
    %v4473 = vunpack.c.l.b16 %v4409
    %v4474 = vunpack.c.l.b16 %v4410
    %v4475 = vunpack.c.l.b16 %v4411
    %v4476 = vunpack.c.l.b16 %v4412
    %v4477 = vunpack.c.l.b16 %v4413
    %v4478 = vunpack.c.l.b16 %v4414
    %v4479 = vunpack.c.l.b16 %v4415
    %v4480 = vunpack.c.l.b16 %v4416
    %v4481 = vunpack.c.l.b16 %v4417
    %v4482 = vunpack.c.l.b16 %v4418
    %v4483 = vunpack.c.l.b16 %v4419
    %v4484 = vunpack.c.l.b16 %v4420
    %v4485 = vunpack.c.l.b16 %v4421
    %v4486 = vpack.c.b16 %v4455, %v4454
    %v4487 = vpack.c.b16 %v4457, %v4456
    %v4488 = vpack.c.b16 %v4459, %v4458
    %v4489 = vpack.c.b16 %v4461, %v4460
    %v4490 = vpack.c.b16 %v4463, %v4462
    %v4491 = vpack.c.b16 %v4465, %v4464
    %v4492 = vpack.c.b16 %v4467, %v4466
    %v4493 = vpack.c.b16 %v4469, %v4468
    %v4494 = vpack.c.b16 %v4471, %v4470
    %v4495 = vpack.c.b16 %v4473, %v4472
    %v4496 = vpack.c.b16 %v4475, %v4474
    %v4497 = vpack.c.b16 %v4477, %v4476
    %v4498 = vpack.c.b16 %v4479, %v4478
    %v4499 = vpack.c.b16 %v4481, %v4480
    %v4500 = vpack.c.b16 %v4483, %v4482
    %v4501 = vpack.c.b16 %v4485, %v4484
    %4518 = vmatpush.bf16.msra.mxu0 %v4493
    %4519 = vmatpush.bf16.msra.mxu0 %v4492
    %4520 = vmatpush.bf16.msra.mxu0 %v4491
    %4521 = vmatpush.bf16.msra.mxu0 %v4490
    %4522 = vmatpush.bf16.msra.mxu0 %v4489
    %4523 = vmatpush.bf16.msra.mxu0 %v4488
    %4524 = vmatpush.bf16.msra.mxu0 %v4487
    %4525 = vmatpush.bf16.msra.mxu0 %v4486
    %4526 = vmatmul.bf16.gmra.mxu0 %v4388
    %v4527 = vpop.f32.mrf.mxu0
    %v4528 = vadd.f32 0.0, %v4527
    %v4529 = vpop.f32.mrf.mxu0
    %4530 = vdwg.mxu0
    %4531 = vmatpush.bf16.msra.mxu0 %v4501
    %4532 = vmatpush.bf16.msra.mxu0 %v4500
    %4533 = vmatpush.bf16.msra.mxu0 %v4499
    %4534 = vmatpush.bf16.msra.mxu0 %v4498
    %4535 = vmatpush.bf16.msra.mxu0 %v4497
    %4536 = vmatpush.bf16.msra.mxu0 %v4496
    %4537 = vmatpush.bf16.msra.mxu0 %v4495
    %4538 = vmatpush.bf16.msra.mxu0 %v4494
    %4539 = vmatmul.bf16.gmra.mxu0 %v4389
    %v4540 = vpop.f32.mrf.mxu0
    %v4541 = vadd.f32 %v4528, %v4540
    %v4542 = vpop.f32.mrf.mxu0
    %4543 = vdwg.mxu0
    %v4544 = vld [vmem:[%s9] sm:$0xff]
    %vm4545 = vcmp.gt.f32.partialorder %v4544, 0.0
    %v4546 = vsel %vm4545, %v4541, -1e+09
    %vm4547 = vcmask 7168
    %v4548 = vsel %vm4547, %v4546, -inf
    %v4549 = vrot.slane %v4548, 4
    %v4550 = vmax.f32 %v4548, %v4549
    %v4551 = vrot.slane %v4550, 2
    %v4552 = vmax.f32 %v4550, %v4551
    %v4553 = vrot.slane %v4552, 1
    %v4554 = vmax.f32 %v4552, %v4553
    %v4555 = vsub.f32 %v4546, %v4554
    %v4556 = vmul.f32 %v4555, 1.442695
    %v4557 = vpow.pop %v4556
    %v4558 = vsel %vm4545, %v4557, 0.0
    %v4559 = vld [vmem:[%s11] sm:$0x3]
    %vm4560 = vcmask 64512
    %v4562 = vsel %vm4560, %v4559, 0
    %4564 = vmatpush.msra.mxu0 0.0
    %4565 = vmatpush.msra.mxu0 0.0
    %4566 = vmatpush.msra.mxu0 0.0
    %4567 = vmatpush.msra.mxu0 0.0
    %4568 = vmatpush.msra.mxu0 0.0
    %4569 = vmatpush.msra.mxu0 0.0
    %4570 = vmatpush.msra.mxu0 0.0
    %4571 = vmatpush.msra.mxu0 0.0
    %4572 = vmatpush.msra.mxu0 0.0
    %4573 = vmatpush.msra.mxu0 0.0
    %4574 = vmatpush.msra.mxu0 0.0
    %4575 = vmatpush.msra.mxu0 0.0
    %4576 = vmatpush.msra.mxu0 0.0
    %4577 = vmatpush.msra.mxu0 0.0
    %4578 = vmatpush.msra.mxu0 0.0
    %4579 = vmatpush.msra.mxu0 %v4558
    %4580 = vmatmul.f32.gmra.mxu0 %v4562
    %v4581 = vpop.f32.mrf.mxu0
    %v4582 = vadd.f32 0.0, %v4581
    %4583 = vdwg.mxu0
    %v4584 = vld [vmem:[%s13] sm:$0xff]
    %vm4585 = vcmask 15360
    %v4587 = vsel %vm4585, %v4584, 0
    %v4590 = vsel %vm4125, %v4582, 0
    %4592 = vmatpush.msra.mxu0 0.0
    %4593 = vmatpush.msra.mxu0 0.0
    %4594 = vmatpush.msra.mxu0 0.0
    %4595 = vmatpush.msra.mxu0 0.0
    %4596 = vmatpush.msra.mxu0 0.0
    %4597 = vmatpush.msra.mxu0 0.0
    %4598 = vmatpush.msra.mxu0 0.0
    %4599 = vmatpush.msra.mxu0 0.0
    %4600 = vmatpush.msra.mxu0 0.0
    %4601 = vmatpush.msra.mxu0 0.0
    %4602 = vmatpush.msra.mxu0 0.0
    %4603 = vmatpush.msra.mxu0 0.0
    %4604 = vmatpush.msra.mxu0 0.0
    %4605 = vmatpush.msra.mxu0 0.0
    %4606 = vmatpush.msra.mxu0 0.0
    %4607 = vmatpush.msra.mxu0 %v4590
    %4608 = vmatmul.f32.gmra.mxu0 %v4587
    %v4609 = vpop.f32.mrf.mxu0
    %v4610 = vadd.f32 0.0, %v4609
    %4611 = vdwg.mxu0
    %v4612 = vrcp.pop %v4610
    %v4613 = vmul.f32 %v4610, %v4612
    %v4614 = vsub.f32 1.0, %v4613
    %v4615 = vmul.f32 %v4612, %v4614
    %v4616 = vadd.f32 %v4612, %v4615
    %vm4617 = vweird.f32 %v4610
    %vm4618 = vweird.f32 %v4612
    %vm4619 = vmor %vm4617, %vm4618
    %v4620 = vsel %vm4619, %v4612, %v4616
    %v4621 = vand.u32 2147483647, %v4610
    %vm4622 = vcmp.eq.f32.partialorder %v4621, 8.507059e+37
    %v4623 = vand.u32 %v4610, 2147483648
    %v4624 = vor.u32 1.1754944e-38, %v4623
    %v4625 = vsel %vm4622, %v4624, %v4620
    %v4626 = vmul.f32 %v4558, %v4625
    %4628 = vset.pattern.permute.xlu0 0
    %4629 = vperm.xlu0 %4628, %v4626
    %v4630 = vpop.permute.xlu0 %4629
    %v4632 = vmul.f32 %v4630, %v4132
    %v4633 = vmul.f32 %v4630, %v4133
    %4634 = vmatpush.msra.mxu0 0.0
    %4635 = vmatpush.msra.mxu0 0.0
    %4636 = vmatpush.msra.mxu0 0.0
    %4637 = vmatpush.msra.mxu0 0.0
    %4638 = vmatpush.msra.mxu0 0.0
    %4639 = vmatpush.msra.mxu0 0.0
    %4640 = vmatpush.msra.mxu0 0.0
    %4641 = vmatpush.msra.mxu0 0.0
    %4642 = vmatpush.msra.mxu0 0.0
    %4643 = vmatpush.msra.mxu0 0.0
    %4644 = vmatpush.msra.mxu0 0.0
    %4645 = vmatpush.msra.mxu0 0.0
    %4646 = vmatpush.msra.mxu0 0.0
    %4647 = vmatpush.msra.mxu0 0.0
    %4648 = vmatpush.msra.mxu0 0.0
    %4649 = vmatpush.msra.mxu0 %v4632
    %4650 = vmatmul.f32.gmra.mxu0 %v4562
    %v4651 = vpop.f32.mrf.mxu0
    %v4652 = vadd.f32 0.0, %v4651
    %4653 = vdwg.mxu0
    %4654 = vmatpush.msra.mxu0 0.0
    %4655 = vmatpush.msra.mxu0 0.0
    %4656 = vmatpush.msra.mxu0 0.0
    %4657 = vmatpush.msra.mxu0 0.0
    %4658 = vmatpush.msra.mxu0 0.0
    %4659 = vmatpush.msra.mxu0 0.0
    %4660 = vmatpush.msra.mxu0 0.0
    %4661 = vmatpush.msra.mxu0 0.0
    %4662 = vmatpush.msra.mxu0 0.0
    %4663 = vmatpush.msra.mxu0 0.0
    %4664 = vmatpush.msra.mxu0 0.0
    %4665 = vmatpush.msra.mxu0 0.0
    %4666 = vmatpush.msra.mxu0 0.0
    %4667 = vmatpush.msra.mxu0 0.0
    %4668 = vmatpush.msra.mxu0 0.0
    %4669 = vmatpush.msra.mxu0 %v4633
    %4670 = vmatmul.f32.gmra.mxu0 %v4562
    %v4671 = vpop.f32.mrf.mxu0
    %v4672 = vadd.f32 0.0, %v4671
    %4673 = vdwg.mxu0
    %v4674 = vpack.c.bf16 %v4652, %v4652
    %v4675 = vpack.c.bf16 %v4672, %v4672
    %v4676 = vld [vmem:[#allocation16] sm:$0xf]
    %v4677 = vld [vmem:[#allocation16 + $0x4] sm:$0xf]
    %v4678 = vld [vmem:[#allocation16 + $0x8] sm:$0xf]
    %v4679 = vld [vmem:[#allocation16 + $0xc] sm:$0xf]
    %v4680 = vld [vmem:[#allocation16 + $0x10] sm:$0xf]
    %v4681 = vld [vmem:[#allocation16 + $0x14] sm:$0xf]
    %v4682 = vld [vmem:[#allocation16 + $0x18] sm:$0xf]
    %v4683 = vld [vmem:[#allocation16 + $0x1c] sm:$0xf]
    %v4684 = vld [vmem:[#allocation16 + $0x20] sm:$0xf]
    %v4685 = vld [vmem:[#allocation16 + $0x24] sm:$0xf]
    %v4686 = vld [vmem:[#allocation16 + $0x28] sm:$0xf]
    %v4687 = vld [vmem:[#allocation16 + $0x2c] sm:$0xf]
    %v4688 = vld [vmem:[#allocation16 + $0x30] sm:$0xf]
    %v4689 = vld [vmem:[#allocation16 + $0x34] sm:$0xf]
    %v4690 = vld [vmem:[#allocation16 + $0x38] sm:$0xf]
    %v4691 = vld [vmem:[#allocation16 + $0x3c] sm:$0xf]
    %v4692 = vld [vmem:[#allocation16 + $0x40] sm:$0xf]
    %v4693 = vld [vmem:[#allocation16 + $0x44] sm:$0xf]
    %v4694 = vld [vmem:[#allocation16 + $0x48] sm:$0xf]
    %v4695 = vld [vmem:[#allocation16 + $0x4c] sm:$0xf]
    %v4696 = vld [vmem:[#allocation16 + $0x50] sm:$0xf]
    %v4697 = vld [vmem:[#allocation16 + $0x54] sm:$0xf]
    %v4698 = vld [vmem:[#allocation16 + $0x58] sm:$0xf]
    %v4699 = vld [vmem:[#allocation16 + $0x5c] sm:$0xf]
    %v4700 = vld [vmem:[#allocation16 + $0x60] sm:$0xf]
    %v4701 = vld [vmem:[#allocation16 + $0x64] sm:$0xf]
    %v4702 = vld [vmem:[#allocation16 + $0x68] sm:$0xf]
    %v4703 = vld [vmem:[#allocation16 + $0x6c] sm:$0xf]
    %v4704 = vld [vmem:[#allocation16 + $0x70] sm:$0xf]
    %v4705 = vld [vmem:[#allocation16 + $0x74] sm:$0xf]
    %v4706 = vld [vmem:[#allocation16 + $0x78] sm:$0xf]
    %v4707 = vld [vmem:[#allocation16 + $0x7c] sm:$0xf]
    %v4708 = vld [vmem:[%s75] sm:$0x1]
    %v4710 = vperm.slane %v4708, 0
    %v4744 = vunpack.c.l.b16 %v4676
    %v4745 = vunpack.c.l.b16 %v4677
    %v4746 = vunpack.c.l.b16 %v4678
    %v4747 = vunpack.c.l.b16 %v4679
    %v4748 = vunpack.c.l.b16 %v4680
    %v4749 = vunpack.c.l.b16 %v4681
    %v4750 = vunpack.c.l.b16 %v4682
    %v4751 = vunpack.c.l.b16 %v4683
    %v4752 = vunpack.c.l.b16 %v4684
    %v4753 = vunpack.c.l.b16 %v4685
    %v4754 = vunpack.c.l.b16 %v4686
    %v4755 = vunpack.c.l.b16 %v4687
    %v4756 = vunpack.c.l.b16 %v4688
    %v4757 = vunpack.c.l.b16 %v4689
    %v4758 = vunpack.c.l.b16 %v4690
    %v4759 = vunpack.c.l.b16 %v4691
    %v4760 = vunpack.c.l.b16 %v4692
    %v4761 = vunpack.c.l.b16 %v4693
    %v4762 = vunpack.c.l.b16 %v4694
    %v4763 = vunpack.c.l.b16 %v4695
    %v4764 = vunpack.c.l.b16 %v4696
    %v4765 = vunpack.c.l.b16 %v4697
    %v4766 = vunpack.c.l.b16 %v4698
    %v4767 = vunpack.c.l.b16 %v4699
    %v4768 = vunpack.c.l.b16 %v4700
    %v4769 = vunpack.c.l.b16 %v4701
    %v4770 = vunpack.c.l.b16 %v4702
    %v4771 = vunpack.c.l.b16 %v4703
    %v4772 = vunpack.c.l.b16 %v4704
    %v4773 = vunpack.c.l.b16 %v4705
    %v4774 = vunpack.c.l.b16 %v4706
    %v4775 = vunpack.c.l.b16 %v4707
    %v4776 = vpack.c.b16 %v4745, %v4744
    %v4777 = vpack.c.b16 %v4747, %v4746
    %v4778 = vpack.c.b16 %v4749, %v4748
    %v4779 = vpack.c.b16 %v4751, %v4750
    %v4780 = vpack.c.b16 %v4753, %v4752
    %v4781 = vpack.c.b16 %v4755, %v4754
    %v4782 = vpack.c.b16 %v4757, %v4756
    %v4783 = vpack.c.b16 %v4759, %v4758
    %v4784 = vpack.c.b16 %v4761, %v4760
    %v4785 = vpack.c.b16 %v4763, %v4762
    %v4786 = vpack.c.b16 %v4765, %v4764
    %v4787 = vpack.c.b16 %v4767, %v4766
    %v4788 = vpack.c.b16 %v4769, %v4768
    %v4789 = vpack.c.b16 %v4771, %v4770
    %v4790 = vpack.c.b16 %v4773, %v4772
    %v4791 = vpack.c.b16 %v4775, %v4774
    %4808 = vmatpush.bf16.msra.mxu0 %v4783
    %4809 = vmatpush.bf16.msra.mxu0 %v4782
    %4810 = vmatpush.bf16.msra.mxu0 %v4781
    %4811 = vmatpush.bf16.msra.mxu0 %v4780
    %4812 = vmatpush.bf16.msra.mxu0 %v4779
    %4813 = vmatpush.bf16.msra.mxu0 %v4778
    %4814 = vmatpush.bf16.msra.mxu0 %v4777
    %4815 = vmatpush.bf16.msra.mxu0 %v4776
    %4816 = vmatmul.bf16.gmra.mxu0 %v4674
    %v4817 = vpop.f32.mrf.mxu0
    %v4818 = vadd.f32 %v4710, %v4817
    %v4819 = vpop.f32.mrf.mxu0
    %4820 = vdwg.mxu0
    %4821 = vmatpush.bf16.msra.mxu0 %v4791
    %4822 = vmatpush.bf16.msra.mxu0 %v4790
    %4823 = vmatpush.bf16.msra.mxu0 %v4789
    %4824 = vmatpush.bf16.msra.mxu0 %v4788
    %4825 = vmatpush.bf16.msra.mxu0 %v4787
    %4826 = vmatpush.bf16.msra.mxu0 %v4786
    %4827 = vmatpush.bf16.msra.mxu0 %v4785
    %4828 = vmatpush.bf16.msra.mxu0 %v4784
    %4829 = vmatmul.bf16.gmra.mxu0 %v4675
    %v4830 = vpop.f32.mrf.mxu0
    %v4831 = vadd.f32 %v4818, %v4830
    %v4832 = vpop.f32.mrf.mxu0
    %4833 = vdwg.mxu0
    %4834 = vst [vmem:[#allocation17] sm:$0x3] %v4831
    // Predicated region
    $region190: #{bert_hier_att_net.1} parent=1 // pred_check
      _
    $region191: #{bert_hier_att_net.1} parent=1 // pred_check_branch
      %4836 = sbr.rel (0) target = $region193
    $region192: #{bert_hier_att_net.1} parent=1 // pred_region
      %4838 = vsyncadd [#allocation4], 0
      %s4840 = sshll.u32 [#allocation17], 4
      %s4841 = int_to_ptr.vmem [resolvable:$true] %s4840
      %s4842 = sshll.u32 %s77, 4
      %s4843 = int_to_ptr.hbm [resolvable:$true] %s4842
      %4845 = dma.vmem_to_hbm [thread:$0]  %s4841, 32, %s4843, [#allocation4]
    $region193: #{bert_hier_att_net.1} parent=1 // pred_fallthru
      _
    // Predicated region
    $region194: #{bert_hier_att_net.1} parent=1 // pred_check
      _
    $region195: #{bert_hier_att_net.1} parent=1 // pred_check_branch
      %4847 = sbr.rel (0) target = $region197
    $region196: #{bert_hier_att_net.1} parent=1 // pred_region
      %4849 = dma.done [#allocation4], 32
    $region197: #{bert_hier_att_net.1} parent=1 // pred_fallthru
      _
    %4850 = vsyncpa [#allocation3], 1
    %4851 = vsyncpa [#allocation6], 1
    %4852 = vsyncpa [#allocation9], 1
    %4853 = vsyncpa [#allocation12], 1
    %4854 = vsyncpa [#allocation15], 1
    %4855 = vsyncpa [#allocation4], 1

</llo_original>
